<compile_context>
chip_gen: v6e
topology: v6e:2x2x1
jax: 0.10.0
libtpu: 0.0.40
codegen_flags: <defaults>
</compile_context>

<pallas_src>
import math
from functools import partial

import jax
import jax.numpy as jnp
from jax.experimental import pallas as pl
from jax.experimental.pallas import tpu as pltpu


# ----------------------------- in-kernel helpers -----------------------------

def _silu(x):
    # 1/(1+exp(-x)) is IEEE-safe in f32 (exp overflow -> inf -> 0).
    return x * (1.0 / (1.0 + jnp.exp(-x)))


def _softplus(x):
    return jnp.maximum(x, 0.0) + jnp.log(1.0 + jnp.exp(-jnp.abs(x)))


# --------------------------------- kernel ------------------------------------

def _mamba_model_kernel(x0_ref, w_in_ref, conv_w_ref, conv_b_ref, w_proj_ref,
                        dt_b_ref, a_ref, d_ref, w_out_ref, e_ref,
                        ln_g_ref, ln_b_ref, w_lm_ref,
                        o_ref,
                        x_scr, conv_scr, da_scr, dbx_scr, cbar_scr, y_scr,
                        *, n_layer, batch, L, d_model, d_inner, d_state,
                        d_conv, eps):
    BD = batch * d_inner          # lane-folded channel width (one vreg = 128)
    BS = batch * d_state
    l = pl.program_id(0)

    # Load the (lane-folded) embedding activations into the persistent carry.
    @pl.when(l == 0)
    def _init():
        x_scr[...] = x0_ref[...]

    x = x_scr[...]                                            # (L, B*d_model)

    # ---- fused in_proj: one MXU pass, x|z split at the 128-lane boundary ----
    xz = jnp.dot(x, w_in_ref[...], preferred_element_type=jnp.float32)  # (L, 2*BD)
    x_in = xz[:, :BD]
    z = xz[:, BD:]

    # ---- causal depthwise conv: zero-history scratch + shifted sublane reads
    # conv_scr rows [0, d_conv-1) are the zero history, rows [d_conv-1, ...) = x_in,
    # so conv_scr[d_conv-1-s + t] == x_in[t - s] with zeros for t < s.
    conv_scr[0:d_conv - 1, :] = jnp.zeros((d_conv - 1, BD), jnp.float32)
    conv_scr[d_conv - 1:d_conv - 1 + L, :] = x_in
    acc = x_in * conv_w_ref[0:1, :]                           # tap s = 0
    for s in range(1, d_conv):
        start = d_conv - 1 - s
        acc = acc + conv_scr[start:start + L, :] * conv_w_ref[s:s + 1, :]
    x_act = _silu(acc + conv_b_ref[...])                      # (L, BD)

    # ---- fused dt | B | C projection (single MXU pass, N = BD + 2*BS) -------
    proj = jnp.dot(x_act, w_proj_ref[...], preferred_element_type=jnp.float32)
    dt = _softplus(proj[:, :BD] + dt_b_ref[...])              # (L, BD)
    b_lane = proj[:, BD:BD + BS]                              # (L, BS)
    c_lane = proj[:, BD + BS:]                                # (L, BS)

    # ---- per-step scan operands staged in VMEM -------------------------------
    # state expansion (L, B*d_state) -> (L, d_state, B*d_inner) via 0/1 matmuls
    dtx = dt * x_act
    bb_rows, cc_rows = [], []
    for n in range(d_state):
        e_n = e_ref[n]                                        # (BS, BD) 0/1
        bb_rows.append(jnp.dot(b_lane, e_n,
                               preferred_element_type=jnp.float32)[:, None, :])
        cc_rows.append(jnp.dot(c_lane, e_n,
                               preferred_element_type=jnp.float32)[:, None, :])
    b_bcast = jnp.concatenate(bb_rows, axis=1)                # (L, d_state, BD)
    c_bcast = jnp.concatenate(cc_rows, axis=1)

    da_scr[...] = jnp.exp(dt[:, None, :] * a_ref[...][None, :, :])
    dbx_scr[...] = dtx[:, None, :] * b_bcast
    cbar_scr[...] = c_bcast

    # ---- selective scan: carry = h only (one (8,128) vreg); y rows -> VMEM ---
    def scan_step(t, h):
        h = da_scr[t] * h + dbx_scr[t]                        # (d_state, BD)
        y_scr[pl.ds(t, 1), :] = jnp.sum(h * cbar_scr[t], axis=0, keepdims=True)
        return h

    h0 = jnp.zeros((d_state, BD), jnp.float32)
    jax.lax.fori_loop(0, L, scan_step, h0, unroll=True)

    # ---- skip term, gating, out_proj; write the layer carry back -------------
    y = y_scr[...] + x_act * d_ref[...]
    y = y * _silu(z)
    x_new = jnp.dot(y, w_out_ref[...], preferred_element_type=jnp.float32)
    x_scr[...] = x_new                                        # (L, B*d_model)

    # ---- final LayerNorm + lm_head, fused over batch (lane-dense output) -----
    @pl.when(l == n_layer - 1)
    def _head():
        xb = jnp.concatenate(
            [x_new[:, b * d_model:(b + 1) * d_model] for b in range(batch)],
            axis=0)                                           # (B*L, d_model)
        mu = jnp.mean(xb, axis=-1, keepdims=True)
        xc = xb - mu
        var = jnp.mean(xc * xc, axis=-1, keepdims=True)       # biased (torch LN)
        xn = xc * jax.lax.rsqrt(var + eps)
        xn = xn * ln_g_ref[...] + ln_b_ref[...]
        o_ref[...] = jnp.dot(xn, w_lm_ref[...],
                             preferred_element_type=jnp.float32).astype(o_ref.dtype)


# ------------------------- weight packing (done once) -------------------------

def _block_diag(w, n):
    din, dout = w.shape
    out = jnp.zeros((n * din, n * dout), w.dtype)
    for b in range(n):
        out = out.at[b * din:(b + 1) * din, b * dout:(b + 1) * dout].set(w)
    return out


def pack_params(params, cfg, batch):
    d_model, d_inner = cfg["d_model"], cfg["d_inner"]
    d_state, dt_rank, d_conv = cfg["d_state"], cfg["dt_rank"], cfg["d_conv"]

    def bd(w):
        return _block_diag(w, batch)

    def lane_tile(v):
        return jnp.tile(v, (1, batch))

    per = {k: [] for k in ("w_in", "conv_w", "conv_b", "w_proj", "dt_b",
                           "a", "d", "w_out")}
    for p in params["layers"]:
        w_in_t = p["in_proj_w"].T                              # (d_model, 2*d_inner)
        per["w_in"].append(jnp.concatenate(
            [bd(w_in_t[:, :d_inner]), bd(w_in_t[:, d_inner:])], axis=1))

        w_ch = p["conv_w"][:, 0, :]                            # (d_inner, d_conv)
        per["conv_w"].append(lane_tile(w_ch[:, ::-1].T))       # row s = tap for x[t-s]
        per["conv_b"].append(lane_tile(p["conv_b"][None, :]))

        xproj_t = p["x_proj_w"].T                              # (d_inner, dt_rank+2*d_state)
        w_dt = bd(xproj_t[:, :dt_rank] @ p["dt_proj_w"].T)     # (BD, BD)
        w_b = bd(xproj_t[:, dt_rank:dt_rank + d_state])        # (BD, BS)
        w_c = bd(xproj_t[:, dt_rank + d_state:])               # (BD, BS)
        per["w_proj"].append(jnp.concatenate([w_dt, w_b, w_c], axis=1))
        per["dt_b"].append(lane_tile(p["dt_proj_b"][None, :]))
        per["a"].append(lane_tile((-jnp.exp(p["A_log"])).T))   # -exp(A_log) precomputed
        per["d"].append(lane_tile(p["D"][None, :]))
        per["w_out"].append(bd(p["out_proj_w"].T))

    packed = {k: jnp.stack(v, axis=0) for k, v in per.items()}

    # 0/1 expansion matrices: e[n] maps (L, B*d_state) -> per-state broadcast (L, B*d_inner)
    e = jnp.zeros((d_state, batch * d_state, batch * d_inner), jnp.float32)
    for b in range(batch):
        for n in range(d_state):
            e = e.at[n, b * d_state + n, b * d_inner:(b + 1) * d_inner].set(1.0)
    packed["e_mat"] = e

    packed["ln_g"] = params["ln_gamma"][None, :]
    packed["ln_b"] = params["ln_beta"][None, :]
    packed["w_lm"] = params["lm_head_w"].T
    packed["embedding"] = params["embedding"]
    return packed


# --------------------------------- forward -----------------------------------

def model_forward(input_ids, packed, cfg):
    batch, L = input_ids.shape
    d_model, d_inner, d_state = cfg["d_model"], cfg["d_inner"], cfg["d_state"]
    d_conv, n_layer, vocab = cfg["d_conv"], cfg["n_layer"], cfg["vocab_size"]
    BD, BS, BM = batch * d_inner, batch * d_state, batch * d_model

    # nn.Embedding gather kept as wrapper glue (scalar-prefetch row gather is the
    # in-kernel path once the table is large); everything else runs in-kernel.
    emb = jnp.take(packed["embedding"], input_ids, axis=0).astype(jnp.float32)
    x0 = emb.transpose(1, 0, 2).reshape(L, BM)                 # lane-folded

    kern = partial(_mamba_model_kernel, n_layer=n_layer, batch=batch, L=L,
                   d_model=d_model, d_inner=d_inner, d_state=d_state,
                   d_conv=d_conv, eps=1e-5)

    def per_layer(*tail):                     # streamed per-layer weight
        nd = len(tail)
        return pl.BlockSpec((None,) + tail, lambda l: (l,) + (0,) * nd)

    def resident(*shape):                     # constant index -> DMA'd once
        nd = len(shape)
        return pl.BlockSpec(shape, lambda l: (0,) * nd)

    grid_spec = pltpu.PrefetchScalarGridSpec(
        num_scalar_prefetch=0,
        grid=(n_layer,),
        in_specs=[
            resident(L, BM),                        # x0
            per_layer(BM, 2 * BD),                  # fused in_proj x|z
            per_layer(d_conv, BD),                  # conv taps (flipped)
            per_layer(1, BD),                       # conv bias
            per_layer(BD, BD + 2 * BS),             # fused dt|B|C projection
            per_layer(1, BD),                       # dt bias
            per_layer(d_state, BD),                 # A = -exp(A_log)
            per_layer(1, BD),                       # D
            per_layer(BD, BM),                      # out_proj
            resident(d_state, BS, BD),              # 0/1 expansion matrices
            resident(1, d_model),                   # ln gamma
            resident(1, d_model),                   # ln beta
            resident(d_model, vocab),               # lm_head
        ],
        out_specs=resident(batch * L, vocab),
        scratch_shapes=[
            pltpu.VMEM((L, BM), jnp.float32),                   # layer carry x
            pltpu.VMEM((L + d_conv - 1, BD), jnp.float32),      # conv history
            pltpu.VMEM((L, d_state, BD), jnp.float32),          # exp(dt*A)
            pltpu.VMEM((L, d_state, BD), jnp.float32),          # dt*x*B
            pltpu.VMEM((L, d_state, BD), jnp.float32),          # C broadcast
            pltpu.VMEM((L, BD), jnp.float32),                   # y rows
        ],
    )

    out = pl.pallas_call(
        kern,
        out_shape=jax.ShapeDtypeStruct((batch * L, vocab), jnp.float32),
        grid_spec=grid_spec,
        compiler_params=pltpu.CompilerParams(
            dimension_semantics=("arbitrary",),        # layers are sequential
            vmem_limit_bytes=32 * 1024 * 1024),
    )(x0, packed["w_in"], packed["conv_w"], packed["conv_b"], packed["w_proj"],
      packed["dt_b"], packed["a"], packed["d"], packed["w_out"],
      packed["e_mat"], packed["ln_g"], packed["ln_b"], packed["w_lm"])

    return out.reshape(batch, L, vocab)


# ------------------------- deterministic parameter init ----------------------

def init_params(key, cfg):
    d_model, d_inner = cfg["d_model"], cfg["d_inner"]
    d_state, d_conv = cfg["d_state"], cfg["d_conv"]
    dt_rank, vocab, n_layer = cfg["dt_rank"], cfg["vocab_size"], cfg["n_layer"]

    def nrm(k, shape, scale):
        return scale * jax.random.normal(k, shape, dtype=jnp.float32)

    keys = jax.random.split(key, n_layer + 2)
    params = {
        "embedding": nrm(keys[0], (vocab, d_model), 1.0),
        "ln_gamma": jnp.ones((d_model,), jnp.float32),
        "ln_beta": jnp.zeros((d_model,), jnp.float32),
        "lm_head_w": nrm(keys[1], (vocab, d_model), d_model ** -0.5),
        "layers": [],
    }
    for i in range(n_layer):
        lk = jax.random.split(keys[2 + i], 6)
        params["layers"].append({
            "in_proj_w": nrm(lk[0], (2 * d_inner, d_model), d_model ** -0.5),
            "conv_w": nrm(lk[1], (d_inner, 1, d_conv), 0.3),
            "conv_b": nrm(lk[2], (d_inner,), 0.1),
            "x_proj_w": nrm(lk[3], (dt_rank + 2 * d_state, d_inner), d_inner ** -0.5),
            "dt_proj_w": nrm(lk[4], (d_inner, dt_rank), dt_rank ** -0.5),
            "dt_proj_b": jnp.log(jnp.expm1(jnp.full((d_inner,), 0.01, jnp.float32))),
            "A_log": jnp.log(jnp.broadcast_to(
                jnp.arange(1, d_state + 1, dtype=jnp.float32),
                (d_inner, d_state))),
            "D": jnp.ones((d_inner,), jnp.float32),
            "out_proj_w": nrm(lk[5], (d_model, d_inner), d_inner ** -0.5),
        })
    return params


# ------------------------------ pure-JAX reference ---------------------------

def _ref_mamba(x, p, cfg):
    d_inner, d_state = cfg["d_inner"], cfg["d_state"]
    dt_rank, d_conv = cfg["dt_rank"], cfg["d_conv"]
    Bsz, L, _ = x.shape
    xz = x @ p["in_proj_w"].T
    x_in, z = xz[..., :d_inner], xz[..., d_inner:]
    w = p["conv_w"][:, 0, :]
    xpad = jnp.pad(x_in, ((0, 0), (d_conv - 1, 0), (0, 0)))
    xc = sum(xpad[:, j:j + L, :] * w[:, j][None, None, :] for j in range(d_conv))
    x_act = jax.nn.silu(xc + p["conv_b"])
    x_dbl = x_act @ p["x_proj_w"].T
    dt_in = x_dbl[..., :dt_rank]
    b_mat = x_dbl[..., dt_rank:dt_rank + d_state]
    c_mat = x_dbl[..., dt_rank + d_state:]
    dt = jax.nn.softplus(dt_in @ p["dt_proj_w"].T + p["dt_proj_b"])
    A = -jnp.exp(p["A_log"])

    def step(h, inp):
        dt_t, b_t, c_t, x_t = inp
        h = (jnp.exp(dt_t[..., None] * A) * h
             + dt_t[..., None] * b_t[:, None, :] * x_t[..., None])
        return h, jnp.einsum("bdn,bn->bd", h, c_t)

    h0 = jnp.zeros((Bsz, d_inner, d_state), jnp.float32)
    _, ys = jax.lax.scan(step, h0, (dt.swapaxes(0, 1), b_mat.swapaxes(0, 1),
                                    c_mat.swapaxes(0, 1), x_act.swapaxes(0, 1)))
    y = ys.swapaxes(0, 1) + x_act * p["D"]
    y = y * jax.nn.silu(z)
    return y @ p["out_proj_w"].T


def reference_forward(input_ids, params, cfg):
    x = jnp.take(params["embedding"], input_ids, axis=0)
    for lp in params["layers"]:
        x = _ref_mamba(x, lp, cfg)
    mu = x.mean(-1, keepdims=True)
    var = ((x - mu) ** 2).mean(-1, keepdims=True)
    xn = (x - mu) / jnp.sqrt(var + 1e-5)
    xn = xn * params["ln_gamma"] + params["ln_beta"]
    return xn @ params["lm_head_w"].T


# ----------------------------------- main -------------------------------------

if __name__ == "__main__":
    cfg = dict(d_model=32, n_layer=2, vocab_size=256, d_state=8, d_conv=4, expand=2)
    cfg["d_inner"] = cfg["expand"] * cfg["d_model"]          # 64
    cfg["dt_rank"] = math.ceil(cfg["d_model"] / 16)          # 2

    key = jax.random.PRNGKey(0)
    pkey, ikey = jax.random.split(key)
    params = init_params(pkey, cfg)

    batch, seqlen = 2, 8
    input_ids = jax.random.randint(ikey, (batch, seqlen), 0, cfg["vocab_size"],
                                   dtype=jnp.int32)

    packed = pack_params(params, cfg, batch)                 # once, not per forward
    fwd = jax.jit(partial(model_forward, cfg=cfg))

    logits = jax.block_until_ready(fwd(input_ids, packed))

    assert logits.shape == (batch, seqlen, cfg["vocab_size"])
    assert bool(jnp.all(jnp.isfinite(logits)))
    ref = reference_forward(input_ids, params, cfg)
    max_err = float(jnp.max(jnp.abs(logits - ref)))
    assert max_err < 5e-2, f"kernel vs reference mismatch: {max_err}"
    print("KERNEL_OK")
</pallas_src>

<mosaic_0001>
module attributes {stable_mosaic.version = 11 : i64} {
  func.func @_mamba_model_kernel(%arg0: i32, %arg1: memref<8x64xf32, #tpu.memory_space<vmem>>, %arg2: memref<1x64x256xf32, #tpu.memory_space<vmem>>, %arg3: memref<1x4x128xf32, #tpu.memory_space<vmem>>, %arg4: memref<1x1x128xf32, #tpu.memory_space<vmem>>, %arg5: memref<1x128x160xf32, #tpu.memory_space<vmem>>, %arg6: memref<1x1x128xf32, #tpu.memory_space<vmem>>, %arg7: memref<1x8x128xf32, #tpu.memory_space<vmem>>, %arg8: memref<1x1x128xf32, #tpu.memory_space<vmem>>, %arg9: memref<1x128x64xf32, #tpu.memory_space<vmem>>, %arg10: memref<8x16x128xf32, #tpu.memory_space<vmem>>, %arg11: memref<1x32xf32, #tpu.memory_space<vmem>>, %arg12: memref<1x32xf32, #tpu.memory_space<vmem>>, %arg13: memref<32x256xf32, #tpu.memory_space<vmem>>, %arg14: memref<16x256xf32, #tpu.memory_space<vmem>>, %arg15: memref<8x64xf32, #tpu.memory_space<vmem>>, %arg16: memref<11x128xf32, #tpu.memory_space<vmem>>, %arg17: memref<8x8x128xf32, #tpu.memory_space<vmem>>, %arg18: memref<8x8x128xf32, #tpu.memory_space<vmem>>, %arg19: memref<8x8x128xf32, #tpu.memory_space<vmem>>, %arg20: memref<8x128xf32, #tpu.memory_space<vmem>>) attributes {dimension_semantics = [#tpu.dimension_semantics<arbitrary>], iteration_bounds = array<i64: 2>, scalar_prefetch = 0 : i64, scratch_operands = 6 : i64, tpu.core_type = #tpu.core_type<tc>, window_params = [{pipeline_mode = #tpu.pipeline_mode<synchronous>, transform_indices = @transform_0, window_bounds = array<i64: 8, 64>}, {transform_indices = @transform_1, window_bounds = array<i64: 1, 64, 256>}, {transform_indices = @transform_2, window_bounds = array<i64: 1, 4, 128>}, {transform_indices = @transform_3, window_bounds = array<i64: 1, 1, 128>}, {transform_indices = @transform_4, window_bounds = array<i64: 1, 128, 160>}, {transform_indices = @transform_5, window_bounds = array<i64: 1, 1, 128>}, {transform_indices = @transform_6, window_bounds = array<i64: 1, 8, 128>}, {transform_indices = @transform_7, window_bounds = array<i64: 1, 1, 128>}, {transform_indices = @transform_8, window_bounds = array<i64: 1, 128, 64>}, {pipeline_mode = #tpu.pipeline_mode<synchronous>, transform_indices = @transform_9, window_bounds = array<i64: 8, 16, 128>}, {pipeline_mode = #tpu.pipeline_mode<synchronous>, transform_indices = @transform_10, window_bounds = array<i64: 1, 32>}, {pipeline_mode = #tpu.pipeline_mode<synchronous>, transform_indices = @transform_11, window_bounds = array<i64: 1, 32>}, {pipeline_mode = #tpu.pipeline_mode<synchronous>, transform_indices = @transform_12, window_bounds = array<i64: 32, 256>}, {pipeline_mode = #tpu.pipeline_mode<synchronous>, transform_indices = @transform_13, window_bounds = array<i64: 16, 256>}]} {
    %c0_i32 = arith.constant 0 : i32
    %0 = arith.cmpi eq, %arg0, %c0_i32 : i32
    %1 = arith.extui %0 : i1 to i32
    %c0_i32_0 = arith.constant 0 : i32
    %2 = arith.cmpi ne, %1, %c0_i32_0 : i32
    scf.if %2 {
      %c0_171 = arith.constant 0 : index
      %c0_172 = arith.constant 0 : index
      %282 = vector.load %arg1[%c0_171, %c0_172] : memref<8x64xf32, #tpu.memory_space<vmem>>, vector<8x64xf32>
      %c0_173 = arith.constant 0 : index
      %c0_174 = arith.constant 0 : index
      %283 = vector.load %arg15[%c0_173, %c0_174] : memref<8x64xf32, #tpu.memory_space<vmem>>, vector<8x64xf32>
      tpu.vector_store %arg15[%c0_173, %c0_174], %282 {strides = array<i32>} : memref<8x64xf32, #tpu.memory_space<vmem>>, vector<8x64xf32>,
    } else {
    }
    %c0 = arith.constant 0 : index
    %c0_1 = arith.constant 0 : index
    %3 = vector.load %arg15[%c0, %c0_1] : memref<8x64xf32, #tpu.memory_space<vmem>>, vector<8x64xf32>
    %c0_2 = arith.constant 0 : index
    %c0_3 = arith.constant 0 : index
    %c0_4 = arith.constant 0 : index
    %4 = vector.load %arg2[%c0_2, %c0_3, %c0_4] : memref<1x64x256xf32, #tpu.memory_space<vmem>>, vector<1x64x256xf32>
    %5 = vector.shape_cast %4 : vector<1x64x256xf32> to vector<64x256xf32>
    %cst = arith.constant dense<0.000000e+00> : vector<8x256xf32>
    %6 = tpu.matmul %3, %5, %cst {dimension_numbers = #tpu.dot_dimension_numbers<[1], [0], [0], [1], [0, 0, 1, 1], [], []>} : vector<8x64xf32>, vector<64x256xf32>, vector<8x256xf32> -> vector<8x256xf32>
    %7 = vector.extract_strided_slice %6 {offsets = [0, 0], sizes = [8, 128], strides = [1, 1]} : vector<8x256xf32> to vector<8x128xf32>
    %8 = vector.extract_strided_slice %6 {offsets = [0, 128], sizes = [8, 128], strides = [1, 1]} : vector<8x256xf32> to vector<8x128xf32>
    %cst_5 = arith.constant 0.000000e+00 : f32
    %9 = vector.broadcast %cst_5 : f32 to vector<3x128xf32>
    %c0_6 = arith.constant 0 : index
    %c0_7 = arith.constant 0 : index
    %10 = vector.load %arg16[%c0_6, %c0_7] : memref<11x128xf32, #tpu.memory_space<vmem>>, vector<3x128xf32>
    tpu.vector_store %arg16[%c0_6, %c0_7], %9 {strides = array<i32>} : memref<11x128xf32, #tpu.memory_space<vmem>>, vector<3x128xf32>,
    %c3 = arith.constant 3 : index
    %c0_8 = arith.constant 0 : index
    %11 = vector.load %arg16[%c3, %c0_8] : memref<11x128xf32, #tpu.memory_space<vmem>>, vector<8x128xf32>
    tpu.vector_store %arg16[%c3, %c0_8], %7 {strides = array<i32>} : memref<11x128xf32, #tpu.memory_space<vmem>>, vector<8x128xf32>,
    %c0_9 = arith.constant 0 : index
    %c0_10 = arith.constant 0 : index
    %c0_11 = arith.constant 0 : index
    %12 = vector.load %arg3[%c0_9, %c0_10, %c0_11] : memref<1x4x128xf32, #tpu.memory_space<vmem>>, vector<1x1x128xf32>
    %13 = vector.shape_cast %12 : vector<1x1x128xf32> to vector<1x128xf32>
    %14 = vector.broadcast %13 : vector<1x128xf32> to vector<8x128xf32>
    %15 = arith.mulf %7, %14 : vector<8x128xf32>
    %c2 = arith.constant 2 : index
    %c0_12 = arith.constant 0 : index
    %16 = vector.load %arg16[%c2, %c0_12] : memref<11x128xf32, #tpu.memory_space<vmem>>, vector<8x128xf32>
    %c0_13 = arith.constant 0 : index
    %c1 = arith.constant 1 : index
    %c0_14 = arith.constant 0 : index
    %17 = vector.load %arg3[%c0_13, %c1, %c0_14] : memref<1x4x128xf32, #tpu.memory_space<vmem>>, vector<1x1x128xf32>
    %18 = vector.shape_cast %17 : vector<1x1x128xf32> to vector<1x128xf32>
    %19 = vector.broadcast %18 : vector<1x128xf32> to vector<8x128xf32>
    %20 = arith.mulf %16, %19 : vector<8x128xf32>
    %21 = arith.addf %15, %20 : vector<8x128xf32>
    %c1_15 = arith.constant 1 : index
    %c0_16 = arith.constant 0 : index
    %22 = vector.load %arg16[%c1_15, %c0_16] : memref<11x128xf32, #tpu.memory_space<vmem>>, vector<8x128xf32>
    %c0_17 = arith.constant 0 : index
    %c2_18 = arith.constant 2 : index
    %c0_19 = arith.constant 0 : index
    %23 = vector.load %arg3[%c0_17, %c2_18, %c0_19] : memref<1x4x128xf32, #tpu.memory_space<vmem>>, vector<1x1x128xf32>
    %24 = vector.shape_cast %23 : vector<1x1x128xf32> to vector<1x128xf32>
    %25 = vector.broadcast %24 : vector<1x128xf32> to vector<8x128xf32>
    %26 = arith.mulf %22, %25 : vector<8x128xf32>
    %27 = arith.addf %21, %26 : vector<8x128xf32>
    %c0_20 = arith.constant 0 : index
    %c0_21 = arith.constant 0 : index
    %28 = vector.load %arg16[%c0_20, %c0_21] : memref<11x128xf32, #tpu.memory_space<vmem>>, vector<8x128xf32>
    %c0_22 = arith.constant 0 : index
    %c3_23 = arith.constant 3 : index
    %c0_24 = arith.constant 0 : index
    %29 = vector.load %arg3[%c0_22, %c3_23, %c0_24] : memref<1x4x128xf32, #tpu.memory_space<vmem>>, vector<1x1x128xf32>
    %30 = vector.shape_cast %29 : vector<1x1x128xf32> to vector<1x128xf32>
    %31 = vector.broadcast %30 : vector<1x128xf32> to vector<8x128xf32>
    %32 = arith.mulf %28, %31 : vector<8x128xf32>
    %33 = arith.addf %27, %32 : vector<8x128xf32>
    %c0_25 = arith.constant 0 : index
    %c0_26 = arith.constant 0 : index
    %c0_27 = arith.constant 0 : index
    %34 = vector.load %arg4[%c0_25, %c0_26, %c0_27] : memref<1x1x128xf32, #tpu.memory_space<vmem>>, vector<1x1x128xf32>
    %35 = vector.shape_cast %34 : vector<1x1x128xf32> to vector<1x128xf32>
    %36 = vector.broadcast %35 : vector<1x128xf32> to vector<8x128xf32>
    %37 = arith.addf %33, %36 : vector<8x128xf32>
    %cst_28 = arith.constant 0.000000e+00 : f32
    %38 = vector.broadcast %cst_28 : f32 to vector<8x128xf32>
    %39 = arith.subf %38, %37 : vector<8x128xf32>
    %40 = math.exp %39 : vector<8x128xf32>
    %cst_29 = arith.constant 1.000000e+00 : f32
    %41 = vector.broadcast %cst_29 : f32 to vector<8x128xf32>
    %42 = arith.addf %41, %40 : vector<8x128xf32>
    %cst_30 = arith.constant 1.000000e+00 : f32
    %43 = vector.broadcast %cst_30 : f32 to vector<8x128xf32>
    %44 = arith.divf %43, %42 : vector<8x128xf32>
    %45 = arith.mulf %37, %44 : vector<8x128xf32>
    %c0_31 = arith.constant 0 : index
    %c0_32 = arith.constant 0 : index
    %c0_33 = arith.constant 0 : index
    %46 = vector.load %arg5[%c0_31, %c0_32, %c0_33] : memref<1x128x160xf32, #tpu.memory_space<vmem>>, vector<1x128x160xf32>
    %47 = vector.shape_cast %46 : vector<1x128x160xf32> to vector<128x160xf32>
    %cst_34 = arith.constant dense<0.000000e+00> : vector<8x160xf32>
    %48 = tpu.matmul %45, %47, %cst_34 {dimension_numbers = #tpu.dot_dimension_numbers<[1], [0], [0], [1], [0, 0, 1, 1], [], []>} : vector<8x128xf32>, vector<128x160xf32>, vector<8x160xf32> -> vector<8x160xf32>
    %49 = vector.extract_strided_slice %48 {offsets = [0, 0], sizes = [8, 128], strides = [1, 1]} : vector<8x160xf32> to vector<8x128xf32>
    %c0_35 = arith.constant 0 : index
    %c0_36 = arith.constant 0 : index
    %c0_37 = arith.constant 0 : index
    %50 = vector.load %arg6[%c0_35, %c0_36, %c0_37] : memref<1x1x128xf32, #tpu.memory_space<vmem>>, vector<1x1x128xf32>
    %51 = vector.shape_cast %50 : vector<1x1x128xf32> to vector<1x128xf32>
    %52 = vector.broadcast %51 : vector<1x128xf32> to vector<8x128xf32>
    %53 = arith.addf %49, %52 : vector<8x128xf32>
    %cst_38 = arith.constant 0.000000e+00 : f32
    %54 = vector.broadcast %cst_38 : f32 to vector<8x128xf32>
    %55 = arith.maximumf %53, %54 : vector<8x128xf32>
    %56 = math.absf %53 : vector<8x128xf32>
    %cst_39 = arith.constant 0.000000e+00 : f32
    %57 = vector.broadcast %cst_39 : f32 to vector<8x128xf32>
    %58 = arith.subf %57, %56 : vector<8x128xf32>
    %59 = math.exp %58 : vector<8x128xf32>
    %cst_40 = arith.constant 1.000000e+00 : f32
    %60 = vector.broadcast %cst_40 : f32 to vector<8x128xf32>
    %61 = arith.addf %60, %59 : vector<8x128xf32>
    %62 = math.log %61 : vector<8x128xf32>
    %63 = arith.addf %55, %62 : vector<8x128xf32>
    %64 = vector.extract_strided_slice %48 {offsets = [0, 128], sizes = [8, 16], strides = [1, 1]} : vector<8x160xf32> to vector<8x16xf32>
    %65 = vector.extract_strided_slice %48 {offsets = [0, 144], sizes = [8, 16], strides = [1, 1]} : vector<8x160xf32> to vector<8x16xf32>
    %66 = arith.mulf %63, %45 : vector<8x128xf32>
    %c0_41 = arith.constant 0 : index
    %c0_42 = arith.constant 0 : index
    %c0_43 = arith.constant 0 : index
    %67 = vector.load %arg10[%c0_41, %c0_42, %c0_43] : memref<8x16x128xf32, #tpu.memory_space<vmem>>, vector<1x16x128xf32>
    %68 = vector.shape_cast %67 : vector<1x16x128xf32> to vector<16x128xf32>
    %cst_44 = arith.constant dense<0.000000e+00> : vector<8x128xf32>
    %69 = tpu.matmul %64, %68, %cst_44 {dimension_numbers = #tpu.dot_dimension_numbers<[1], [0], [0], [1], [0, 0, 1, 1], [], []>} : vector<8x16xf32>, vector<16x128xf32>, vector<8x128xf32> -> vector<8x128xf32>
    %70 = vector.shape_cast %69 : vector<8x128xf32> to vector<8x1x128xf32>
    %cst_45 = arith.constant dense<0.000000e+00> : vector<8x128xf32>
    %71 = tpu.matmul %65, %68, %cst_45 {dimension_numbers = #tpu.dot_dimension_numbers<[1], [0], [0], [1], [0, 0, 1, 1], [], []>} : vector<8x16xf32>, vector<16x128xf32>, vector<8x128xf32> -> vector<8x128xf32>
    %72 = vector.shape_cast %71 : vector<8x128xf32> to vector<8x1x128xf32>
    %c1_46 = arith.constant 1 : index
    %c0_47 = arith.constant 0 : index
    %c0_48 = arith.constant 0 : index
    %73 = vector.load %arg10[%c1_46, %c0_47, %c0_48] : memref<8x16x128xf32, #tpu.memory_space<vmem>>, vector<1x16x128xf32>
    %74 = vector.shape_cast %73 : vector<1x16x128xf32> to vector<16x128xf32>
    %cst_49 = arith.constant dense<0.000000e+00> : vector<8x128xf32>
    %75 = tpu.matmul %64, %74, %cst_49 {dimension_numbers = #tpu.dot_dimension_numbers<[1], [0], [0], [1], [0, 0, 1, 1], [], []>} : vector<8x16xf32>, vector<16x128xf32>, vector<8x128xf32> -> vector<8x128xf32>
    %76 = vector.shape_cast %75 : vector<8x128xf32> to vector<8x1x128xf32>
    %cst_50 = arith.constant dense<0.000000e+00> : vector<8x128xf32>
    %77 = tpu.matmul %65, %74, %cst_50 {dimension_numbers = #tpu.dot_dimension_numbers<[1], [0], [0], [1], [0, 0, 1, 1], [], []>} : vector<8x16xf32>, vector<16x128xf32>, vector<8x128xf32> -> vector<8x128xf32>
    %78 = vector.shape_cast %77 : vector<8x128xf32> to vector<8x1x128xf32>
    %c2_51 = arith.constant 2 : index
    %c0_52 = arith.constant 0 : index
    %c0_53 = arith.constant 0 : index
    %79 = vector.load %arg10[%c2_51, %c0_52, %c0_53] : memref<8x16x128xf32, #tpu.memory_space<vmem>>, vector<1x16x128xf32>
    %80 = vector.shape_cast %79 : vector<1x16x128xf32> to vector<16x128xf32>
    %cst_54 = arith.constant dense<0.000000e+00> : vector<8x128xf32>
    %81 = tpu.matmul %64, %80, %cst_54 {dimension_numbers = #tpu.dot_dimension_numbers<[1], [0], [0], [1], [0, 0, 1, 1], [], []>} : vector<8x16xf32>, vector<16x128xf32>, vector<8x128xf32> -> vector<8x128xf32>
    %82 = vector.shape_cast %81 : vector<8x128xf32> to vector<8x1x128xf32>
    %cst_55 = arith.constant dense<0.000000e+00> : vector<8x128xf32>
    %83 = tpu.matmul %65, %80, %cst_55 {dimension_numbers = #tpu.dot_dimension_numbers<[1], [0], [0], [1], [0, 0, 1, 1], [], []>} : vector<8x16xf32>, vector<16x128xf32>, vector<8x128xf32> -> vector<8x128xf32>
    %84 = vector.shape_cast %83 : vector<8x128xf32> to vector<8x1x128xf32>
    %c3_56 = arith.constant 3 : index
    %c0_57 = arith.constant 0 : index
    %c0_58 = arith.constant 0 : index
    %85 = vector.load %arg10[%c3_56, %c0_57, %c0_58] : memref<8x16x128xf32, #tpu.memory_space<vmem>>, vector<1x16x128xf32>
    %86 = vector.shape_cast %85 : vector<1x16x128xf32> to vector<16x128xf32>
    %cst_59 = arith.constant dense<0.000000e+00> : vector<8x128xf32>
    %87 = tpu.matmul %64, %86, %cst_59 {dimension_numbers = #tpu.dot_dimension_numbers<[1], [0], [0], [1], [0, 0, 1, 1], [], []>} : vector<8x16xf32>, vector<16x128xf32>, vector<8x128xf32> -> vector<8x128xf32>
    %88 = vector.shape_cast %87 : vector<8x128xf32> to vector<8x1x128xf32>
    %cst_60 = arith.constant dense<0.000000e+00> : vector<8x128xf32>
    %89 = tpu.matmul %65, %86, %cst_60 {dimension_numbers = #tpu.dot_dimension_numbers<[1], [0], [0], [1], [0, 0, 1, 1], [], []>} : vector<8x16xf32>, vector<16x128xf32>, vector<8x128xf32> -> vector<8x128xf32>
    %90 = vector.shape_cast %89 : vector<8x128xf32> to vector<8x1x128xf32>
    %c4 = arith.constant 4 : index
    %c0_61 = arith.constant 0 : index
    %c0_62 = arith.constant 0 : index
    %91 = vector.load %arg10[%c4, %c0_61, %c0_62] : memref<8x16x128xf32, #tpu.memory_space<vmem>>, vector<1x16x128xf32>
    %92 = vector.shape_cast %91 : vector<1x16x128xf32> to vector<16x128xf32>
    %cst_63 = arith.constant dense<0.000000e+00> : vector<8x128xf32>
    %93 = tpu.matmul %64, %92, %cst_63 {dimension_numbers = #tpu.dot_dimension_numbers<[1], [0], [0], [1], [0, 0, 1, 1], [], []>} : vector<8x16xf32>, vector<16x128xf32>, vector<8x128xf32> -> vector<8x128xf32>
    %94 = vector.shape_cast %93 : vector<8x128xf32> to vector<8x1x128xf32>
    %cst_64 = arith.constant dense<0.000000e+00> : vector<8x128xf32>
    %95 = tpu.matmul %65, %92, %cst_64 {dimension_numbers = #tpu.dot_dimension_numbers<[1], [0], [0], [1], [0, 0, 1, 1], [], []>} : vector<8x16xf32>, vector<16x128xf32>, vector<8x128xf32> -> vector<8x128xf32>
    %96 = vector.shape_cast %95 : vector<8x128xf32> to vector<8x1x128xf32>
    %c5 = arith.constant 5 : index
    %c0_65 = arith.constant 0 : index
    %c0_66 = arith.constant 0 : index
    %97 = vector.load %arg10[%c5, %c0_65, %c0_66] : memref<8x16x128xf32, #tpu.memory_space<vmem>>, vector<1x16x128xf32>
    %98 = vector.shape_cast %97 : vector<1x16x128xf32> to vector<16x128xf32>
    %cst_67 = arith.constant dense<0.000000e+00> : vector<8x128xf32>
    %99 = tpu.matmul %64, %98, %cst_67 {dimension_numbers = #tpu.dot_dimension_numbers<[1], [0], [0], [1], [0, 0, 1, 1], [], []>} : vector<8x16xf32>, vector<16x128xf32>, vector<8x128xf32> -> vector<8x128xf32>
    %100 = vector.shape_cast %99 : vector<8x128xf32> to vector<8x1x128xf32>
    %cst_68 = arith.constant dense<0.000000e+00> : vector<8x128xf32>
    %101 = tpu.matmul %65, %98, %cst_68 {dimension_numbers = #tpu.dot_dimension_numbers<[1], [0], [0], [1], [0, 0, 1, 1], [], []>} : vector<8x16xf32>, vector<16x128xf32>, vector<8x128xf32> -> vector<8x128xf32>
    %102 = vector.shape_cast %101 : vector<8x128xf32> to vector<8x1x128xf32>
    %c6 = arith.constant 6 : index
    %c0_69 = arith.constant 0 : index
    %c0_70 = arith.constant 0 : index
    %103 = vector.load %arg10[%c6, %c0_69, %c0_70] : memref<8x16x128xf32, #tpu.memory_space<vmem>>, vector<1x16x128xf32>
    %104 = vector.shape_cast %103 : vector<1x16x128xf32> to vector<16x128xf32>
    %cst_71 = arith.constant dense<0.000000e+00> : vector<8x128xf32>
    %105 = tpu.matmul %64, %104, %cst_71 {dimension_numbers = #tpu.dot_dimension_numbers<[1], [0], [0], [1], [0, 0, 1, 1], [], []>} : vector<8x16xf32>, vector<16x128xf32>, vector<8x128xf32> -> vector<8x128xf32>
    %106 = vector.shape_cast %105 : vector<8x128xf32> to vector<8x1x128xf32>
    %cst_72 = arith.constant dense<0.000000e+00> : vector<8x128xf32>
    %107 = tpu.matmul %65, %104, %cst_72 {dimension_numbers = #tpu.dot_dimension_numbers<[1], [0], [0], [1], [0, 0, 1, 1], [], []>} : vector<8x16xf32>, vector<16x128xf32>, vector<8x128xf32> -> vector<8x128xf32>
    %108 = vector.shape_cast %107 : vector<8x128xf32> to vector<8x1x128xf32>
    %c7 = arith.constant 7 : index
    %c0_73 = arith.constant 0 : index
    %c0_74 = arith.constant 0 : index
    %109 = vector.load %arg10[%c7, %c0_73, %c0_74] : memref<8x16x128xf32, #tpu.memory_space<vmem>>, vector<1x16x128xf32>
    %110 = vector.shape_cast %109 : vector<1x16x128xf32> to vector<16x128xf32>
    %cst_75 = arith.constant dense<0.000000e+00> : vector<8x128xf32>
    %111 = tpu.matmul %64, %110, %cst_75 {dimension_numbers = #tpu.dot_dimension_numbers<[1], [0], [0], [1], [0, 0, 1, 1], [], []>} : vector<8x16xf32>, vector<16x128xf32>, vector<8x128xf32> -> vector<8x128xf32>
    %112 = vector.shape_cast %111 : vector<8x128xf32> to vector<8x1x128xf32>
    %cst_76 = arith.constant dense<0.000000e+00> : vector<8x128xf32>
    %113 = tpu.matmul %65, %110, %cst_76 {dimension_numbers = #tpu.dot_dimension_numbers<[1], [0], [0], [1], [0, 0, 1, 1], [], []>} : vector<8x16xf32>, vector<16x128xf32>, vector<8x128xf32> -> vector<8x128xf32>
    %114 = vector.shape_cast %113 : vector<8x128xf32> to vector<8x1x128xf32>
    %115 = tpu.concatenate %70, %76, %82, %88, %94, %100, %106, %112 in 1 : vector<8x1x128xf32>, vector<8x1x128xf32>, vector<8x1x128xf32>, vector<8x1x128xf32>, vector<8x1x128xf32>, vector<8x1x128xf32>, vector<8x1x128xf32>, vector<8x1x128xf32> -> vector<8x8x128xf32>
    %116 = tpu.concatenate %72, %78, %84, %90, %96, %102, %108, %114 in 1 : vector<8x1x128xf32>, vector<8x1x128xf32>, vector<8x1x128xf32>, vector<8x1x128xf32>, vector<8x1x128xf32>, vector<8x1x128xf32>, vector<8x1x128xf32>, vector<8x1x128xf32> -> vector<8x8x128xf32>
    %117 = vector.shape_cast %63 : vector<8x128xf32> to vector<8x1x128xf32>
    %c0_77 = arith.constant 0 : index
    %c0_78 = arith.constant 0 : index
    %c0_79 = arith.constant 0 : index
    %118 = vector.load %arg7[%c0_77, %c0_78, %c0_79] : memref<1x8x128xf32, #tpu.memory_space<vmem>>, vector<1x8x128xf32>
    %119 = vector.shape_cast %118 : vector<1x8x128xf32> to vector<8x128xf32>
    %120 = vector.shape_cast %119 : vector<8x128xf32> to vector<1x8x128xf32>
    %121 = vector.broadcast %117 : vector<8x1x128xf32> to vector<8x8x128xf32>
    %122 = vector.broadcast %120 : vector<1x8x128xf32> to vector<8x8x128xf32>
    %123 = arith.mulf %121, %122 : vector<8x8x128xf32>
    %124 = math.exp %123 : vector<8x8x128xf32>
    %c0_80 = arith.constant 0 : index
    %c0_81 = arith.constant 0 : index
    %c0_82 = arith.constant 0 : index
    %125 = vector.load %arg17[%c0_80, %c0_81, %c0_82] : memref<8x8x128xf32, #tpu.memory_space<vmem>>, vector<8x8x128xf32>
    tpu.vector_store %arg17[%c0_80, %c0_81, %c0_82], %124 {strides = array<i32>} : memref<8x8x128xf32, #tpu.memory_space<vmem>>, vector<8x8x128xf32>,
    %126 = vector.shape_cast %66 : vector<8x128xf32> to vector<8x1x128xf32>
    %127 = vector.broadcast %126 : vector<8x1x128xf32> to vector<8x8x128xf32>
    %128 = arith.mulf %127, %115 : vector<8x8x128xf32>
    %c0_83 = arith.constant 0 : index
    %c0_84 = arith.constant 0 : index
    %c0_85 = arith.constant 0 : index
    %129 = vector.load %arg18[%c0_83, %c0_84, %c0_85] : memref<8x8x128xf32, #tpu.memory_space<vmem>>, vector<8x8x128xf32>
    tpu.vector_store %arg18[%c0_83, %c0_84, %c0_85], %128 {strides = array<i32>} : memref<8x8x128xf32, #tpu.memory_space<vmem>>, vector<8x8x128xf32>,
    %c0_86 = arith.constant 0 : index
    %c0_87 = arith.constant 0 : index
    %c0_88 = arith.constant 0 : index
    %130 = vector.load %arg19[%c0_86, %c0_87, %c0_88] : memref<8x8x128xf32, #tpu.memory_space<vmem>>, vector<8x8x128xf32>
    tpu.vector_store %arg19[%c0_86, %c0_87, %c0_88], %116 {strides = array<i32>} : memref<8x8x128xf32, #tpu.memory_space<vmem>>, vector<8x8x128xf32>,
    %cst_89 = arith.constant 0.000000e+00 : f32
    %131 = vector.broadcast %cst_89 : f32 to vector<8x128xf32>
    %c0_i32_90 = arith.constant 0 : i32
    %132 = arith.index_cast %c0_i32_90 : i32 to index
    %c0_91 = arith.constant 0 : index
    %c0_92 = arith.constant 0 : index
    %133 = vector.load %arg17[%132, %c0_91, %c0_92] : memref<8x8x128xf32, #tpu.memory_space<vmem>>, vector<1x8x128xf32>
    %134 = vector.shape_cast %133 : vector<1x8x128xf32> to vector<8x128xf32>
    %135 = arith.mulf %134, %131 : vector<8x128xf32>
    %136 = arith.index_cast %c0_i32_90 : i32 to index
    %c0_93 = arith.constant 0 : index
    %c0_94 = arith.constant 0 : index
    %137 = vector.load %arg18[%136, %c0_93, %c0_94] : memref<8x8x128xf32, #tpu.memory_space<vmem>>, vector<1x8x128xf32>
    %138 = vector.shape_cast %137 : vector<1x8x128xf32> to vector<8x128xf32>
    %139 = arith.addf %135, %138 : vector<8x128xf32>
    %140 = arith.index_cast %c0_i32_90 : i32 to index
    %c0_95 = arith.constant 0 : index
    %c0_96 = arith.constant 0 : index
    %141 = vector.load %arg19[%140, %c0_95, %c0_96] : memref<8x8x128xf32, #tpu.memory_space<vmem>>, vector<1x8x128xf32>
    %142 = vector.shape_cast %141 : vector<1x8x128xf32> to vector<8x128xf32>
    %143 = arith.mulf %139, %142 : vector<8x128xf32>
    %cst_97 = arith.constant dense<0.000000e+00> : vector<128xf32>
    %144 = vector.multi_reduction <add>, %143, %cst_97 [0] : vector<8x128xf32> to vector<128xf32>
    %145 = vector.shape_cast %144 : vector<128xf32> to vector<1x128xf32>
    %146 = arith.index_cast %c0_i32_90 : i32 to index
    %c0_98 = arith.constant 0 : index
    %147 = vector.load %arg20[%146, %c0_98] : memref<8x128xf32, #tpu.memory_space<vmem>>, vector<1x128xf32>
    tpu.vector_store %arg20[%146, %c0_98], %145 {strides = array<i32>} : memref<8x128xf32, #tpu.memory_space<vmem>>, vector<1x128xf32>,
    %c1_i32 = arith.constant 1 : i32
    %148 = arith.index_cast %c1_i32 : i32 to index
    %c0_99 = arith.constant 0 : index
    %c0_100 = arith.constant 0 : index
    %149 = vector.load %arg17[%148, %c0_99, %c0_100] : memref<8x8x128xf32, #tpu.memory_space<vmem>>, vector<1x8x128xf32>
    %150 = vector.shape_cast %149 : vector<1x8x128xf32> to vector<8x128xf32>
    %151 = arith.mulf %150, %139 : vector<8x128xf32>
    %152 = arith.index_cast %c1_i32 : i32 to index
    %c0_101 = arith.constant 0 : index
    %c0_102 = arith.constant 0 : index
    %153 = vector.load %arg18[%152, %c0_101, %c0_102] : memref<8x8x128xf32, #tpu.memory_space<vmem>>, vector<1x8x128xf32>
    %154 = vector.shape_cast %153 : vector<1x8x128xf32> to vector<8x128xf32>
    %155 = arith.addf %151, %154 : vector<8x128xf32>
    %156 = arith.index_cast %c1_i32 : i32 to index
    %c0_103 = arith.constant 0 : index
    %c0_104 = arith.constant 0 : index
    %157 = vector.load %arg19[%156, %c0_103, %c0_104] : memref<8x8x128xf32, #tpu.memory_space<vmem>>, vector<1x8x128xf32>
    %158 = vector.shape_cast %157 : vector<1x8x128xf32> to vector<8x128xf32>
    %159 = arith.mulf %155, %158 : vector<8x128xf32>
    %cst_105 = arith.constant dense<0.000000e+00> : vector<128xf32>
    %160 = vector.multi_reduction <add>, %159, %cst_105 [0] : vector<8x128xf32> to vector<128xf32>
    %161 = vector.shape_cast %160 : vector<128xf32> to vector<1x128xf32>
    %162 = arith.index_cast %c1_i32 : i32 to index
    %c0_106 = arith.constant 0 : index
    %163 = vector.load %arg20[%162, %c0_106] : memref<8x128xf32, #tpu.memory_space<vmem>>, vector<1x128xf32>
    tpu.vector_store %arg20[%162, %c0_106], %161 {strides = array<i32>} : memref<8x128xf32, #tpu.memory_space<vmem>>, vector<1x128xf32>,
    %c2_i32 = arith.constant 2 : i32
    %164 = arith.index_cast %c2_i32 : i32 to index
    %c0_107 = arith.constant 0 : index
    %c0_108 = arith.constant 0 : index
    %165 = vector.load %arg17[%164, %c0_107, %c0_108] : memref<8x8x128xf32, #tpu.memory_space<vmem>>, vector<1x8x128xf32>
    %166 = vector.shape_cast %165 : vector<1x8x128xf32> to vector<8x128xf32>
    %167 = arith.mulf %166, %155 : vector<8x128xf32>
    %168 = arith.index_cast %c2_i32 : i32 to index
    %c0_109 = arith.constant 0 : index
    %c0_110 = arith.constant 0 : index
    %169 = vector.load %arg18[%168, %c0_109, %c0_110] : memref<8x8x128xf32, #tpu.memory_space<vmem>>, vector<1x8x128xf32>
    %170 = vector.shape_cast %169 : vector<1x8x128xf32> to vector<8x128xf32>
    %171 = arith.addf %167, %170 : vector<8x128xf32>
    %172 = arith.index_cast %c2_i32 : i32 to index
    %c0_111 = arith.constant 0 : index
    %c0_112 = arith.constant 0 : index
    %173 = vector.load %arg19[%172, %c0_111, %c0_112] : memref<8x8x128xf32, #tpu.memory_space<vmem>>, vector<1x8x128xf32>
    %174 = vector.shape_cast %173 : vector<1x8x128xf32> to vector<8x128xf32>
    %175 = arith.mulf %171, %174 : vector<8x128xf32>
    %cst_113 = arith.constant dense<0.000000e+00> : vector<128xf32>
    %176 = vector.multi_reduction <add>, %175, %cst_113 [0] : vector<8x128xf32> to vector<128xf32>
    %177 = vector.shape_cast %176 : vector<128xf32> to vector<1x128xf32>
    %178 = arith.index_cast %c2_i32 : i32 to index
    %c0_114 = arith.constant 0 : index
    %179 = vector.load %arg20[%178, %c0_114] : memref<8x128xf32, #tpu.memory_space<vmem>>, vector<1x128xf32>
    tpu.vector_store %arg20[%178, %c0_114], %177 {strides = array<i32>} : memref<8x128xf32, #tpu.memory_space<vmem>>, vector<1x128xf32>,
    %c3_i32 = arith.constant 3 : i32
    %180 = arith.index_cast %c3_i32 : i32 to index
    %c0_115 = arith.constant 0 : index
    %c0_116 = arith.constant 0 : index
    %181 = vector.load %arg17[%180, %c0_115, %c0_116] : memref<8x8x128xf32, #tpu.memory_space<vmem>>, vector<1x8x128xf32>
    %182 = vector.shape_cast %181 : vector<1x8x128xf32> to vector<8x128xf32>
    %183 = arith.mulf %182, %171 : vector<8x128xf32>
    %184 = arith.index_cast %c3_i32 : i32 to index
    %c0_117 = arith.constant 0 : index
    %c0_118 = arith.constant 0 : index
    %185 = vector.load %arg18[%184, %c0_117, %c0_118] : memref<8x8x128xf32, #tpu.memory_space<vmem>>, vector<1x8x128xf32>
    %186 = vector.shape_cast %185 : vector<1x8x128xf32> to vector<8x128xf32>
    %187 = arith.addf %183, %186 : vector<8x128xf32>
    %188 = arith.index_cast %c3_i32 : i32 to index
    %c0_119 = arith.constant 0 : index
    %c0_120 = arith.constant 0 : index
    %189 = vector.load %arg19[%188, %c0_119, %c0_120] : memref<8x8x128xf32, #tpu.memory_space<vmem>>, vector<1x8x128xf32>
    %190 = vector.shape_cast %189 : vector<1x8x128xf32> to vector<8x128xf32>
    %191 = arith.mulf %187, %190 : vector<8x128xf32>
    %cst_121 = arith.constant dense<0.000000e+00> : vector<128xf32>
    %192 = vector.multi_reduction <add>, %191, %cst_121 [0] : vector<8x128xf32> to vector<128xf32>
    %193 = vector.shape_cast %192 : vector<128xf32> to vector<1x128xf32>
    %194 = arith.index_cast %c3_i32 : i32 to index
    %c0_122 = arith.constant 0 : index
    %195 = vector.load %arg20[%194, %c0_122] : memref<8x128xf32, #tpu.memory_space<vmem>>, vector<1x128xf32>
    tpu.vector_store %arg20[%194, %c0_122], %193 {strides = array<i32>} : memref<8x128xf32, #tpu.memory_space<vmem>>, vector<1x128xf32>,
    %c4_i32 = arith.constant 4 : i32
    %196 = arith.index_cast %c4_i32 : i32 to index
    %c0_123 = arith.constant 0 : index
    %c0_124 = arith.constant 0 : index
    %197 = vector.load %arg17[%196, %c0_123, %c0_124] : memref<8x8x128xf32, #tpu.memory_space<vmem>>, vector<1x8x128xf32>
    %198 = vector.shape_cast %197 : vector<1x8x128xf32> to vector<8x128xf32>
    %199 = arith.mulf %198, %187 : vector<8x128xf32>
    %200 = arith.index_cast %c4_i32 : i32 to index
    %c0_125 = arith.constant 0 : index
    %c0_126 = arith.constant 0 : index
    %201 = vector.load %arg18[%200, %c0_125, %c0_126] : memref<8x8x128xf32, #tpu.memory_space<vmem>>, vector<1x8x128xf32>
    %202 = vector.shape_cast %201 : vector<1x8x128xf32> to vector<8x128xf32>
    %203 = arith.addf %199, %202 : vector<8x128xf32>
    %204 = arith.index_cast %c4_i32 : i32 to index
    %c0_127 = arith.constant 0 : index
    %c0_128 = arith.constant 0 : index
    %205 = vector.load %arg19[%204, %c0_127, %c0_128] : memref<8x8x128xf32, #tpu.memory_space<vmem>>, vector<1x8x128xf32>
    %206 = vector.shape_cast %205 : vector<1x8x128xf32> to vector<8x128xf32>
    %207 = arith.mulf %203, %206 : vector<8x128xf32>
    %cst_129 = arith.constant dense<0.000000e+00> : vector<128xf32>
    %208 = vector.multi_reduction <add>, %207, %cst_129 [0] : vector<8x128xf32> to vector<128xf32>
    %209 = vector.shape_cast %208 : vector<128xf32> to vector<1x128xf32>
    %210 = arith.index_cast %c4_i32 : i32 to index
    %c0_130 = arith.constant 0 : index
    %211 = vector.load %arg20[%210, %c0_130] : memref<8x128xf32, #tpu.memory_space<vmem>>, vector<1x128xf32>
    tpu.vector_store %arg20[%210, %c0_130], %209 {strides = array<i32>} : memref<8x128xf32, #tpu.memory_space<vmem>>, vector<1x128xf32>,
    %c5_i32 = arith.constant 5 : i32
    %212 = arith.index_cast %c5_i32 : i32 to index
    %c0_131 = arith.constant 0 : index
    %c0_132 = arith.constant 0 : index
    %213 = vector.load %arg17[%212, %c0_131, %c0_132] : memref<8x8x128xf32, #tpu.memory_space<vmem>>, vector<1x8x128xf32>
    %214 = vector.shape_cast %213 : vector<1x8x128xf32> to vector<8x128xf32>
    %215 = arith.mulf %214, %203 : vector<8x128xf32>
    %216 = arith.index_cast %c5_i32 : i32 to index
    %c0_133 = arith.constant 0 : index
    %c0_134 = arith.constant 0 : index
    %217 = vector.load %arg18[%216, %c0_133, %c0_134] : memref<8x8x128xf32, #tpu.memory_space<vmem>>, vector<1x8x128xf32>
    %218 = vector.shape_cast %217 : vector<1x8x128xf32> to vector<8x128xf32>
    %219 = arith.addf %215, %218 : vector<8x128xf32>
    %220 = arith.index_cast %c5_i32 : i32 to index
    %c0_135 = arith.constant 0 : index
    %c0_136 = arith.constant 0 : index
    %221 = vector.load %arg19[%220, %c0_135, %c0_136] : memref<8x8x128xf32, #tpu.memory_space<vmem>>, vector<1x8x128xf32>
    %222 = vector.shape_cast %221 : vector<1x8x128xf32> to vector<8x128xf32>
    %223 = arith.mulf %219, %222 : vector<8x128xf32>
    %cst_137 = arith.constant dense<0.000000e+00> : vector<128xf32>
    %224 = vector.multi_reduction <add>, %223, %cst_137 [0] : vector<8x128xf32> to vector<128xf32>
    %225 = vector.shape_cast %224 : vector<128xf32> to vector<1x128xf32>
    %226 = arith.index_cast %c5_i32 : i32 to index
    %c0_138 = arith.constant 0 : index
    %227 = vector.load %arg20[%226, %c0_138] : memref<8x128xf32, #tpu.memory_space<vmem>>, vector<1x128xf32>
    tpu.vector_store %arg20[%226, %c0_138], %225 {strides = array<i32>} : memref<8x128xf32, #tpu.memory_space<vmem>>, vector<1x128xf32>,
    %c6_i32 = arith.constant 6 : i32
    %228 = arith.index_cast %c6_i32 : i32 to index
    %c0_139 = arith.constant 0 : index
    %c0_140 = arith.constant 0 : index
    %229 = vector.load %arg17[%228, %c0_139, %c0_140] : memref<8x8x128xf32, #tpu.memory_space<vmem>>, vector<1x8x128xf32>
    %230 = vector.shape_cast %229 : vector<1x8x128xf32> to vector<8x128xf32>
    %231 = arith.mulf %230, %219 : vector<8x128xf32>
    %232 = arith.index_cast %c6_i32 : i32 to index
    %c0_141 = arith.constant 0 : index
    %c0_142 = arith.constant 0 : index
    %233 = vector.load %arg18[%232, %c0_141, %c0_142] : memref<8x8x128xf32, #tpu.memory_space<vmem>>, vector<1x8x128xf32>
    %234 = vector.shape_cast %233 : vector<1x8x128xf32> to vector<8x128xf32>
    %235 = arith.addf %231, %234 : vector<8x128xf32>
    %236 = arith.index_cast %c6_i32 : i32 to index
    %c0_143 = arith.constant 0 : index
    %c0_144 = arith.constant 0 : index
    %237 = vector.load %arg19[%236, %c0_143, %c0_144] : memref<8x8x128xf32, #tpu.memory_space<vmem>>, vector<1x8x128xf32>
    %238 = vector.shape_cast %237 : vector<1x8x128xf32> to vector<8x128xf32>
    %239 = arith.mulf %235, %238 : vector<8x128xf32>
    %cst_145 = arith.constant dense<0.000000e+00> : vector<128xf32>
    %240 = vector.multi_reduction <add>, %239, %cst_145 [0] : vector<8x128xf32> to vector<128xf32>
    %241 = vector.shape_cast %240 : vector<128xf32> to vector<1x128xf32>
    %242 = arith.index_cast %c6_i32 : i32 to index
    %c0_146 = arith.constant 0 : index
    %243 = vector.load %arg20[%242, %c0_146] : memref<8x128xf32, #tpu.memory_space<vmem>>, vector<1x128xf32>
    tpu.vector_store %arg20[%242, %c0_146], %241 {strides = array<i32>} : memref<8x128xf32, #tpu.memory_space<vmem>>, vector<1x128xf32>,
    %c7_i32 = arith.constant 7 : i32
    %244 = arith.index_cast %c7_i32 : i32 to index
    %c0_147 = arith.constant 0 : index
    %c0_148 = arith.constant 0 : index
    %245 = vector.load %arg17[%244, %c0_147, %c0_148] : memref<8x8x128xf32, #tpu.memory_space<vmem>>, vector<1x8x128xf32>
    %246 = vector.shape_cast %245 : vector<1x8x128xf32> to vector<8x128xf32>
    %247 = arith.mulf %246, %235 : vector<8x128xf32>
    %248 = arith.index_cast %c7_i32 : i32 to index
    %c0_149 = arith.constant 0 : index
    %c0_150 = arith.constant 0 : index
    %249 = vector.load %arg18[%248, %c0_149, %c0_150] : memref<8x8x128xf32, #tpu.memory_space<vmem>>, vector<1x8x128xf32>
    %250 = vector.shape_cast %249 : vector<1x8x128xf32> to vector<8x128xf32>
    %251 = arith.addf %247, %250 : vector<8x128xf32>
    %252 = arith.index_cast %c7_i32 : i32 to index
    %c0_151 = arith.constant 0 : index
    %c0_152 = arith.constant 0 : index
    %253 = vector.load %arg19[%252, %c0_151, %c0_152] : memref<8x8x128xf32, #tpu.memory_space<vmem>>, vector<1x8x128xf32>
    %254 = vector.shape_cast %253 : vector<1x8x128xf32> to vector<8x128xf32>
    %255 = arith.mulf %251, %254 : vector<8x128xf32>
    %cst_153 = arith.constant dense<0.000000e+00> : vector<128xf32>
    %256 = vector.multi_reduction <add>, %255, %cst_153 [0] : vector<8x128xf32> to vector<128xf32>
    %257 = vector.shape_cast %256 : vector<128xf32> to vector<1x128xf32>
    %258 = arith.index_cast %c7_i32 : i32 to index
    %c0_154 = arith.constant 0 : index
    %259 = vector.load %arg20[%258, %c0_154] : memref<8x128xf32, #tpu.memory_space<vmem>>, vector<1x128xf32>
    tpu.vector_store %arg20[%258, %c0_154], %257 {strides = array<i32>} : memref<8x128xf32, #tpu.memory_space<vmem>>, vector<1x128xf32>,
    %c8_i32 = arith.constant 8 : i32
    %c0_155 = arith.constant 0 : index
    %c0_156 = arith.constant 0 : index
    %260 = vector.load %arg20[%c0_155, %c0_156] : memref<8x128xf32, #tpu.memory_space<vmem>>, vector<8x128xf32>
    %c0_157 = arith.constant 0 : index
    %c0_158 = arith.constant 0 : index
    %c0_159 = arith.constant 0 : index
    %261 = vector.load %arg8[%c0_157, %c0_158, %c0_159] : memref<1x1x128xf32, #tpu.memory_space<vmem>>, vector<1x1x128xf32>
    %262 = vector.shape_cast %261 : vector<1x1x128xf32> to vector<1x128xf32>
    %263 = vector.broadcast %262 : vector<1x128xf32> to vector<8x128xf32>
    %264 = arith.mulf %45, %263 : vector<8x128xf32>
    %265 = arith.addf %260, %264 : vector<8x128xf32>
    %cst_160 = arith.constant 0.000000e+00 : f32
    %266 = vector.broadcast %cst_160 : f32 to vector<8x128xf32>
    %267 = arith.subf %266, %8 : vector<8x128xf32>
    %268 = math.exp %267 : vector<8x128xf32>
    %cst_161 = arith.constant 1.000000e+00 : f32
    %269 = vector.broadcast %cst_161 : f32 to vector<8x128xf32>
    %270 = arith.addf %269, %268 : vector<8x128xf32>
    %cst_162 = arith.constant 1.000000e+00 : f32
    %271 = vector.broadcast %cst_162 : f32 to vector<8x128xf32>
    %272 = arith.divf %271, %270 : vector<8x128xf32>
    %273 = arith.mulf %8, %272 : vector<8x128xf32>
    %274 = arith.mulf %265, %273 : vector<8x128xf32>
    %c0_163 = arith.constant 0 : index
    %c0_164 = arith.constant 0 : index
    %c0_165 = arith.constant 0 : index
    %275 = vector.load %arg9[%c0_163, %c0_164, %c0_165] : memref<1x128x64xf32, #tpu.memory_space<vmem>>, vector<1x128x64xf32>
    %276 = vector.shape_cast %275 : vector<1x128x64xf32> to vector<128x64xf32>
    %cst_166 = arith.constant dense<0.000000e+00> : vector<8x64xf32>
    %277 = tpu.matmul %274, %276, %cst_166 {dimension_numbers = #tpu.dot_dimension_numbers<[1], [0], [0], [1], [0, 0, 1, 1], [], []>} : vector<8x128xf32>, vector<128x64xf32>, vector<8x64xf32> -> vector<8x64xf32>
    %c0_167 = arith.constant 0 : index
    %c0_168 = arith.constant 0 : index
    %278 = vector.load %arg15[%c0_167, %c0_168] : memref<8x64xf32, #tpu.memory_space<vmem>>, vector<8x64xf32>
    tpu.vector_store %arg15[%c0_167, %c0_168], %277 {strides = array<i32>} : memref<8x64xf32, #tpu.memory_space<vmem>>, vector<8x64xf32>,
    %c1_i32_169 = arith.constant 1 : i32
    %279 = arith.cmpi eq, %arg0, %c1_i32_169 : i32
    %280 = arith.extui %279 : i1 to i32
    %c0_i32_170 = arith.constant 0 : i32
    %281 = arith.cmpi ne, %280, %c0_i32_170 : i32
    scf.if %281 {
      %282 = vector.extract_strided_slice %277 {offsets = [0, 0], sizes = [8, 32], strides = [1, 1]} : vector<8x64xf32> to vector<8x32xf32>
      %283 = vector.extract_strided_slice %277 {offsets = [0, 32], sizes = [8, 32], strides = [1, 1]} : vector<8x64xf32> to vector<8x32xf32>
      %284 = tpu.concatenate %282, %283 in 0 : vector<8x32xf32>, vector<8x32xf32> -> vector<16x32xf32>
      %cst_171 = arith.constant dense<0.000000e+00> : vector<16xf32>
      %285 = vector.multi_reduction <add>, %284, %cst_171 [1] : vector<16x32xf32> to vector<16xf32>
      %286 = vector.shape_cast %285 : vector<16xf32> to vector<16x1xf32>
      %cst_172 = arith.constant 3.200000e+01 : f32
      %287 = vector.broadcast %cst_172 : f32 to vector<16x1xf32>
      %288 = arith.divf %286, %287 : vector<16x1xf32>
      %289 = vector.broadcast %288 : vector<16x1xf32> to vector<16x32xf32>
      %290 = arith.subf %284, %289 : vector<16x32xf32>
      %291 = arith.mulf %290, %290 : vector<16x32xf32>
      %cst_173 = arith.constant dense<0.000000e+00> : vector<16xf32>
      %292 = vector.multi_reduction <add>, %291, %cst_173 [1] : vector<16x32xf32> to vector<16xf32>
      %293 = vector.shape_cast %292 : vector<16xf32> to vector<16x1xf32>
      %cst_174 = arith.constant 3.200000e+01 : f32
      %294 = vector.broadcast %cst_174 : f32 to vector<16x1xf32>
      %295 = arith.divf %293, %294 : vector<16x1xf32>
      %cst_175 = arith.constant 9.99999974E-6 : f32
      %296 = vector.broadcast %cst_175 : f32 to vector<16x1xf32>
      %297 = arith.addf %295, %296 : vector<16x1xf32>
      %298 = math.rsqrt %297 : vector<16x1xf32>
      %299 = vector.broadcast %298 : vector<16x1xf32> to vector<16x32xf32>
      %300 = arith.mulf %290, %299 : vector<16x32xf32>
      %c0_176 = arith.constant 0 : index
      %c0_177 = arith.constant 0 : index
      %301 = vector.load %arg11[%c0_176, %c0_177] : memref<1x32xf32, #tpu.memory_space<vmem>>, vector<1x32xf32>
      %302 = vector.broadcast %301 : vector<1x32xf32> to vector<16x32xf32>
      %303 = arith.mulf %300, %302 : vector<16x32xf32>
      %c0_178 = arith.constant 0 : index
      %c0_179 = arith.constant 0 : index
      %304 = vector.load %arg12[%c0_178, %c0_179] : memref<1x32xf32, #tpu.memory_space<vmem>>, vector<1x32xf32>
      %305 = vector.broadcast %304 : vector<1x32xf32> to vector<16x32xf32>
      %306 = arith.addf %303, %305 : vector<16x32xf32>
      %c0_180 = arith.constant 0 : index
      %c0_181 = arith.constant 0 : index
      %307 = vector.load %arg13[%c0_180, %c0_181] : memref<32x256xf32, #tpu.memory_space<vmem>>, vector<32x256xf32>
      %cst_182 = arith.constant dense<0.000000e+00> : vector<16x256xf32>
      %308 = tpu.matmul %306, %307, %cst_182 {dimension_numbers = #tpu.dot_dimension_numbers<[1], [0], [0], [1], [0, 0, 1, 1], [], []>} : vector<16x32xf32>, vector<32x256xf32>, vector<16x256xf32> -> vector<16x256xf32>
      %c0_183 = arith.constant 0 : index
      %c0_184 = arith.constant 0 : index
      %309 = vector.load %arg14[%c0_183, %c0_184] : memref<16x256xf32, #tpu.memory_space<vmem>>, vector<16x256xf32>
      tpu.vector_store %arg14[%c0_183, %c0_184], %308 {strides = array<i32>} : memref<16x256xf32, #tpu.memory_space<vmem>>, vector<16x256xf32>,
    } else {
    }
    return
  }
  func.func @transform_0(%arg0: i32) -> (i32, i32) {
    %c0_i32 = arith.constant 0 : i32
    %c0_i32_0 = arith.constant 0 : i32
    %c0_i32_1 = arith.constant 0 : i32
    return %c0_i32, %c0_i32_0 : i32, i32
  }
  func.func @transform_1(%arg0: i32) -> (i32, i32, i32) {
    %c0_i32 = arith.constant 0 : i32
    %c0_i32_0 = arith.constant 0 : i32
    %c0_i32_1 = arith.constant 0 : i32
    return %arg0, %c0_i32, %c0_i32_0 : i32, i32, i32
  }
  func.func @transform_2(%arg0: i32) -> (i32, i32, i32) {
    %c0_i32 = arith.constant 0 : i32
    %c0_i32_0 = arith.constant 0 : i32
    %c0_i32_1 = arith.constant 0 : i32
    return %arg0, %c0_i32, %c0_i32_0 : i32, i32, i32
  }
  func.func @transform_3(%arg0: i32) -> (i32, i32, i32) {
    %c0_i32 = arith.constant 0 : i32
    %c0_i32_0 = arith.constant 0 : i32
    %c0_i32_1 = arith.constant 0 : i32
    return %arg0, %c0_i32, %c0_i32_0 : i32, i32, i32
  }
  func.func @transform_4(%arg0: i32) -> (i32, i32, i32) {
    %c0_i32 = arith.constant 0 : i32
    %c0_i32_0 = arith.constant 0 : i32
    %c0_i32_1 = arith.constant 0 : i32
    return %arg0, %c0_i32, %c0_i32_0 : i32, i32, i32
  }
  func.func @transform_5(%arg0: i32) -> (i32, i32, i32) {
    %c0_i32 = arith.constant 0 : i32
    %c0_i32_0 = arith.constant 0 : i32
    %c0_i32_1 = arith.constant 0 : i32
    return %arg0, %c0_i32, %c0_i32_0 : i32, i32, i32
  }
  func.func @transform_6(%arg0: i32) -> (i32, i32, i32) {
    %c0_i32 = arith.constant 0 : i32
    %c0_i32_0 = arith.constant 0 : i32
    %c0_i32_1 = arith.constant 0 : i32
    return %arg0, %c0_i32, %c0_i32_0 : i32, i32, i32
  }
  func.func @transform_7(%arg0: i32) -> (i32, i32, i32) {
    %c0_i32 = arith.constant 0 : i32
    %c0_i32_0 = arith.constant 0 : i32
    %c0_i32_1 = arith.constant 0 : i32
    return %arg0, %c0_i32, %c0_i32_0 : i32, i32, i32
  }
  func.func @transform_8(%arg0: i32) -> (i32, i32, i32) {
    %c0_i32 = arith.constant 0 : i32
    %c0_i32_0 = arith.constant 0 : i32
    %c0_i32_1 = arith.constant 0 : i32
    return %arg0, %c0_i32, %c0_i32_0 : i32, i32, i32
  }
  func.func @transform_9(%arg0: i32) -> (i32, i32, i32) {
    %c0_i32 = arith.constant 0 : i32
    %c0_i32_0 = arith.constant 0 : i32
    %c0_i32_1 = arith.constant 0 : i32
    %c0_i32_2 = arith.constant 0 : i32
    return %c0_i32, %c0_i32_0, %c0_i32_1 : i32, i32, i32
  }
  func.func @transform_10(%arg0: i32) -> (i32, i32) {
    %c0_i32 = arith.constant 0 : i32
    %c0_i32_0 = arith.constant 0 : i32
    %c0_i32_1 = arith.constant 0 : i32
    return %c0_i32, %c0_i32_0 : i32, i32
  }
  func.func @transform_11(%arg0: i32) -> (i32, i32) {
    %c0_i32 = arith.constant 0 : i32
    %c0_i32_0 = arith.constant 0 : i32
    %c0_i32_1 = arith.constant 0 : i32
    return %c0_i32, %c0_i32_0 : i32, i32
  }
  func.func @transform_12(%arg0: i32) -> (i32, i32) {
    %c0_i32 = arith.constant 0 : i32
    %c0_i32_0 = arith.constant 0 : i32
    %c0_i32_1 = arith.constant 0 : i32
    return %c0_i32, %c0_i32_0 : i32, i32
  }
  func.func @transform_13(%arg0: i32) -> (i32, i32) {
    %c0_i32 = arith.constant 0 : i32
    %c0_i32_0 = arith.constant 0 : i32
    %c0_i32_1 = arith.constant 0 : i32
    return %c0_i32, %c0_i32_0 : i32, i32
  }
}

</mosaic_0001>

<llo_original>
// kernel: model_forward.1
$region0: #{model_forward.1}
  #allocation0 [shape = 'u32[]', space=smem, size = 0x4, offset = 0x4, fixed_abs, tag = 'smem constant byte address 0x4 - core index']
  #allocation1 [shape = 'u32[144,128]{1,0:T(1,128)}', space=vmem, size = 0x12000, scoped, tag = 'internal scratch']
  #allocation2 [shape = 'f32[8,64]{1,0:T(8,128)}', space=vmem, size = 0x1000, scoped, tag = 'scratch operand']
  #allocation3 [shape = 'f32[11,128]{1,0:T(8,128)}', space=vmem, size = 0x2000, scoped, tag = 'scratch operand']
  #allocation4 [shape = 'f32[8,8,128]{2,1,0:T(8,128)}', space=vmem, size = 0x8000, scoped, tag = 'scratch operand']
  #allocation5 [shape = 'f32[8,8,128]{2,1,0:T(8,128)}', space=vmem, size = 0x8000, scoped, tag = 'scratch operand']
  #allocation6 [shape = 'f32[8,8,128]{2,1,0:T(8,128)}', space=vmem, size = 0x8000, scoped, tag = 'scratch operand']
  #allocation7 [shape = 'f32[8,128]{1,0:T(8,128)}', space=vmem, size = 0x1000, scoped, tag = 'scratch operand']
  %s0 = inlined_call_operand.vmem [shape: f32[8,64], index: 0, kind: input, shape index: {}]
  %s1 = inlined_call_operand.vmem [shape: f32[2,64,256], index: 1, kind: input, shape index: {}]
  %s2 = inlined_call_operand.vmem [shape: f32[2,4,128], index: 2, kind: input, shape index: {}]
  %s3 = inlined_call_operand.vmem [shape: f32[2,1,128], index: 3, kind: input, shape index: {}]
  %s4 = inlined_call_operand.vmem [shape: f32[2,128,160], index: 4, kind: input, shape index: {}]
  %s5 = inlined_call_operand.vmem [shape: f32[2,1,128], index: 5, kind: input, shape index: {}]
  %s6 = inlined_call_operand.vmem [shape: f32[2,8,128], index: 6, kind: input, shape index: {}]
  %s7 = inlined_call_operand.vmem [shape: f32[2,1,128], index: 7, kind: input, shape index: {}]
  %s8 = inlined_call_operand.vmem [shape: f32[2,128,64], index: 8, kind: input, shape index: {}]
  %s9 = inlined_call_operand.vmem [shape: f32[8,16,128], index: 9, kind: input, shape index: {}]
  %s10 = inlined_call_operand.vmem [shape: f32[1,32], index: 10, kind: input, shape index: {}]
  %s11 = inlined_call_operand.vmem [shape: f32[1,32], index: 11, kind: input, shape index: {}]
  %s12 = inlined_call_operand.vmem [shape: f32[32,256], index: 12, kind: input, shape index: {}]
  %s13 = inlined_call_operand.hbm [shape: f32[16,256], index: 13, kind: output, shape index: {}]
  %s14 = sld [smem:[#allocation0]]
  $region93: #{model_forward.1} parent=0
    _
  %s16 = ssub.s32 1, %s14
  %s17 = scalar_select 0, %s16, %s14
  $region1: #{model_forward.1} parent=0
    #allocation8 [shape = 'u8[16384]{0}', space=vmem, size = 0x4000, scoped, tag = 'output window, operand 0, single buffered']
    #allocation9 [shape = 's32[2]{0}', space=sflag, size = 0x8, scoped, tag = 'scoped memory for model_forward.1']
    %18 = vsyncpa [#allocation9], 0
    loop: start=0, step=1, limit=4
    $region2: #{model_forward.1} parent=1 // loop_pre_header
      _
    $region3: #{model_forward.1} parent=1 // loop_header
      %s20 = sphi 0, %s24
      %p21 = scmp.ge.s32.totalorder %s20, 4
      %s28 = sphi 0, %s28
      %s30 = sphi 0, %s28
      %s31 = sphi 0, %s30
      %s45 = sphi 0, %s31
      %s51 = sphi 0, %s53
      %s54 = sphi 0, %s51
      %s55 = sphi 0, %s54
      %s71 = sphi 0, %s55
      %s77 = sphi 0, %s79
      %s80 = sphi 0, %s77
      %s81 = sphi 0, %s80
      %s97 = sphi 0, %s81
      %s103 = sphi 0, %s105
      %s106 = sphi 0, %s103
      %s107 = sphi 0, %s106
      %s123 = sphi 0, %s107
      %s129 = sphi 0, %s131
      %s132 = sphi 0, %s129
      %s133 = sphi 0, %s132
      %s149 = sphi 0, %s133
      %s155 = sphi 0, %s157
      %s158 = sphi 0, %s155
      %s159 = sphi 0, %s158
      %s175 = sphi 0, %s159
      %s181 = sphi 0, %s183
      %s184 = sphi 0, %s181
      %s185 = sphi 0, %s184
      %s201 = sphi 0, %s185
      %s207 = sphi 0, %s209
      %s210 = sphi 0, %s207
      %s211 = sphi 0, %s210
      %s227 = sphi 0, %s211
      %s233 = sphi 0, %s235
      %s236 = sphi 0, %s233
      %s237 = sphi 0, %s236
      %s253 = sphi 0, %s237
      %s257 = sphi 0, %s257
      %s259 = sphi 0, %s257
      %s260 = sphi 0, %s259
      %s274 = sphi 0, %s260
      %s278 = sphi 0, %s278
      %s280 = sphi 0, %s278
      %s281 = sphi 0, %s280
      %s295 = sphi 0, %s281
      %s299 = sphi 0, %s299
      %s301 = sphi 0, %s299
      %s302 = sphi 0, %s301
      %s316 = sphi 0, %s302
      %s320 = sphi 0, %s320
      %s322 = sphi 0, %s320
      %s323 = sphi 0, %s322
      %s337 = sphi 0, %s323
      %s341 = sphi 0, %s341
      %s343 = sphi 0, %s341
      %s344 = sphi 0, %s343
      %s358 = sphi 0, %s344
    $region4: #{model_forward.1} parent=1 // loop_header_branch
      %23 = sbr.rel (%p21) target = $region8
    $region5: #{model_forward.1} parent=1 // loop_body
      %s25 = ssub.s32 %s20, 1
      %s26 = ssub.s32 %s20, 2
      %s27 = sadd.s32 %s20, 1
      %s29 = sadd.s32 %s28, 1
      %p32 = scmp.eq.s32.totalorder %s20, 1
      %p33 = scmp.ne.s32.totalorder %s28, %s30
      %p34 = scmp.eq.s32.totalorder %s20, 0
      %p35 = por %p33, %p34
      %p36 = scmp.ne.s32.totalorder %s28, %s30
      %p37 = scmp.eq.s32.totalorder %s25, 1
      %p38 = por %p36, %p37
      %p39 = scmp.ne.s32.totalorder %s30, %s31
      %p40 = scmp.eq.s32.totalorder %s25, 0
      %p41 = por %p39, %p40
      %p42 = scmp.ne.s32.totalorder %s30, %s31
      %p43 = scmp.eq.s32.totalorder %s26, 1
      %p44 = por %p42, %p43
      %p46 = scmp.ne.s32.totalorder %s31, %s45
      %p47 = scmp.eq.s32.totalorder %s26, 0
      %p48 = por %p46, %p47
      %s49 = ssub.s32 %s20, %s27
      %p50 = scmp.eq.s32.totalorder %s49, 0
      %s52 = sadd.s32 %s51, 1
      %s53 = scalar_select %p50, %s51, %s52
      %p56 = pneg %p50
      %p57 = scmp.eq.s32.totalorder %s20, 1
      %p58 = por %p56, %p57
      %p59 = scmp.ne.s32.totalorder %s51, %s54
      %p60 = scmp.eq.s32.totalorder %s20, 0
      %p61 = por %p59, %p60
      %p62 = scmp.ne.s32.totalorder %s51, %s54
      %p63 = scmp.eq.s32.totalorder %s25, 1
      %p64 = por %p62, %p63
      %p65 = scmp.ne.s32.totalorder %s54, %s55
      %p66 = scmp.eq.s32.totalorder %s25, 0
      %p67 = por %p65, %p66
      %p68 = scmp.ne.s32.totalorder %s54, %s55
      %p69 = scmp.eq.s32.totalorder %s26, 1
      %p70 = por %p68, %p69
      %p72 = scmp.ne.s32.totalorder %s55, %s71
      %p73 = scmp.eq.s32.totalorder %s26, 0
      %p74 = por %p72, %p73
      %s75 = ssub.s32 %s20, %s27
      %p76 = scmp.eq.s32.totalorder %s75, 0
      %s78 = sadd.s32 %s77, 1
      %s79 = scalar_select %p76, %s77, %s78
      %p82 = pneg %p76
      %p83 = scmp.eq.s32.totalorder %s20, 1
      %p84 = por %p82, %p83
      %p85 = scmp.ne.s32.totalorder %s77, %s80
      %p86 = scmp.eq.s32.totalorder %s20, 0
      %p87 = por %p85, %p86
      %p88 = scmp.ne.s32.totalorder %s77, %s80
      %p89 = scmp.eq.s32.totalorder %s25, 1
      %p90 = por %p88, %p89
      %p91 = scmp.ne.s32.totalorder %s80, %s81
      %p92 = scmp.eq.s32.totalorder %s25, 0
      %p93 = por %p91, %p92
      %p94 = scmp.ne.s32.totalorder %s80, %s81
      %p95 = scmp.eq.s32.totalorder %s26, 1
      %p96 = por %p94, %p95
      %p98 = scmp.ne.s32.totalorder %s81, %s97
      %p99 = scmp.eq.s32.totalorder %s26, 0
      %p100 = por %p98, %p99
      %s101 = ssub.s32 %s20, %s27
      %p102 = scmp.eq.s32.totalorder %s101, 0
      %s104 = sadd.s32 %s103, 1
      %s105 = scalar_select %p102, %s103, %s104
      %p108 = pneg %p102
      %p109 = scmp.eq.s32.totalorder %s20, 1
      %p110 = por %p108, %p109
      %p111 = scmp.ne.s32.totalorder %s103, %s106
      %p112 = scmp.eq.s32.totalorder %s20, 0
      %p113 = por %p111, %p112
      %p114 = scmp.ne.s32.totalorder %s103, %s106
      %p115 = scmp.eq.s32.totalorder %s25, 1
      %p116 = por %p114, %p115
      %p117 = scmp.ne.s32.totalorder %s106, %s107
      %p118 = scmp.eq.s32.totalorder %s25, 0
      %p119 = por %p117, %p118
      %p120 = scmp.ne.s32.totalorder %s106, %s107
      %p121 = scmp.eq.s32.totalorder %s26, 1
      %p122 = por %p120, %p121
      %p124 = scmp.ne.s32.totalorder %s107, %s123
      %p125 = scmp.eq.s32.totalorder %s26, 0
      %p126 = por %p124, %p125
      %s127 = ssub.s32 %s20, %s27
      %p128 = scmp.eq.s32.totalorder %s127, 0
      %s130 = sadd.s32 %s129, 1
      %s131 = scalar_select %p128, %s129, %s130
      %p134 = pneg %p128
      %p135 = scmp.eq.s32.totalorder %s20, 1
      %p136 = por %p134, %p135
      %p137 = scmp.ne.s32.totalorder %s129, %s132
      %p138 = scmp.eq.s32.totalorder %s20, 0
      %p139 = por %p137, %p138
      %p140 = scmp.ne.s32.totalorder %s129, %s132
      %p141 = scmp.eq.s32.totalorder %s25, 1
      %p142 = por %p140, %p141
      %p143 = scmp.ne.s32.totalorder %s132, %s133
      %p144 = scmp.eq.s32.totalorder %s25, 0
      %p145 = por %p143, %p144
      %p146 = scmp.ne.s32.totalorder %s132, %s133
      %p147 = scmp.eq.s32.totalorder %s26, 1
      %p148 = por %p146, %p147
      %p150 = scmp.ne.s32.totalorder %s133, %s149
      %p151 = scmp.eq.s32.totalorder %s26, 0
      %p152 = por %p150, %p151
      %s153 = ssub.s32 %s20, %s27
      %p154 = scmp.eq.s32.totalorder %s153, 0
      %s156 = sadd.s32 %s155, 1
      %s157 = scalar_select %p154, %s155, %s156
      %p160 = pneg %p154
      %p161 = scmp.eq.s32.totalorder %s20, 1
      %p162 = por %p160, %p161
      %p163 = scmp.ne.s32.totalorder %s155, %s158
      %p164 = scmp.eq.s32.totalorder %s20, 0
      %p165 = por %p163, %p164
      %p166 = scmp.ne.s32.totalorder %s155, %s158
      %p167 = scmp.eq.s32.totalorder %s25, 1
      %p168 = por %p166, %p167
      %p169 = scmp.ne.s32.totalorder %s158, %s159
      %p170 = scmp.eq.s32.totalorder %s25, 0
      %p171 = por %p169, %p170
      %p172 = scmp.ne.s32.totalorder %s158, %s159
      %p173 = scmp.eq.s32.totalorder %s26, 1
      %p174 = por %p172, %p173
      %p176 = scmp.ne.s32.totalorder %s159, %s175
      %p177 = scmp.eq.s32.totalorder %s26, 0
      %p178 = por %p176, %p177
      %s179 = ssub.s32 %s20, %s27
      %p180 = scmp.eq.s32.totalorder %s179, 0
      %s182 = sadd.s32 %s181, 1
      %s183 = scalar_select %p180, %s181, %s182
      %p186 = pneg %p180
      %p187 = scmp.eq.s32.totalorder %s20, 1
      %p188 = por %p186, %p187
      %p189 = scmp.ne.s32.totalorder %s181, %s184
      %p190 = scmp.eq.s32.totalorder %s20, 0
      %p191 = por %p189, %p190
      %p192 = scmp.ne.s32.totalorder %s181, %s184
      %p193 = scmp.eq.s32.totalorder %s25, 1
      %p194 = por %p192, %p193
      %p195 = scmp.ne.s32.totalorder %s184, %s185
      %p196 = scmp.eq.s32.totalorder %s25, 0
      %p197 = por %p195, %p196
      %p198 = scmp.ne.s32.totalorder %s184, %s185
      %p199 = scmp.eq.s32.totalorder %s26, 1
      %p200 = por %p198, %p199
      %p202 = scmp.ne.s32.totalorder %s185, %s201
      %p203 = scmp.eq.s32.totalorder %s26, 0
      %p204 = por %p202, %p203
      %s205 = ssub.s32 %s20, %s27
      %p206 = scmp.eq.s32.totalorder %s205, 0
      %s208 = sadd.s32 %s207, 1
      %s209 = scalar_select %p206, %s207, %s208
      %p212 = pneg %p206
      %p213 = scmp.eq.s32.totalorder %s20, 1
      %p214 = por %p212, %p213
      %p215 = scmp.ne.s32.totalorder %s207, %s210
      %p216 = scmp.eq.s32.totalorder %s20, 0
      %p217 = por %p215, %p216
      %p218 = scmp.ne.s32.totalorder %s207, %s210
      %p219 = scmp.eq.s32.totalorder %s25, 1
      %p220 = por %p218, %p219
      %p221 = scmp.ne.s32.totalorder %s210, %s211
      %p222 = scmp.eq.s32.totalorder %s25, 0
      %p223 = por %p221, %p222
      %p224 = scmp.ne.s32.totalorder %s210, %s211
      %p225 = scmp.eq.s32.totalorder %s26, 1
      %p226 = por %p224, %p225
      %p228 = scmp.ne.s32.totalorder %s211, %s227
      %p229 = scmp.eq.s32.totalorder %s26, 0
      %p230 = por %p228, %p229
      %s231 = ssub.s32 %s20, %s27
      %p232 = scmp.eq.s32.totalorder %s231, 0
      %s234 = sadd.s32 %s233, 1
      %s235 = scalar_select %p232, %s233, %s234
      %p238 = pneg %p232
      %p239 = scmp.eq.s32.totalorder %s20, 1
      %p240 = por %p238, %p239
      %p241 = scmp.ne.s32.totalorder %s233, %s236
      %p242 = scmp.eq.s32.totalorder %s20, 0
      %p243 = por %p241, %p242
      %p244 = scmp.ne.s32.totalorder %s233, %s236
      %p245 = scmp.eq.s32.totalorder %s25, 1
      %p246 = por %p244, %p245
      %p247 = scmp.ne.s32.totalorder %s236, %s237
      %p248 = scmp.eq.s32.totalorder %s25, 0
      %p249 = por %p247, %p248
      %p250 = scmp.ne.s32.totalorder %s236, %s237
      %p251 = scmp.eq.s32.totalorder %s26, 1
      %p252 = por %p250, %p251
      %p254 = scmp.ne.s32.totalorder %s237, %s253
      %p255 = scmp.eq.s32.totalorder %s26, 0
      %p256 = por %p254, %p255
      %s258 = sadd.s32 %s257, 1
      %p261 = scmp.eq.s32.totalorder %s20, 1
      %p262 = scmp.ne.s32.totalorder %s257, %s259
      %p263 = scmp.eq.s32.totalorder %s20, 0
      %p264 = por %p262, %p263
      %p265 = scmp.ne.s32.totalorder %s257, %s259
      %p266 = scmp.eq.s32.totalorder %s25, 1
      %p267 = por %p265, %p266
      %p268 = scmp.ne.s32.totalorder %s259, %s260
      %p269 = scmp.eq.s32.totalorder %s25, 0
      %p270 = por %p268, %p269
      %p271 = scmp.ne.s32.totalorder %s259, %s260
      %p272 = scmp.eq.s32.totalorder %s26, 1
      %p273 = por %p271, %p272
      %p275 = scmp.ne.s32.totalorder %s260, %s274
      %p276 = scmp.eq.s32.totalorder %s26, 0
      %p277 = por %p275, %p276
      %s279 = sadd.s32 %s278, 1
      %p282 = scmp.eq.s32.totalorder %s20, 1
      %p283 = scmp.ne.s32.totalorder %s278, %s280
      %p284 = scmp.eq.s32.totalorder %s20, 0
      %p285 = por %p283, %p284
      %p286 = scmp.ne.s32.totalorder %s278, %s280
      %p287 = scmp.eq.s32.totalorder %s25, 1
      %p288 = por %p286, %p287
      %p289 = scmp.ne.s32.totalorder %s280, %s281
      %p290 = scmp.eq.s32.totalorder %s25, 0
      %p291 = por %p289, %p290
      %p292 = scmp.ne.s32.totalorder %s280, %s281
      %p293 = scmp.eq.s32.totalorder %s26, 1
      %p294 = por %p292, %p293
      %p296 = scmp.ne.s32.totalorder %s281, %s295
      %p297 = scmp.eq.s32.totalorder %s26, 0
      %p298 = por %p296, %p297
      %s300 = sadd.s32 %s299, 1
      %p303 = scmp.eq.s32.totalorder %s20, 1
      %p304 = scmp.ne.s32.totalorder %s299, %s301
      %p305 = scmp.eq.s32.totalorder %s20, 0
      %p306 = por %p304, %p305
      %p307 = scmp.ne.s32.totalorder %s299, %s301
      %p308 = scmp.eq.s32.totalorder %s25, 1
      %p309 = por %p307, %p308
      %p310 = scmp.ne.s32.totalorder %s301, %s302
      %p311 = scmp.eq.s32.totalorder %s25, 0
      %p312 = por %p310, %p311
      %p313 = scmp.ne.s32.totalorder %s301, %s302
      %p314 = scmp.eq.s32.totalorder %s26, 1
      %p315 = por %p313, %p314
      %p317 = scmp.ne.s32.totalorder %s302, %s316
      %p318 = scmp.eq.s32.totalorder %s26, 0
      %p319 = por %p317, %p318
      %s321 = sadd.s32 %s320, 1
      %p324 = scmp.eq.s32.totalorder %s20, 1
      %p325 = scmp.ne.s32.totalorder %s320, %s322
      %p326 = scmp.eq.s32.totalorder %s20, 0
      %p327 = por %p325, %p326
      %p328 = scmp.ne.s32.totalorder %s320, %s322
      %p329 = scmp.eq.s32.totalorder %s25, 1
      %p330 = por %p328, %p329
      %p331 = scmp.ne.s32.totalorder %s322, %s323
      %p332 = scmp.eq.s32.totalorder %s25, 0
      %p333 = por %p331, %p332
      %p334 = scmp.ne.s32.totalorder %s322, %s323
      %p335 = scmp.eq.s32.totalorder %s26, 1
      %p336 = por %p334, %p335
      %p338 = scmp.ne.s32.totalorder %s323, %s337
      %p339 = scmp.eq.s32.totalorder %s26, 0
      %p340 = por %p338, %p339
      %s342 = sadd.s32 %s341, 1
      %p345 = scmp.eq.s32.totalorder %s20, 1
      %p346 = scmp.ne.s32.totalorder %s341, %s343
      %p347 = scmp.eq.s32.totalorder %s20, 0
      %p348 = por %p346, %p347
      %p349 = scmp.ne.s32.totalorder %s341, %s343
      %p350 = scmp.eq.s32.totalorder %s25, 1
      %p351 = por %p349, %p350
      %p352 = scmp.ne.s32.totalorder %s343, %s344
      %p353 = scmp.eq.s32.totalorder %s25, 0
      %p354 = por %p352, %p353
      %p355 = scmp.ne.s32.totalorder %s343, %s344
      %p356 = scmp.eq.s32.totalorder %s26, 1
      %p357 = por %p355, %p356
      %p359 = scmp.ne.s32.totalorder %s344, %s358
      %p360 = scmp.eq.s32.totalorder %s26, 0
      %p361 = por %p359, %p360
      %p362 = scmp.le.s32.totalorder 1, %s20
      %p363 = scmp.lt.s32.totalorder %s20, 3
      %p364 = pnand %p362, %p363
      %p365 = pneg %p364
      // Predicated region
      $region9: #{model_forward.1} parent=5 // pred_check
        _
      $region10: #{model_forward.1} parent=5 // pred_check_branch
        %367 = sbr.rel (%p364) target = $region12
      $region11: #{model_forward.1} parent=5 // pred_region
        %s368 = ssub.s32 %s20, 1
        // Predicated region
        $region13: #{model_forward.1} parent=11 // pred_check
          %p369 = pneg %p41
        $region14: #{model_forward.1} parent=11 // pred_check_branch
          %371 = sbr.rel (%p369) target = $region16
        $region15: #{model_forward.1} parent=11 // pred_region
          _
        $region16: #{model_forward.1} parent=11 // pred_fallthru
          _
        // Predicated region
        $region17: #{model_forward.1} parent=11 // pred_check
          %p372 = pneg %p270
        $region18: #{model_forward.1} parent=11 // pred_check_branch
          %374 = sbr.rel (%p372) target = $region20
        $region19: #{model_forward.1} parent=11 // pred_region
          _
        $region20: #{model_forward.1} parent=11 // pred_fallthru
          _
        // Predicated region
        $region21: #{model_forward.1} parent=11 // pred_check
          %p375 = pneg %p291
        $region22: #{model_forward.1} parent=11 // pred_check_branch
          %377 = sbr.rel (%p375) target = $region24
        $region23: #{model_forward.1} parent=11 // pred_region
          _
        $region24: #{model_forward.1} parent=11 // pred_fallthru
          _
        // Predicated region
        $region25: #{model_forward.1} parent=11 // pred_check
          %p378 = pneg %p312
        $region26: #{model_forward.1} parent=11 // pred_check_branch
          %380 = sbr.rel (%p378) target = $region28
        $region27: #{model_forward.1} parent=11 // pred_region
          _
        $region28: #{model_forward.1} parent=11 // pred_fallthru
          _
        // Predicated region
        $region29: #{model_forward.1} parent=11 // pred_check
          %p381 = pneg %p333
        $region30: #{model_forward.1} parent=11 // pred_check_branch
          %383 = sbr.rel (%p381) target = $region32
        $region31: #{model_forward.1} parent=11 // pred_region
          _
        $region32: #{model_forward.1} parent=11 // pred_fallthru
          _
      $region12: #{model_forward.1} parent=5 // pred_fallthru
        _
      %p384 = scmp.lt.s32.totalorder %s20, 2
      // Predicated region
      $region33: #{model_forward.1} parent=5 // pred_check
        %p385 = pneg %p384
      $region34: #{model_forward.1} parent=5 // pred_check_branch
        %387 = sbr.rel (%p385) target = $region36
      $region35: #{model_forward.1} parent=5 // pred_region
        // Predicated region
        $region37: #{model_forward.1} parent=35 // pred_check
          %p388 = pneg %p61
        $region38: #{model_forward.1} parent=35 // pred_check_branch
          %390 = sbr.rel (%p388) target = $region40
        $region39: #{model_forward.1} parent=35 // pred_region
          %p391 = scmp.lt.s32.totalorder %s20, 1
          %s392 = scalar_select %p391, %s20, 1
          %s393 = smul.addr %s392, 16
          %s394 = smul.addr %s393, 8
          %s395 = scalar_lea.vmem %s1, %s394
        $region40: #{model_forward.1} parent=35 // pred_fallthru
          _
        // Predicated region
        $region41: #{model_forward.1} parent=35 // pred_check
          %p396 = pneg %p87
        $region42: #{model_forward.1} parent=35 // pred_check_branch
          %398 = sbr.rel (%p396) target = $region44
        $region43: #{model_forward.1} parent=35 // pred_region
          %p399 = scmp.lt.s32.totalorder %s20, 1
          %s400 = scalar_select %p399, %s20, 1
          %s401 = smul.addr %s400, 4
          %s402 = scalar_lea.vmem %s2, %s401
        $region44: #{model_forward.1} parent=35 // pred_fallthru
          _
        // Predicated region
        $region45: #{model_forward.1} parent=35 // pred_check
          %p403 = pneg %p113
        $region46: #{model_forward.1} parent=35 // pred_check_branch
          %405 = sbr.rel (%p403) target = $region48
        $region47: #{model_forward.1} parent=35 // pred_region
          %p406 = scmp.lt.s32.totalorder %s20, 1
          %s407 = scalar_select %p406, %s20, 1
          %s408 = scalar_lea.vmem %s3, %s407
        $region48: #{model_forward.1} parent=35 // pred_fallthru
          _
        // Predicated region
        $region49: #{model_forward.1} parent=35 // pred_check
          %p409 = pneg %p139
        $region50: #{model_forward.1} parent=35 // pred_check_branch
          %411 = sbr.rel (%p409) target = $region52
        $region51: #{model_forward.1} parent=35 // pred_region
          %p412 = scmp.lt.s32.totalorder %s20, 1
          %s413 = scalar_select %p412, %s20, 1
          %s414 = smul.addr %s413, 32
          %s415 = smul.addr %s414, 8
          %s416 = scalar_lea.vmem %s4, %s415
        $region52: #{model_forward.1} parent=35 // pred_fallthru
          _
        // Predicated region
        $region53: #{model_forward.1} parent=35 // pred_check
          %p417 = pneg %p165
        $region54: #{model_forward.1} parent=35 // pred_check_branch
          %419 = sbr.rel (%p417) target = $region56
        $region55: #{model_forward.1} parent=35 // pred_region
          %p420 = scmp.lt.s32.totalorder %s20, 1
          %s421 = scalar_select %p420, %s20, 1
          %s422 = scalar_lea.vmem %s5, %s421
        $region56: #{model_forward.1} parent=35 // pred_fallthru
          _
        // Predicated region
        $region57: #{model_forward.1} parent=35 // pred_check
          %p423 = pneg %p191
        $region58: #{model_forward.1} parent=35 // pred_check_branch
          %425 = sbr.rel (%p423) target = $region60
        $region59: #{model_forward.1} parent=35 // pred_region
          %p426 = scmp.lt.s32.totalorder %s20, 1
          %s427 = scalar_select %p426, %s20, 1
          %s428 = smul.addr %s427, 8
          %s429 = scalar_lea.vmem %s6, %s428
        $region60: #{model_forward.1} parent=35 // pred_fallthru
          _
        // Predicated region
        $region61: #{model_forward.1} parent=35 // pred_check
          %p430 = pneg %p217
        $region62: #{model_forward.1} parent=35 // pred_check_branch
          %432 = sbr.rel (%p430) target = $region64
        $region63: #{model_forward.1} parent=35 // pred_region
          %p433 = scmp.lt.s32.totalorder %s20, 1
          %s434 = scalar_select %p433, %s20, 1
          %s435 = scalar_lea.vmem %s7, %s434
        $region64: #{model_forward.1} parent=35 // pred_fallthru
          _
        // Predicated region
        $region65: #{model_forward.1} parent=35 // pred_check
          %p436 = pneg %p243
        $region66: #{model_forward.1} parent=35 // pred_check_branch
          %438 = sbr.rel (%p436) target = $region68
        $region67: #{model_forward.1} parent=35 // pred_region
          %p439 = scmp.lt.s32.totalorder %s20, 1
          %s440 = scalar_select %p439, %s20, 1
          %s441 = smul.addr %s440, 16
          %s442 = smul.addr %s441, 8
          %s443 = scalar_lea.vmem %s8, %s442
        $region68: #{model_forward.1} parent=35 // pred_fallthru
          _
      $region36: #{model_forward.1} parent=5 // pred_fallthru
        _
      %p444 = scmp.le.s32.totalorder 1, %s20
      %p445 = scmp.lt.s32.totalorder %s20, 3
      %p446 = pnand %p444, %p445
      %p447 = pneg %p446
      // Predicated region
      $region69: #{model_forward.1} parent=5 // pred_check
        _
      $region70: #{model_forward.1} parent=5 // pred_check_branch
        %449 = sbr.rel (%p446) target = $region72
      $region71: #{model_forward.1} parent=5 // pred_region
        %s450 = ssub.s32 %s20, 1
        %p451 = pneg %p41
        %p452 = pneg %p38
        %p453 = scmp.lt.s32.totalorder %s25, 1
        %s454 = scalar_select %p453, %s25, 1
        %s455 = smul.addr %s454, 16
        %s456 = smul.addr %s455, 8
        %s457 = scalar_lea.vmem %s1, %s456
        %p458 = pneg %p67
        %p459 = pneg %p64
        %p460 = scmp.lt.s32.totalorder %s25, 1
        %s461 = scalar_select %p460, %s25, 1
        %s462 = smul.addr %s461, 4
        %s463 = scalar_lea.vmem %s2, %s462
        %p464 = pneg %p93
        %p465 = pneg %p90
        %p466 = scmp.lt.s32.totalorder %s25, 1
        %s467 = scalar_select %p466, %s25, 1
        %s468 = scalar_lea.vmem %s3, %s467
        %p469 = pneg %p119
        %p470 = pneg %p116
        %p471 = scmp.lt.s32.totalorder %s25, 1
        %s472 = scalar_select %p471, %s25, 1
        %s473 = smul.addr %s472, 32
        %s474 = smul.addr %s473, 8
        %s475 = scalar_lea.vmem %s4, %s474
        %p476 = pneg %p145
        %p477 = pneg %p142
        %p478 = scmp.lt.s32.totalorder %s25, 1
        %s479 = scalar_select %p478, %s25, 1
        %s480 = scalar_lea.vmem %s5, %s479
        %p481 = pneg %p171
        %p482 = pneg %p168
        %p483 = scmp.lt.s32.totalorder %s25, 1
        %s484 = scalar_select %p483, %s25, 1
        %s485 = smul.addr %s484, 8
        %s486 = scalar_lea.vmem %s6, %s485
        %p487 = pneg %p197
        %p488 = pneg %p194
        %p489 = scmp.lt.s32.totalorder %s25, 1
        %s490 = scalar_select %p489, %s25, 1
        %s491 = scalar_lea.vmem %s7, %s490
        %p492 = pneg %p223
        %p493 = pneg %p220
        %p494 = scmp.lt.s32.totalorder %s25, 1
        %s495 = scalar_select %p494, %s25, 1
        %s496 = smul.addr %s495, 16
        %s497 = smul.addr %s496, 8
        %s498 = scalar_lea.vmem %s8, %s497
        %p499 = pneg %p249
        %p500 = pneg %p246
        %p501 = pneg %p270
        %p502 = pneg %p267
        %p503 = pneg %p291
        %p504 = pneg %p288
        %p505 = pneg %p312
        %p506 = pneg %p309
        %p507 = pneg %p333
        %p508 = pneg %p330
        %p509 = pneg %p354
        %p510 = pneg %p351
        %p511 = scmp.lt.s32.totalorder %s25, 1
        %s512 = scalar_select %p511, %s25, 1
        %s513 = smul.addr %s512, 16
        %s514 = smul.addr %s513, 8
        %s515 = scalar_lea.vmem %s1, %s514
        %p516 = scmp.lt.s32.totalorder %s25, 1
        %s517 = scalar_select %p516, %s25, 1
        %s518 = smul.addr %s517, 4
        %s519 = scalar_lea.vmem %s2, %s518
        %p520 = scmp.lt.s32.totalorder %s25, 1
        %s521 = scalar_select %p520, %s25, 1
        %s522 = scalar_lea.vmem %s3, %s521
        %p523 = scmp.lt.s32.totalorder %s25, 1
        %s524 = scalar_select %p523, %s25, 1
        %s525 = smul.addr %s524, 32
        %s526 = smul.addr %s525, 8
        %s527 = scalar_lea.vmem %s4, %s526
        %p528 = scmp.lt.s32.totalorder %s25, 1
        %s529 = scalar_select %p528, %s25, 1
        %s530 = scalar_lea.vmem %s5, %s529
        %p531 = scmp.lt.s32.totalorder %s25, 1
        %s532 = scalar_select %p531, %s25, 1
        %s533 = smul.addr %s532, 8
        %s534 = scalar_lea.vmem %s6, %s533
        %p535 = scmp.lt.s32.totalorder %s25, 1
        %s536 = scalar_select %p535, %s25, 1
        %s537 = scalar_lea.vmem %s7, %s536
        %p538 = scmp.lt.s32.totalorder %s25, 1
        %s539 = scalar_select %p538, %s25, 1
        %s540 = smul.addr %s539, 16
        %s541 = smul.addr %s540, 8
        %s542 = scalar_lea.vmem %s8, %s541
        %p543 = scmp.eq.s32.totalorder %s25, 0
        // Predicated region
        $region73: #{model_forward.1} parent=71 // pred_check
          %p544 = pneg %p543
        $region74: #{model_forward.1} parent=71 // pred_check_branch
          %546 = sbr.rel (%p544) target = $region76
        $region75: #{model_forward.1} parent=71 // pred_region
          %v547 = vld [vmem:[%s0] sm:$0xff]
          %vm548 = vcmask 523264
          %549 = vst.msk [vmem:[#allocation2] sm:$0xff] %vm548, %v547
        $region76: #{model_forward.1} parent=71 // pred_fallthru
          _
        %v550 = vld [vmem:[#allocation2] sm:$0xff]
        %v551 = vld [vmem:[%s515] sm:$0xff]
        %v552 = vld [vmem:[%s515 + $0x8] sm:$0xff]
        %v553 = vld [vmem:[%s515 + $0x10] sm:$0xff]
        %v554 = vld [vmem:[%s515 + $0x18] sm:$0xff]
        %v555 = vld [vmem:[%s515 + $0x20] sm:$0xff]
        %v556 = vld [vmem:[%s515 + $0x28] sm:$0xff]
        %v557 = vld [vmem:[%s515 + $0x30] sm:$0xff]
        %v558 = vld [vmem:[%s515 + $0x38] sm:$0xff]
        %v559 = vld [vmem:[%s515 + $0x40] sm:$0xff]
        %v560 = vld [vmem:[%s515 + $0x48] sm:$0xff]
        %v561 = vld [vmem:[%s515 + $0x50] sm:$0xff]
        %v562 = vld [vmem:[%s515 + $0x58] sm:$0xff]
        %v563 = vld [vmem:[%s515 + $0x60] sm:$0xff]
        %v564 = vld [vmem:[%s515 + $0x68] sm:$0xff]
        %v565 = vld [vmem:[%s515 + $0x70] sm:$0xff]
        %v566 = vld [vmem:[%s515 + $0x78] sm:$0xff]
        %vm567 = vcmask 523264
        %v569 = vsel %vm567, %v550, 0
        %571 = vmatprep.subr.mxu0 0.0
        %572 = vmatpush1.msra.mxu0 0.0
        %573 = vmatprep.subr.mxu0 0.0
        %574 = vmatpush1.msra.mxu0 0.0
        %575 = vmatprep.subr.mxu0 0.0
        %576 = vmatpush1.msra.mxu0 0.0
        %577 = vmatprep.subr.mxu0 0.0
        %578 = vmatpush1.msra.mxu0 0.0
        %579 = vmatprep.subr.mxu0 0.0
        %580 = vmatpush1.msra.mxu0 0.0
        %581 = vmatprep.subr.mxu0 0.0
        %582 = vmatpush1.msra.mxu0 0.0
        %583 = vmatprep.subr.mxu0 0.0
        %584 = vmatpush1.msra.mxu0 0.0
        %585 = vmatprep.subr.mxu0 0.0
        %586 = vmatpush1.msra.mxu0 0.0
        %587 = vmatprep.subr.mxu0 %v566
        %588 = vmatpush1.msra.mxu0 %v565
        %589 = vmatprep.subr.mxu0 %v564
        %590 = vmatpush1.msra.mxu0 %v563
        %591 = vmatprep.subr.mxu0 %v562
        %592 = vmatpush1.msra.mxu0 %v561
        %593 = vmatprep.subr.mxu0 %v560
        %594 = vmatpush1.msra.mxu0 %v559
        %595 = vmatprep.subr.mxu0 %v558
        %596 = vmatpush1.msra.mxu0 %v557
        %597 = vmatprep.subr.mxu0 %v556
        %598 = vmatpush1.msra.mxu0 %v555
        %599 = vmatprep.subr.mxu0 %v554
        %600 = vmatpush1.msra.mxu0 %v553
        %601 = vmatprep.subr.mxu0 %v552
        %602 = vmatpush1.msra.mxu0 %v551
        %603 = vmatprep.subr.mxu0 0.0
        %604 = vmatpush2.msra.mxu0 0.0
        %605 = vmatprep.subr.mxu0 0.0
        %606 = vmatpush2.msra.mxu0 0.0
        %607 = vmatprep.subr.mxu0 0.0
        %608 = vmatpush2.msra.mxu0 0.0
        %609 = vmatprep.subr.mxu0 0.0
        %610 = vmatpush2.msra.mxu0 0.0
        %611 = vmatprep.subr.mxu0 0.0
        %612 = vmatpush2.msra.mxu0 0.0
        %613 = vmatprep.subr.mxu0 0.0
        %614 = vmatpush2.msra.mxu0 0.0
        %615 = vmatprep.subr.mxu0 0.0
        %616 = vmatpush2.msra.mxu0 0.0
        %617 = vmatprep.subr.mxu0 0.0
        %618 = vmatpush2.msra.mxu0 0.0
        %619 = vmatprep.subr.mxu0 0.0
        %620 = vmatpush2.msra.mxu0 0.0
        %621 = vmatprep.subr.mxu0 0.0
        %622 = vmatpush2.msra.mxu0 0.0
        %623 = vmatprep.subr.mxu0 0.0
        %624 = vmatpush2.msra.mxu0 0.0
        %625 = vmatprep.subr.mxu0 0.0
        %626 = vmatpush2.msra.mxu0 0.0
        %627 = vmatprep.subr.mxu0 0.0
        %628 = vmatpush2.msra.mxu0 0.0
        %629 = vmatprep.subr.mxu0 0.0
        %630 = vmatpush2.msra.mxu0 0.0
        %631 = vmatprep.subr.mxu0 0.0
        %632 = vmatpush2.msra.mxu0 0.0
        %633 = vmatprep.subr.mxu0 0.0
        %634 = vmatpush2.msra.mxu0 0.0
        %635 = vmatprep.mubr.f32.mxu0 0.0
        %636 = vmatmul.mubr.f32.gmra.mxu0 %v569
        %v637 = vpop.f32.mrf.mxu0
        %v638 = vadd.f32 0.0, %v637
        %v639 = vpop.f32.mrf.mxu0
        %v640 = vadd.f32 0.0, %v639
        %641 = vdwg.mxu0
        %642 = vst [vmem:[#allocation3] sm:$0x7] 0.0
        %643 = vst [vmem:[#allocation3 + $0x3] sm:$0xff] %v638
        %v644 = vld [vmem:[%s519] sm:$0x1]
        %v645 = vlaneseq
        %v646 = vshrl.u32 %v645, 7
        %v647 = vsub.s32 0, %v646
        %v648 = vrot.slane %v644, %v647
        %v649 = vmul.f32 %v638, %v648
        %v650 = vld [vmem:[#allocation3 + $0x2] sm:$0xff]
        %v651 = vld [vmem:[%s519 + $0x1] sm:$0x1]
        %v652 = vlaneseq
        %v653 = vshrl.u32 %v652, 7
        %v654 = vsub.s32 0, %v653
        %v655 = vrot.slane %v651, %v654
        %v656 = vmul.f32 %v650, %v655
        %v657 = vadd.f32 %v649, %v656
        %v658 = vld [vmem:[#allocation3 + $0x1] sm:$0xff]
        %v659 = vld [vmem:[%s519 + $0x2] sm:$0x1]
        %v660 = vlaneseq
        %v661 = vshrl.u32 %v660, 7
        %v662 = vsub.s32 0, %v661
        %v663 = vrot.slane %v659, %v662
        %v664 = vmul.f32 %v658, %v663
        %v665 = vadd.f32 %v657, %v664
        %v666 = vld [vmem:[#allocation3] sm:$0xff]
        %v667 = vld [vmem:[%s519 + $0x3] sm:$0x1]
        %v668 = vlaneseq
        %v669 = vshrl.u32 %v668, 7
        %v670 = vsub.s32 0, %v669
        %v671 = vrot.slane %v667, %v670
        %v672 = vmul.f32 %v666, %v671
        %v673 = vadd.f32 %v665, %v672
        %v674 = vld [vmem:[%s522] sm:$0x1]
        %v676 = vlaneseq
        %v677 = vshrl.u32 %v676, 7
        %v678 = vsub.s32 0, %v677
        %v679 = vrot.slane %v674, %v678
        %v681 = vadd.f32 %v673, %v679
        %v682 = vsub.f32 0.0, %v681
        %v683 = vmul.f32 %v682, 1.442695
        %v684 = vpow.pop %v683
        %v685 = vadd.f32 %v684, 1.0
        %v686 = vrcp.pop %v685
        %v687 = vmul.f32 1.0, %v686
        %v688 = vmul.f32 %v681, %v687
        %v689 = vld [vmem:[%s527] sm:$0xff]
        %v690 = vld [vmem:[%s527 + $0x8] sm:$0xff]
        %v691 = vld [vmem:[%s527 + $0x10] sm:$0xff]
        %v692 = vld [vmem:[%s527 + $0x18] sm:$0xff]
        %v693 = vld [vmem:[%s527 + $0x20] sm:$0xff]
        %v694 = vld [vmem:[%s527 + $0x28] sm:$0xff]
        %v695 = vld [vmem:[%s527 + $0x30] sm:$0xff]
        %v696 = vld [vmem:[%s527 + $0x38] sm:$0xff]
        %v697 = vld [vmem:[%s527 + $0x40] sm:$0xff]
        %v698 = vld [vmem:[%s527 + $0x48] sm:$0xff]
        %v699 = vld [vmem:[%s527 + $0x50] sm:$0xff]
        %v700 = vld [vmem:[%s527 + $0x58] sm:$0xff]
        %v701 = vld [vmem:[%s527 + $0x60] sm:$0xff]
        %v702 = vld [vmem:[%s527 + $0x68] sm:$0xff]
        %v703 = vld [vmem:[%s527 + $0x70] sm:$0xff]
        %v704 = vld [vmem:[%s527 + $0x78] sm:$0xff]
        %v705 = vld [vmem:[%s527 + $0x80] sm:$0xff]
        %v706 = vld [vmem:[%s527 + $0x88] sm:$0xff]
        %v707 = vld [vmem:[%s527 + $0x90] sm:$0xff]
        %v708 = vld [vmem:[%s527 + $0x98] sm:$0xff]
        %v709 = vld [vmem:[%s527 + $0xa0] sm:$0xff]
        %v710 = vld [vmem:[%s527 + $0xa8] sm:$0xff]
        %v711 = vld [vmem:[%s527 + $0xb0] sm:$0xff]
        %v712 = vld [vmem:[%s527 + $0xb8] sm:$0xff]
        %v713 = vld [vmem:[%s527 + $0xc0] sm:$0xff]
        %v714 = vld [vmem:[%s527 + $0xc8] sm:$0xff]
        %v715 = vld [vmem:[%s527 + $0xd0] sm:$0xff]
        %v716 = vld [vmem:[%s527 + $0xd8] sm:$0xff]
        %v717 = vld [vmem:[%s527 + $0xe0] sm:$0xff]
        %v718 = vld [vmem:[%s527 + $0xe8] sm:$0xff]
        %v719 = vld [vmem:[%s527 + $0xf0] sm:$0xff]
        %v720 = vld [vmem:[%s527 + $0xf8] sm:$0xff]
        %721 = vmatprep.subr.mxu0 %v720
        %722 = vmatpush1.msra.mxu0 %v719
        %723 = vmatprep.subr.mxu0 %v718
        %724 = vmatpush1.msra.mxu0 %v717
        %725 = vmatprep.subr.mxu0 %v716
        %726 = vmatpush1.msra.mxu0 %v715
        %727 = vmatprep.subr.mxu0 %v714
        %728 = vmatpush1.msra.mxu0 %v713
        %729 = vmatprep.subr.mxu0 %v712
        %730 = vmatpush1.msra.mxu0 %v711
        %731 = vmatprep.subr.mxu0 %v710
        %732 = vmatpush1.msra.mxu0 %v709
        %733 = vmatprep.subr.mxu0 %v708
        %734 = vmatpush1.msra.mxu0 %v707
        %735 = vmatprep.subr.mxu0 %v706
        %736 = vmatpush1.msra.mxu0 %v705
        %737 = vmatprep.subr.mxu0 %v704
        %738 = vmatpush1.msra.mxu0 %v703
        %739 = vmatprep.subr.mxu0 %v702
        %740 = vmatpush1.msra.mxu0 %v701
        %741 = vmatprep.subr.mxu0 %v700
        %742 = vmatpush1.msra.mxu0 %v699
        %743 = vmatprep.subr.mxu0 %v698
        %744 = vmatpush1.msra.mxu0 %v697
        %745 = vmatprep.subr.mxu0 %v696
        %746 = vmatpush1.msra.mxu0 %v695
        %747 = vmatprep.subr.mxu0 %v694
        %748 = vmatpush1.msra.mxu0 %v693
        %749 = vmatprep.subr.mxu0 %v692
        %750 = vmatpush1.msra.mxu0 %v691
        %751 = vmatprep.subr.mxu0 %v690
        %752 = vmatpush1.msra.mxu0 %v689
        %753 = vmatprep.subr.mxu0 0.0
        %754 = vmatpush2.msra.mxu0 0.0
        %755 = vmatprep.subr.mxu0 0.0
        %756 = vmatpush2.msra.mxu0 0.0
        %757 = vmatprep.subr.mxu0 0.0
        %758 = vmatpush2.msra.mxu0 0.0
        %759 = vmatprep.subr.mxu0 0.0
        %760 = vmatpush2.msra.mxu0 0.0
        %761 = vmatprep.subr.mxu0 0.0
        %762 = vmatpush2.msra.mxu0 0.0
        %763 = vmatprep.subr.mxu0 0.0
        %764 = vmatpush2.msra.mxu0 0.0
        %765 = vmatprep.subr.mxu0 0.0
        %766 = vmatpush2.msra.mxu0 0.0
        %767 = vmatprep.subr.mxu0 0.0
        %768 = vmatpush2.msra.mxu0 0.0
        %769 = vmatprep.subr.mxu0 0.0
        %770 = vmatpush2.msra.mxu0 0.0
        %771 = vmatprep.subr.mxu0 0.0
        %772 = vmatpush2.msra.mxu0 0.0
        %773 = vmatprep.subr.mxu0 0.0
        %774 = vmatpush2.msra.mxu0 0.0
        %775 = vmatprep.subr.mxu0 0.0
        %776 = vmatpush2.msra.mxu0 0.0
        %777 = vmatprep.subr.mxu0 0.0
        %778 = vmatpush2.msra.mxu0 0.0
        %779 = vmatprep.subr.mxu0 0.0
        %780 = vmatpush2.msra.mxu0 0.0
        %781 = vmatprep.subr.mxu0 0.0
        %782 = vmatpush2.msra.mxu0 0.0
        %783 = vmatprep.subr.mxu0 0.0
        %784 = vmatpush2.msra.mxu0 0.0
        %785 = vmatprep.mubr.f32.mxu0 0.0
        %786 = vmatmul.mubr.f32.gmra.mxu0 %v688
        %v787 = vpop.f32.mrf.mxu0
        %v788 = vadd.f32 0.0, %v787
        %v789 = vpop.f32.mrf.mxu0
        %v790 = vadd.f32 0.0, %v789
        %791 = vdwg.mxu0
        %v792 = vld [vmem:[%s530] sm:$0x1]
        %v794 = vlaneseq
        %v795 = vshrl.u32 %v794, 7
        %v796 = vsub.s32 0, %v795
        %v797 = vrot.slane %v792, %v796
        %v799 = vadd.f32 %v788, %v797
        %v800 = vmax.f32 %v799, 0.0
        %v801 = vand.u32 2147483647, %v799
        %v802 = vsub.f32 0.0, %v801
        %v803 = vmul.f32 %v802, 1.442695
        %v804 = vpow.pop %v803
        %v805 = vadd.f32 %v804, 1.0
        %v806 = vlog2.pop %v805
        %v807 = vmul.f32 %v806, 0.6931472
        %v808 = vadd.f32 %v800, %v807
        %v809 = vmul.f32 %v808, %v688
        %v810 = vld [vmem:[%s9] sm:$0xff]
        %v811 = vld [vmem:[%s9 + $0x8] sm:$0xff]
        %vm812 = vcmask 130048
        %v814 = vsel %vm812, %v790, 0
        %816 = vmatprep.subr.mxu0 0.0
        %817 = vmatpush1.msra.mxu0 0.0
        %818 = vmatprep.subr.mxu0 0.0
        %819 = vmatpush1.msra.mxu0 0.0
        %820 = vmatprep.subr.mxu0 0.0
        %821 = vmatpush1.msra.mxu0 0.0
        %822 = vmatprep.subr.mxu0 0.0
        %823 = vmatpush1.msra.mxu0 0.0
        %824 = vmatprep.subr.mxu0 0.0
        %825 = vmatpush1.msra.mxu0 0.0
        %826 = vmatprep.subr.mxu0 0.0
        %827 = vmatpush1.msra.mxu0 0.0
        %828 = vmatprep.subr.mxu0 0.0
        %829 = vmatpush1.msra.mxu0 0.0
        %830 = vmatprep.subr.mxu0 0.0
        %831 = vmatpush1.msra.mxu0 0.0
        %832 = vmatprep.subr.mxu0 0.0
        %833 = vmatpush1.msra.mxu0 0.0
        %834 = vmatprep.subr.mxu0 0.0
        %835 = vmatpush1.msra.mxu0 0.0
        %836 = vmatprep.subr.mxu0 0.0
        %837 = vmatpush1.msra.mxu0 0.0
        %838 = vmatprep.subr.mxu0 0.0
        %839 = vmatpush1.msra.mxu0 0.0
        %840 = vmatprep.subr.mxu0 0.0
        %841 = vmatpush1.msra.mxu0 0.0
        %842 = vmatprep.subr.mxu0 0.0
        %843 = vmatpush1.msra.mxu0 0.0
        %844 = vmatprep.subr.mxu0 0.0
        %845 = vmatpush1.msra.mxu0 %v811
        %846 = vmatprep.subr.mxu0 0.0
        %847 = vmatpush1.msra.mxu0 %v810
        %848 = vmatprep.subr.mxu0 0.0
        %849 = vmatpush2.msra.mxu0 0.0
        %850 = vmatprep.subr.mxu0 0.0
        %851 = vmatpush2.msra.mxu0 0.0
        %852 = vmatprep.subr.mxu0 0.0
        %853 = vmatpush2.msra.mxu0 0.0
        %854 = vmatprep.subr.mxu0 0.0
        %855 = vmatpush2.msra.mxu0 0.0
        %856 = vmatprep.subr.mxu0 0.0
        %857 = vmatpush2.msra.mxu0 0.0
        %858 = vmatprep.subr.mxu0 0.0
        %859 = vmatpush2.msra.mxu0 0.0
        %860 = vmatprep.subr.mxu0 0.0
        %861 = vmatpush2.msra.mxu0 0.0
        %862 = vmatprep.subr.mxu0 0.0
        %863 = vmatpush2.msra.mxu0 0.0
        %864 = vmatprep.subr.mxu0 0.0
        %865 = vmatpush2.msra.mxu0 0.0
        %866 = vmatprep.subr.mxu0 0.0
        %867 = vmatpush2.msra.mxu0 0.0
        %868 = vmatprep.subr.mxu0 0.0
        %869 = vmatpush2.msra.mxu0 0.0
        %870 = vmatprep.subr.mxu0 0.0
        %871 = vmatpush2.msra.mxu0 0.0
        %872 = vmatprep.subr.mxu0 0.0
        %873 = vmatpush2.msra.mxu0 0.0
        %874 = vmatprep.subr.mxu0 0.0
        %875 = vmatpush2.msra.mxu0 0.0
        %876 = vmatprep.subr.mxu0 0.0
        %877 = vmatpush2.msra.mxu0 0.0
        %878 = vmatprep.subr.mxu0 0.0
        %879 = vmatpush2.msra.mxu0 0.0
        %880 = vmatprep.mubr.f32.mxu0 0.0
        %881 = vmatmul.mubr.f32.gmra.mxu0 %v814
        %v882 = vpop.f32.mrf.mxu0
        %v883 = vadd.f32 0.0, %v882
        %v884 = vpop.f32.mrf.mxu0
        %885 = vdwg.mxu0
        %v887 = vcombine.high %v883, %v883
        %v889 = vunpack.c.l.s4 1966171168
        %v890 = vunpack.c.0.s8 %v889
        %v891 = vlaneseq
        %v892 = vshrl.u32 %v891, 7
        %v893 = vsub.s32 %v890, %v892
        %v894 = vrot.slane %v883, %v893
        %v896 = vunpack.c.l.s4 1966171168
        %v897 = vunpack.c.0.s8 %v896
        %v898 = vlaneseq
        %v899 = vshrl.u32 %v898, 7
        %v900 = vsub.s32 %v897, %v899
        %v901 = vrot.slane %v887, %v900
        %v902 = vcombine.high %v894, %v894
        %v903 = vcombine.high %v901, %v901
        %v905 = vunpack.c.l.s4 1966171168
        %v906 = vunpack.c.0.s8 %v905
        %v907 = vlaneseq
        %v908 = vshrl.u32 %v907, 7
        %v909 = vsub.s32 %v906, %v908
        %v910 = vrot.slane %v894, %v909
        %v912 = vunpack.c.l.s4 1966171168
        %v913 = vunpack.c.0.s8 %v912
        %v914 = vlaneseq
        %v915 = vshrl.u32 %v914, 7
        %v916 = vsub.s32 %v913, %v915
        %v917 = vrot.slane %v901, %v916
        %v919 = vunpack.c.l.s4 1966171168
        %v920 = vunpack.c.0.s8 %v919
        %v921 = vlaneseq
        %v922 = vshrl.u32 %v921, 7
        %v923 = vsub.s32 %v920, %v922
        %v924 = vrot.slane %v902, %v923
        %v926 = vunpack.c.l.s4 1966171168
        %v927 = vunpack.c.0.s8 %v926
        %v928 = vlaneseq
        %v929 = vshrl.u32 %v928, 7
        %v930 = vsub.s32 %v927, %v929
        %v931 = vrot.slane %v903, %v930
        %v932 = vcombine.high %v910, %v910
        %v933 = vcombine.high %v917, %v917
        %v934 = vcombine.high %v924, %v924
        %v935 = vcombine.high %v931, %v931
        %944 = vrot.lane.b32.xlu0 %v790, 112
        %v945 = vpop.permute.xlu0 %944
        %v946 = vsel %vm812, %v945, 0
        %948 = vmatprep.subr.mxu0 0.0
        %949 = vmatpush1.msra.mxu0 0.0
        %950 = vmatprep.subr.mxu0 0.0
        %951 = vmatpush1.msra.mxu0 0.0
        %952 = vmatprep.subr.mxu0 0.0
        %953 = vmatpush1.msra.mxu0 0.0
        %954 = vmatprep.subr.mxu0 0.0
        %955 = vmatpush1.msra.mxu0 0.0
        %956 = vmatprep.subr.mxu0 0.0
        %957 = vmatpush1.msra.mxu0 0.0
        %958 = vmatprep.subr.mxu0 0.0
        %959 = vmatpush1.msra.mxu0 0.0
        %960 = vmatprep.subr.mxu0 0.0
        %961 = vmatpush1.msra.mxu0 0.0
        %962 = vmatprep.subr.mxu0 0.0
        %963 = vmatpush1.msra.mxu0 0.0
        %964 = vmatprep.subr.mxu0 0.0
        %965 = vmatpush1.msra.mxu0 0.0
        %966 = vmatprep.subr.mxu0 0.0
        %967 = vmatpush1.msra.mxu0 0.0
        %968 = vmatprep.subr.mxu0 0.0
        %969 = vmatpush1.msra.mxu0 0.0
        %970 = vmatprep.subr.mxu0 0.0
        %971 = vmatpush1.msra.mxu0 0.0
        %972 = vmatprep.subr.mxu0 0.0
        %973 = vmatpush1.msra.mxu0 0.0
        %974 = vmatprep.subr.mxu0 0.0
        %975 = vmatpush1.msra.mxu0 0.0
        %976 = vmatprep.subr.mxu0 0.0
        %977 = vmatpush1.msra.mxu0 %v811
        %978 = vmatprep.subr.mxu0 0.0
        %979 = vmatpush1.msra.mxu0 %v810
        %980 = vmatprep.subr.mxu0 0.0
        %981 = vmatpush2.msra.mxu0 0.0
        %982 = vmatprep.subr.mxu0 0.0
        %983 = vmatpush2.msra.mxu0 0.0
        %984 = vmatprep.subr.mxu0 0.0
        %985 = vmatpush2.msra.mxu0 0.0
        %986 = vmatprep.subr.mxu0 0.0
        %987 = vmatpush2.msra.mxu0 0.0
        %988 = vmatprep.subr.mxu0 0.0
        %989 = vmatpush2.msra.mxu0 0.0
        %990 = vmatprep.subr.mxu0 0.0
        %991 = vmatpush2.msra.mxu0 0.0
        %992 = vmatprep.subr.mxu0 0.0
        %993 = vmatpush2.msra.mxu0 0.0
        %994 = vmatprep.subr.mxu0 0.0
        %995 = vmatpush2.msra.mxu0 0.0
        %996 = vmatprep.subr.mxu0 0.0
        %997 = vmatpush2.msra.mxu0 0.0
        %998 = vmatprep.subr.mxu0 0.0
        %999 = vmatpush2.msra.mxu0 0.0
        %1000 = vmatprep.subr.mxu0 0.0
        %1001 = vmatpush2.msra.mxu0 0.0
        %1002 = vmatprep.subr.mxu0 0.0
        %1003 = vmatpush2.msra.mxu0 0.0
        %1004 = vmatprep.subr.mxu0 0.0
        %1005 = vmatpush2.msra.mxu0 0.0
        %1006 = vmatprep.subr.mxu0 0.0
        %1007 = vmatpush2.msra.mxu0 0.0
        %1008 = vmatprep.subr.mxu0 0.0
        %1009 = vmatpush2.msra.mxu0 0.0
        %1010 = vmatprep.subr.mxu0 0.0
        %1011 = vmatpush2.msra.mxu0 0.0
        %1012 = vmatprep.mubr.f32.mxu0 0.0
        %1013 = vmatmul.mubr.f32.gmra.mxu0 %v946
        %v1014 = vpop.f32.mrf.mxu0
        %v1015 = vadd.f32 0.0, %v1014
        %v1016 = vpop.f32.mrf.mxu0
        %1017 = vdwg.mxu0
        %v1019 = vcombine.high %v1015, %v1015
        %v1021 = vunpack.c.l.s4 1966171168
        %v1022 = vunpack.c.0.s8 %v1021
        %v1023 = vlaneseq
        %v1024 = vshrl.u32 %v1023, 7
        %v1025 = vsub.s32 %v1022, %v1024
        %v1026 = vrot.slane %v1015, %v1025
        %v1028 = vunpack.c.l.s4 1966171168
        %v1029 = vunpack.c.0.s8 %v1028
        %v1030 = vlaneseq
        %v1031 = vshrl.u32 %v1030, 7
        %v1032 = vsub.s32 %v1029, %v1031
        %v1033 = vrot.slane %v1019, %v1032
        %v1034 = vcombine.high %v1026, %v1026
        %v1035 = vcombine.high %v1033, %v1033
        %v1037 = vunpack.c.l.s4 1966171168
        %v1038 = vunpack.c.0.s8 %v1037
        %v1039 = vlaneseq
        %v1040 = vshrl.u32 %v1039, 7
        %v1041 = vsub.s32 %v1038, %v1040
        %v1042 = vrot.slane %v1026, %v1041
        %v1044 = vunpack.c.l.s4 1966171168
        %v1045 = vunpack.c.0.s8 %v1044
        %v1046 = vlaneseq
        %v1047 = vshrl.u32 %v1046, 7
        %v1048 = vsub.s32 %v1045, %v1047
        %v1049 = vrot.slane %v1033, %v1048
        %v1051 = vunpack.c.l.s4 1966171168
        %v1052 = vunpack.c.0.s8 %v1051
        %v1053 = vlaneseq
        %v1054 = vshrl.u32 %v1053, 7
        %v1055 = vsub.s32 %v1052, %v1054
        %v1056 = vrot.slane %v1034, %v1055
        %v1058 = vunpack.c.l.s4 1966171168
        %v1059 = vunpack.c.0.s8 %v1058
        %v1060 = vlaneseq
        %v1061 = vshrl.u32 %v1060, 7
        %v1062 = vsub.s32 %v1059, %v1061
        %v1063 = vrot.slane %v1035, %v1062
        %v1064 = vcombine.high %v1042, %v1042
        %v1065 = vcombine.high %v1049, %v1049
        %v1066 = vcombine.high %v1056, %v1056
        %v1067 = vcombine.high %v1063, %v1063
        %s1076 = scalar_lea.vmem %s9, 16
        %v1077 = vld [vmem:[%s1076] sm:$0xff]
        %v1078 = vld [vmem:[%s1076 + $0x8] sm:$0xff]
        %1079 = vmatprep.subr.mxu0 0.0
        %1080 = vmatpush1.msra.mxu0 0.0
        %1081 = vmatprep.subr.mxu0 0.0
        %1082 = vmatpush1.msra.mxu0 0.0
        %1083 = vmatprep.subr.mxu0 0.0
        %1084 = vmatpush1.msra.mxu0 0.0
        %1085 = vmatprep.subr.mxu0 0.0
        %1086 = vmatpush1.msra.mxu0 0.0
        %1087 = vmatprep.subr.mxu0 0.0
        %1088 = vmatpush1.msra.mxu0 0.0
        %1089 = vmatprep.subr.mxu0 0.0
        %1090 = vmatpush1.msra.mxu0 0.0
        %1091 = vmatprep.subr.mxu0 0.0
        %1092 = vmatpush1.msra.mxu0 0.0
        %1093 = vmatprep.subr.mxu0 0.0
        %1094 = vmatpush1.msra.mxu0 0.0
        %1095 = vmatprep.subr.mxu0 0.0
        %1096 = vmatpush1.msra.mxu0 0.0
        %1097 = vmatprep.subr.mxu0 0.0
        %1098 = vmatpush1.msra.mxu0 0.0
        %1099 = vmatprep.subr.mxu0 0.0
        %1100 = vmatpush1.msra.mxu0 0.0
        %1101 = vmatprep.subr.mxu0 0.0
        %1102 = vmatpush1.msra.mxu0 0.0
        %1103 = vmatprep.subr.mxu0 0.0
        %1104 = vmatpush1.msra.mxu0 0.0
        %1105 = vmatprep.subr.mxu0 0.0
        %1106 = vmatpush1.msra.mxu0 0.0
        %1107 = vmatprep.subr.mxu0 0.0
        %1108 = vmatpush1.msra.mxu0 %v1078
        %1109 = vmatprep.subr.mxu0 0.0
        %1110 = vmatpush1.msra.mxu0 %v1077
        %1111 = vmatprep.subr.mxu0 0.0
        %1112 = vmatpush2.msra.mxu0 0.0
        %1113 = vmatprep.subr.mxu0 0.0
        %1114 = vmatpush2.msra.mxu0 0.0
        %1115 = vmatprep.subr.mxu0 0.0
        %1116 = vmatpush2.msra.mxu0 0.0
        %1117 = vmatprep.subr.mxu0 0.0
        %1118 = vmatpush2.msra.mxu0 0.0
        %1119 = vmatprep.subr.mxu0 0.0
        %1120 = vmatpush2.msra.mxu0 0.0
        %1121 = vmatprep.subr.mxu0 0.0
        %1122 = vmatpush2.msra.mxu0 0.0
        %1123 = vmatprep.subr.mxu0 0.0
        %1124 = vmatpush2.msra.mxu0 0.0
        %1125 = vmatprep.subr.mxu0 0.0
        %1126 = vmatpush2.msra.mxu0 0.0
        %1127 = vmatprep.subr.mxu0 0.0
        %1128 = vmatpush2.msra.mxu0 0.0
        %1129 = vmatprep.subr.mxu0 0.0
        %1130 = vmatpush2.msra.mxu0 0.0
        %1131 = vmatprep.subr.mxu0 0.0
        %1132 = vmatpush2.msra.mxu0 0.0
        %1133 = vmatprep.subr.mxu0 0.0
        %1134 = vmatpush2.msra.mxu0 0.0
        %1135 = vmatprep.subr.mxu0 0.0
        %1136 = vmatpush2.msra.mxu0 0.0
        %1137 = vmatprep.subr.mxu0 0.0
        %1138 = vmatpush2.msra.mxu0 0.0
        %1139 = vmatprep.subr.mxu0 0.0
        %1140 = vmatpush2.msra.mxu0 0.0
        %1141 = vmatprep.subr.mxu0 0.0
        %1142 = vmatpush2.msra.mxu0 0.0
        %1143 = vmatprep.mubr.f32.mxu0 0.0
        %1144 = vmatmul.mubr.f32.gmra.mxu0 %v814
        %v1145 = vpop.f32.mrf.mxu0
        %v1146 = vadd.f32 0.0, %v1145
        %v1147 = vpop.f32.mrf.mxu0
        %1148 = vdwg.mxu0
        %v1150 = vcombine.high %v1146, %v1146
        %v1152 = vunpack.c.l.s4 1966171168
        %v1153 = vunpack.c.0.s8 %v1152
        %v1154 = vlaneseq
        %v1155 = vshrl.u32 %v1154, 7
        %v1156 = vsub.s32 %v1153, %v1155
        %v1157 = vrot.slane %v1146, %v1156
        %v1159 = vunpack.c.l.s4 1966171168
        %v1160 = vunpack.c.0.s8 %v1159
        %v1161 = vlaneseq
        %v1162 = vshrl.u32 %v1161, 7
        %v1163 = vsub.s32 %v1160, %v1162
        %v1164 = vrot.slane %v1150, %v1163
        %v1165 = vcombine.high %v1157, %v1157
        %v1166 = vcombine.high %v1164, %v1164
        %v1168 = vunpack.c.l.s4 1966171168
        %v1169 = vunpack.c.0.s8 %v1168
        %v1170 = vlaneseq
        %v1171 = vshrl.u32 %v1170, 7
        %v1172 = vsub.s32 %v1169, %v1171
        %v1173 = vrot.slane %v1157, %v1172
        %v1175 = vunpack.c.l.s4 1966171168
        %v1176 = vunpack.c.0.s8 %v1175
        %v1177 = vlaneseq
        %v1178 = vshrl.u32 %v1177, 7
        %v1179 = vsub.s32 %v1176, %v1178
        %v1180 = vrot.slane %v1164, %v1179
        %v1182 = vunpack.c.l.s4 1966171168
        %v1183 = vunpack.c.0.s8 %v1182
        %v1184 = vlaneseq
        %v1185 = vshrl.u32 %v1184, 7
        %v1186 = vsub.s32 %v1183, %v1185
        %v1187 = vrot.slane %v1165, %v1186
        %v1189 = vunpack.c.l.s4 1966171168
        %v1190 = vunpack.c.0.s8 %v1189
        %v1191 = vlaneseq
        %v1192 = vshrl.u32 %v1191, 7
        %v1193 = vsub.s32 %v1190, %v1192
        %v1194 = vrot.slane %v1166, %v1193
        %v1195 = vcombine.high %v1173, %v1173
        %v1196 = vcombine.high %v1180, %v1180
        %v1197 = vcombine.high %v1187, %v1187
        %v1198 = vcombine.high %v1194, %v1194
        %1199 = vmatprep.subr.mxu0 0.0
        %1200 = vmatpush1.msra.mxu0 0.0
        %1201 = vmatprep.subr.mxu0 0.0
        %1202 = vmatpush1.msra.mxu0 0.0
        %1203 = vmatprep.subr.mxu0 0.0
        %1204 = vmatpush1.msra.mxu0 0.0
        %1205 = vmatprep.subr.mxu0 0.0
        %1206 = vmatpush1.msra.mxu0 0.0
        %1207 = vmatprep.subr.mxu0 0.0
        %1208 = vmatpush1.msra.mxu0 0.0
        %1209 = vmatprep.subr.mxu0 0.0
        %1210 = vmatpush1.msra.mxu0 0.0
        %1211 = vmatprep.subr.mxu0 0.0
        %1212 = vmatpush1.msra.mxu0 0.0
        %1213 = vmatprep.subr.mxu0 0.0
        %1214 = vmatpush1.msra.mxu0 0.0
        %1215 = vmatprep.subr.mxu0 0.0
        %1216 = vmatpush1.msra.mxu0 0.0
        %1217 = vmatprep.subr.mxu0 0.0
        %1218 = vmatpush1.msra.mxu0 0.0
        %1219 = vmatprep.subr.mxu0 0.0
        %1220 = vmatpush1.msra.mxu0 0.0
        %1221 = vmatprep.subr.mxu0 0.0
        %1222 = vmatpush1.msra.mxu0 0.0
        %1223 = vmatprep.subr.mxu0 0.0
        %1224 = vmatpush1.msra.mxu0 0.0
        %1225 = vmatprep.subr.mxu0 0.0
        %1226 = vmatpush1.msra.mxu0 0.0
        %1227 = vmatprep.subr.mxu0 0.0
        %1228 = vmatpush1.msra.mxu0 %v1078
        %1229 = vmatprep.subr.mxu0 0.0
        %1230 = vmatpush1.msra.mxu0 %v1077
        %1231 = vmatprep.subr.mxu0 0.0
        %1232 = vmatpush2.msra.mxu0 0.0
        %1233 = vmatprep.subr.mxu0 0.0
        %1234 = vmatpush2.msra.mxu0 0.0
        %1235 = vmatprep.subr.mxu0 0.0
        %1236 = vmatpush2.msra.mxu0 0.0
        %1237 = vmatprep.subr.mxu0 0.0
        %1238 = vmatpush2.msra.mxu0 0.0
        %1239 = vmatprep.subr.mxu0 0.0
        %1240 = vmatpush2.msra.mxu0 0.0
        %1241 = vmatprep.subr.mxu0 0.0
        %1242 = vmatpush2.msra.mxu0 0.0
        %1243 = vmatprep.subr.mxu0 0.0
        %1244 = vmatpush2.msra.mxu0 0.0
        %1245 = vmatprep.subr.mxu0 0.0
        %1246 = vmatpush2.msra.mxu0 0.0
        %1247 = vmatprep.subr.mxu0 0.0
        %1248 = vmatpush2.msra.mxu0 0.0
        %1249 = vmatprep.subr.mxu0 0.0
        %1250 = vmatpush2.msra.mxu0 0.0
        %1251 = vmatprep.subr.mxu0 0.0
        %1252 = vmatpush2.msra.mxu0 0.0
        %1253 = vmatprep.subr.mxu0 0.0
        %1254 = vmatpush2.msra.mxu0 0.0
        %1255 = vmatprep.subr.mxu0 0.0
        %1256 = vmatpush2.msra.mxu0 0.0
        %1257 = vmatprep.subr.mxu0 0.0
        %1258 = vmatpush2.msra.mxu0 0.0
        %1259 = vmatprep.subr.mxu0 0.0
        %1260 = vmatpush2.msra.mxu0 0.0
        %1261 = vmatprep.subr.mxu0 0.0
        %1262 = vmatpush2.msra.mxu0 0.0
        %1263 = vmatprep.mubr.f32.mxu0 0.0
        %1264 = vmatmul.mubr.f32.gmra.mxu0 %v946
        %v1265 = vpop.f32.mrf.mxu0
        %v1266 = vadd.f32 0.0, %v1265
        %v1267 = vpop.f32.mrf.mxu0
        %1268 = vdwg.mxu0
        %v1270 = vcombine.high %v1266, %v1266
        %v1272 = vunpack.c.l.s4 1966171168
        %v1273 = vunpack.c.0.s8 %v1272
        %v1274 = vlaneseq
        %v1275 = vshrl.u32 %v1274, 7
        %v1276 = vsub.s32 %v1273, %v1275
        %v1277 = vrot.slane %v1266, %v1276
        %v1279 = vunpack.c.l.s4 1966171168
        %v1280 = vunpack.c.0.s8 %v1279
        %v1281 = vlaneseq
        %v1282 = vshrl.u32 %v1281, 7
        %v1283 = vsub.s32 %v1280, %v1282
        %v1284 = vrot.slane %v1270, %v1283
        %v1285 = vcombine.high %v1277, %v1277
        %v1286 = vcombine.high %v1284, %v1284
        %v1288 = vunpack.c.l.s4 1966171168
        %v1289 = vunpack.c.0.s8 %v1288
        %v1290 = vlaneseq
        %v1291 = vshrl.u32 %v1290, 7
        %v1292 = vsub.s32 %v1289, %v1291
        %v1293 = vrot.slane %v1277, %v1292
        %v1295 = vunpack.c.l.s4 1966171168
        %v1296 = vunpack.c.0.s8 %v1295
        %v1297 = vlaneseq
        %v1298 = vshrl.u32 %v1297, 7
        %v1299 = vsub.s32 %v1296, %v1298
        %v1300 = vrot.slane %v1284, %v1299
        %v1302 = vunpack.c.l.s4 1966171168
        %v1303 = vunpack.c.0.s8 %v1302
        %v1304 = vlaneseq
        %v1305 = vshrl.u32 %v1304, 7
        %v1306 = vsub.s32 %v1303, %v1305
        %v1307 = vrot.slane %v1285, %v1306
        %v1309 = vunpack.c.l.s4 1966171168
        %v1310 = vunpack.c.0.s8 %v1309
        %v1311 = vlaneseq
        %v1312 = vshrl.u32 %v1311, 7
        %v1313 = vsub.s32 %v1310, %v1312
        %v1314 = vrot.slane %v1286, %v1313
        %v1315 = vcombine.high %v1293, %v1293
        %v1316 = vcombine.high %v1300, %v1300
        %v1317 = vcombine.high %v1307, %v1307
        %v1318 = vcombine.high %v1314, %v1314
        %s1319 = scalar_lea.vmem %s9, 32
        %v1320 = vld [vmem:[%s1319] sm:$0xff]
        %v1321 = vld [vmem:[%s1319 + $0x8] sm:$0xff]
        %1322 = vmatprep.subr.mxu0 0.0
        %1323 = vmatpush1.msra.mxu0 0.0
        %1324 = vmatprep.subr.mxu0 0.0
        %1325 = vmatpush1.msra.mxu0 0.0
        %1326 = vmatprep.subr.mxu0 0.0
        %1327 = vmatpush1.msra.mxu0 0.0
        %1328 = vmatprep.subr.mxu0 0.0
        %1329 = vmatpush1.msra.mxu0 0.0
        %1330 = vmatprep.subr.mxu0 0.0
        %1331 = vmatpush1.msra.mxu0 0.0
        %1332 = vmatprep.subr.mxu0 0.0
        %1333 = vmatpush1.msra.mxu0 0.0
        %1334 = vmatprep.subr.mxu0 0.0
        %1335 = vmatpush1.msra.mxu0 0.0
        %1336 = vmatprep.subr.mxu0 0.0
        %1337 = vmatpush1.msra.mxu0 0.0
        %1338 = vmatprep.subr.mxu0 0.0
        %1339 = vmatpush1.msra.mxu0 0.0
        %1340 = vmatprep.subr.mxu0 0.0
        %1341 = vmatpush1.msra.mxu0 0.0
        %1342 = vmatprep.subr.mxu0 0.0
        %1343 = vmatpush1.msra.mxu0 0.0
        %1344 = vmatprep.subr.mxu0 0.0
        %1345 = vmatpush1.msra.mxu0 0.0
        %1346 = vmatprep.subr.mxu0 0.0
        %1347 = vmatpush1.msra.mxu0 0.0
        %1348 = vmatprep.subr.mxu0 0.0
        %1349 = vmatpush1.msra.mxu0 0.0
        %1350 = vmatprep.subr.mxu0 0.0
        %1351 = vmatpush1.msra.mxu0 %v1321
        %1352 = vmatprep.subr.mxu0 0.0
        %1353 = vmatpush1.msra.mxu0 %v1320
        %1354 = vmatprep.subr.mxu0 0.0
        %1355 = vmatpush2.msra.mxu0 0.0
        %1356 = vmatprep.subr.mxu0 0.0
        %1357 = vmatpush2.msra.mxu0 0.0
        %1358 = vmatprep.subr.mxu0 0.0
        %1359 = vmatpush2.msra.mxu0 0.0
        %1360 = vmatprep.subr.mxu0 0.0
        %1361 = vmatpush2.msra.mxu0 0.0
        %1362 = vmatprep.subr.mxu0 0.0
        %1363 = vmatpush2.msra.mxu0 0.0
        %1364 = vmatprep.subr.mxu0 0.0
        %1365 = vmatpush2.msra.mxu0 0.0
        %1366 = vmatprep.subr.mxu0 0.0
        %1367 = vmatpush2.msra.mxu0 0.0
        %1368 = vmatprep.subr.mxu0 0.0
        %1369 = vmatpush2.msra.mxu0 0.0
        %1370 = vmatprep.subr.mxu0 0.0
        %1371 = vmatpush2.msra.mxu0 0.0
        %1372 = vmatprep.subr.mxu0 0.0
        %1373 = vmatpush2.msra.mxu0 0.0
        %1374 = vmatprep.subr.mxu0 0.0
        %1375 = vmatpush2.msra.mxu0 0.0
        %1376 = vmatprep.subr.mxu0 0.0
        %1377 = vmatpush2.msra.mxu0 0.0
        %1378 = vmatprep.subr.mxu0 0.0
        %1379 = vmatpush2.msra.mxu0 0.0
        %1380 = vmatprep.subr.mxu0 0.0
        %1381 = vmatpush2.msra.mxu0 0.0
        %1382 = vmatprep.subr.mxu0 0.0
        %1383 = vmatpush2.msra.mxu0 0.0
        %1384 = vmatprep.subr.mxu0 0.0
        %1385 = vmatpush2.msra.mxu0 0.0
        %1386 = vmatprep.mubr.f32.mxu0 0.0
        %1387 = vmatmul.mubr.f32.gmra.mxu0 %v814
        %v1388 = vpop.f32.mrf.mxu0
        %v1389 = vadd.f32 0.0, %v1388
        %v1390 = vpop.f32.mrf.mxu0
        %1391 = vdwg.mxu0
        %v1393 = vcombine.high %v1389, %v1389
        %v1395 = vunpack.c.l.s4 1966171168
        %v1396 = vunpack.c.0.s8 %v1395
        %v1397 = vlaneseq
        %v1398 = vshrl.u32 %v1397, 7
        %v1399 = vsub.s32 %v1396, %v1398
        %v1400 = vrot.slane %v1389, %v1399
        %v1402 = vunpack.c.l.s4 1966171168
        %v1403 = vunpack.c.0.s8 %v1402
        %v1404 = vlaneseq
        %v1405 = vshrl.u32 %v1404, 7
        %v1406 = vsub.s32 %v1403, %v1405
        %v1407 = vrot.slane %v1393, %v1406
        %v1408 = vcombine.high %v1400, %v1400
        %v1409 = vcombine.high %v1407, %v1407
        %v1411 = vunpack.c.l.s4 1966171168
        %v1412 = vunpack.c.0.s8 %v1411
        %v1413 = vlaneseq
        %v1414 = vshrl.u32 %v1413, 7
        %v1415 = vsub.s32 %v1412, %v1414
        %v1416 = vrot.slane %v1400, %v1415
        %v1418 = vunpack.c.l.s4 1966171168
        %v1419 = vunpack.c.0.s8 %v1418
        %v1420 = vlaneseq
        %v1421 = vshrl.u32 %v1420, 7
        %v1422 = vsub.s32 %v1419, %v1421
        %v1423 = vrot.slane %v1407, %v1422
        %v1425 = vunpack.c.l.s4 1966171168
        %v1426 = vunpack.c.0.s8 %v1425
        %v1427 = vlaneseq
        %v1428 = vshrl.u32 %v1427, 7
        %v1429 = vsub.s32 %v1426, %v1428
        %v1430 = vrot.slane %v1408, %v1429
        %v1432 = vunpack.c.l.s4 1966171168
        %v1433 = vunpack.c.0.s8 %v1432
        %v1434 = vlaneseq
        %v1435 = vshrl.u32 %v1434, 7
        %v1436 = vsub.s32 %v1433, %v1435
        %v1437 = vrot.slane %v1409, %v1436
        %v1438 = vcombine.high %v1416, %v1416
        %v1439 = vcombine.high %v1423, %v1423
        %v1440 = vcombine.high %v1430, %v1430
        %v1441 = vcombine.high %v1437, %v1437
        %1442 = vmatprep.subr.mxu0 0.0
        %1443 = vmatpush1.msra.mxu0 0.0
        %1444 = vmatprep.subr.mxu0 0.0
        %1445 = vmatpush1.msra.mxu0 0.0
        %1446 = vmatprep.subr.mxu0 0.0
        %1447 = vmatpush1.msra.mxu0 0.0
        %1448 = vmatprep.subr.mxu0 0.0
        %1449 = vmatpush1.msra.mxu0 0.0
        %1450 = vmatprep.subr.mxu0 0.0
        %1451 = vmatpush1.msra.mxu0 0.0
        %1452 = vmatprep.subr.mxu0 0.0
        %1453 = vmatpush1.msra.mxu0 0.0
        %1454 = vmatprep.subr.mxu0 0.0
        %1455 = vmatpush1.msra.mxu0 0.0
        %1456 = vmatprep.subr.mxu0 0.0
        %1457 = vmatpush1.msra.mxu0 0.0
        %1458 = vmatprep.subr.mxu0 0.0
        %1459 = vmatpush1.msra.mxu0 0.0
        %1460 = vmatprep.subr.mxu0 0.0
        %1461 = vmatpush1.msra.mxu0 0.0
        %1462 = vmatprep.subr.mxu0 0.0
        %1463 = vmatpush1.msra.mxu0 0.0
        %1464 = vmatprep.subr.mxu0 0.0
        %1465 = vmatpush1.msra.mxu0 0.0
        %1466 = vmatprep.subr.mxu0 0.0
        %1467 = vmatpush1.msra.mxu0 0.0
        %1468 = vmatprep.subr.mxu0 0.0
        %1469 = vmatpush1.msra.mxu0 0.0
        %1470 = vmatprep.subr.mxu0 0.0
        %1471 = vmatpush1.msra.mxu0 %v1321
        %1472 = vmatprep.subr.mxu0 0.0
        %1473 = vmatpush1.msra.mxu0 %v1320
        %1474 = vmatprep.subr.mxu0 0.0
        %1475 = vmatpush2.msra.mxu0 0.0
        %1476 = vmatprep.subr.mxu0 0.0
        %1477 = vmatpush2.msra.mxu0 0.0
        %1478 = vmatprep.subr.mxu0 0.0
        %1479 = vmatpush2.msra.mxu0 0.0
        %1480 = vmatprep.subr.mxu0 0.0
        %1481 = vmatpush2.msra.mxu0 0.0
        %1482 = vmatprep.subr.mxu0 0.0
        %1483 = vmatpush2.msra.mxu0 0.0
        %1484 = vmatprep.subr.mxu0 0.0
        %1485 = vmatpush2.msra.mxu0 0.0
        %1486 = vmatprep.subr.mxu0 0.0
        %1487 = vmatpush2.msra.mxu0 0.0
        %1488 = vmatprep.subr.mxu0 0.0
        %1489 = vmatpush2.msra.mxu0 0.0
        %1490 = vmatprep.subr.mxu0 0.0
        %1491 = vmatpush2.msra.mxu0 0.0
        %1492 = vmatprep.subr.mxu0 0.0
        %1493 = vmatpush2.msra.mxu0 0.0
        %1494 = vmatprep.subr.mxu0 0.0
        %1495 = vmatpush2.msra.mxu0 0.0
        %1496 = vmatprep.subr.mxu0 0.0
        %1497 = vmatpush2.msra.mxu0 0.0
        %1498 = vmatprep.subr.mxu0 0.0
        %1499 = vmatpush2.msra.mxu0 0.0
        %1500 = vmatprep.subr.mxu0 0.0
        %1501 = vmatpush2.msra.mxu0 0.0
        %1502 = vmatprep.subr.mxu0 0.0
        %1503 = vmatpush2.msra.mxu0 0.0
        %1504 = vmatprep.subr.mxu0 0.0
        %1505 = vmatpush2.msra.mxu0 0.0
        %1506 = vmatprep.mubr.f32.mxu0 0.0
        %1507 = vmatmul.mubr.f32.gmra.mxu0 %v946
        %v1508 = vpop.f32.mrf.mxu0
        %v1509 = vadd.f32 0.0, %v1508
        %v1510 = vpop.f32.mrf.mxu0
        %1511 = vdwg.mxu0
        %v1513 = vcombine.high %v1509, %v1509
        %v1515 = vunpack.c.l.s4 1966171168
        %v1516 = vunpack.c.0.s8 %v1515
        %v1517 = vlaneseq
        %v1518 = vshrl.u32 %v1517, 7
        %v1519 = vsub.s32 %v1516, %v1518
        %v1520 = vrot.slane %v1509, %v1519
        %v1522 = vunpack.c.l.s4 1966171168
        %v1523 = vunpack.c.0.s8 %v1522
        %v1524 = vlaneseq
        %v1525 = vshrl.u32 %v1524, 7
        %v1526 = vsub.s32 %v1523, %v1525
        %v1527 = vrot.slane %v1513, %v1526
        %v1528 = vcombine.high %v1520, %v1520
        %v1529 = vcombine.high %v1527, %v1527
        %v1531 = vunpack.c.l.s4 1966171168
        %v1532 = vunpack.c.0.s8 %v1531
        %v1533 = vlaneseq
        %v1534 = vshrl.u32 %v1533, 7
        %v1535 = vsub.s32 %v1532, %v1534
        %v1536 = vrot.slane %v1520, %v1535
        %v1538 = vunpack.c.l.s4 1966171168
        %v1539 = vunpack.c.0.s8 %v1538
        %v1540 = vlaneseq
        %v1541 = vshrl.u32 %v1540, 7
        %v1542 = vsub.s32 %v1539, %v1541
        %v1543 = vrot.slane %v1527, %v1542
        %v1545 = vunpack.c.l.s4 1966171168
        %v1546 = vunpack.c.0.s8 %v1545
        %v1547 = vlaneseq
        %v1548 = vshrl.u32 %v1547, 7
        %v1549 = vsub.s32 %v1546, %v1548
        %v1550 = vrot.slane %v1528, %v1549
        %v1552 = vunpack.c.l.s4 1966171168
        %v1553 = vunpack.c.0.s8 %v1552
        %v1554 = vlaneseq
        %v1555 = vshrl.u32 %v1554, 7
        %v1556 = vsub.s32 %v1553, %v1555
        %v1557 = vrot.slane %v1529, %v1556
        %v1558 = vcombine.high %v1536, %v1536
        %v1559 = vcombine.high %v1543, %v1543
        %v1560 = vcombine.high %v1550, %v1550
        %v1561 = vcombine.high %v1557, %v1557
        %s1562 = scalar_lea.vmem %s9, 48
        %v1563 = vld [vmem:[%s1562] sm:$0xff]
        %v1564 = vld [vmem:[%s1562 + $0x8] sm:$0xff]
        %1565 = vmatprep.subr.mxu0 0.0
        %1566 = vmatpush1.msra.mxu0 0.0
        %1567 = vmatprep.subr.mxu0 0.0
        %1568 = vmatpush1.msra.mxu0 0.0
        %1569 = vmatprep.subr.mxu0 0.0
        %1570 = vmatpush1.msra.mxu0 0.0
        %1571 = vmatprep.subr.mxu0 0.0
        %1572 = vmatpush1.msra.mxu0 0.0
        %1573 = vmatprep.subr.mxu0 0.0
        %1574 = vmatpush1.msra.mxu0 0.0
        %1575 = vmatprep.subr.mxu0 0.0
        %1576 = vmatpush1.msra.mxu0 0.0
        %1577 = vmatprep.subr.mxu0 0.0
        %1578 = vmatpush1.msra.mxu0 0.0
        %1579 = vmatprep.subr.mxu0 0.0
        %1580 = vmatpush1.msra.mxu0 0.0
        %1581 = vmatprep.subr.mxu0 0.0
        %1582 = vmatpush1.msra.mxu0 0.0
        %1583 = vmatprep.subr.mxu0 0.0
        %1584 = vmatpush1.msra.mxu0 0.0
        %1585 = vmatprep.subr.mxu0 0.0
        %1586 = vmatpush1.msra.mxu0 0.0
        %1587 = vmatprep.subr.mxu0 0.0
        %1588 = vmatpush1.msra.mxu0 0.0
        %1589 = vmatprep.subr.mxu0 0.0
        %1590 = vmatpush1.msra.mxu0 0.0
        %1591 = vmatprep.subr.mxu0 0.0
        %1592 = vmatpush1.msra.mxu0 0.0
        %1593 = vmatprep.subr.mxu0 0.0
        %1594 = vmatpush1.msra.mxu0 %v1564
        %1595 = vmatprep.subr.mxu0 0.0
        %1596 = vmatpush1.msra.mxu0 %v1563
        %1597 = vmatprep.subr.mxu0 0.0
        %1598 = vmatpush2.msra.mxu0 0.0
        %1599 = vmatprep.subr.mxu0 0.0
        %1600 = vmatpush2.msra.mxu0 0.0
        %1601 = vmatprep.subr.mxu0 0.0
        %1602 = vmatpush2.msra.mxu0 0.0
        %1603 = vmatprep.subr.mxu0 0.0
        %1604 = vmatpush2.msra.mxu0 0.0
        %1605 = vmatprep.subr.mxu0 0.0
        %1606 = vmatpush2.msra.mxu0 0.0
        %1607 = vmatprep.subr.mxu0 0.0
        %1608 = vmatpush2.msra.mxu0 0.0
        %1609 = vmatprep.subr.mxu0 0.0
        %1610 = vmatpush2.msra.mxu0 0.0
        %1611 = vmatprep.subr.mxu0 0.0
        %1612 = vmatpush2.msra.mxu0 0.0
        %1613 = vmatprep.subr.mxu0 0.0
        %1614 = vmatpush2.msra.mxu0 0.0
        %1615 = vmatprep.subr.mxu0 0.0
        %1616 = vmatpush2.msra.mxu0 0.0
        %1617 = vmatprep.subr.mxu0 0.0
        %1618 = vmatpush2.msra.mxu0 0.0
        %1619 = vmatprep.subr.mxu0 0.0
        %1620 = vmatpush2.msra.mxu0 0.0
        %1621 = vmatprep.subr.mxu0 0.0
        %1622 = vmatpush2.msra.mxu0 0.0
        %1623 = vmatprep.subr.mxu0 0.0
        %1624 = vmatpush2.msra.mxu0 0.0
        %1625 = vmatprep.subr.mxu0 0.0
        %1626 = vmatpush2.msra.mxu0 0.0
        %1627 = vmatprep.subr.mxu0 0.0
        %1628 = vmatpush2.msra.mxu0 0.0
        %1629 = vmatprep.mubr.f32.mxu0 0.0
        %1630 = vmatmul.mubr.f32.gmra.mxu0 %v814
        %v1631 = vpop.f32.mrf.mxu0
        %v1632 = vadd.f32 0.0, %v1631
        %v1633 = vpop.f32.mrf.mxu0
        %1634 = vdwg.mxu0
        %v1636 = vcombine.high %v1632, %v1632
        %v1638 = vunpack.c.l.s4 1966171168
        %v1639 = vunpack.c.0.s8 %v1638
        %v1640 = vlaneseq
        %v1641 = vshrl.u32 %v1640, 7
        %v1642 = vsub.s32 %v1639, %v1641
        %v1643 = vrot.slane %v1632, %v1642
        %v1645 = vunpack.c.l.s4 1966171168
        %v1646 = vunpack.c.0.s8 %v1645
        %v1647 = vlaneseq
        %v1648 = vshrl.u32 %v1647, 7
        %v1649 = vsub.s32 %v1646, %v1648
        %v1650 = vrot.slane %v1636, %v1649
        %v1651 = vcombine.high %v1643, %v1643
        %v1652 = vcombine.high %v1650, %v1650
        %v1654 = vunpack.c.l.s4 1966171168
        %v1655 = vunpack.c.0.s8 %v1654
        %v1656 = vlaneseq
        %v1657 = vshrl.u32 %v1656, 7
        %v1658 = vsub.s32 %v1655, %v1657
        %v1659 = vrot.slane %v1643, %v1658
        %v1661 = vunpack.c.l.s4 1966171168
        %v1662 = vunpack.c.0.s8 %v1661
        %v1663 = vlaneseq
        %v1664 = vshrl.u32 %v1663, 7
        %v1665 = vsub.s32 %v1662, %v1664
        %v1666 = vrot.slane %v1650, %v1665
        %v1668 = vunpack.c.l.s4 1966171168
        %v1669 = vunpack.c.0.s8 %v1668
        %v1670 = vlaneseq
        %v1671 = vshrl.u32 %v1670, 7
        %v1672 = vsub.s32 %v1669, %v1671
        %v1673 = vrot.slane %v1651, %v1672
        %v1675 = vunpack.c.l.s4 1966171168
        %v1676 = vunpack.c.0.s8 %v1675
        %v1677 = vlaneseq
        %v1678 = vshrl.u32 %v1677, 7
        %v1679 = vsub.s32 %v1676, %v1678
        %v1680 = vrot.slane %v1652, %v1679
        %v1681 = vcombine.high %v1659, %v1659
        %v1682 = vcombine.high %v1666, %v1666
        %v1683 = vcombine.high %v1673, %v1673
        %v1684 = vcombine.high %v1680, %v1680
        %1685 = vmatprep.subr.mxu0 0.0
        %1686 = vmatpush1.msra.mxu0 0.0
        %1687 = vmatprep.subr.mxu0 0.0
        %1688 = vmatpush1.msra.mxu0 0.0
        %1689 = vmatprep.subr.mxu0 0.0
        %1690 = vmatpush1.msra.mxu0 0.0
        %1691 = vmatprep.subr.mxu0 0.0
        %1692 = vmatpush1.msra.mxu0 0.0
        %1693 = vmatprep.subr.mxu0 0.0
        %1694 = vmatpush1.msra.mxu0 0.0
        %1695 = vmatprep.subr.mxu0 0.0
        %1696 = vmatpush1.msra.mxu0 0.0
        %1697 = vmatprep.subr.mxu0 0.0
        %1698 = vmatpush1.msra.mxu0 0.0
        %1699 = vmatprep.subr.mxu0 0.0
        %1700 = vmatpush1.msra.mxu0 0.0
        %1701 = vmatprep.subr.mxu0 0.0
        %1702 = vmatpush1.msra.mxu0 0.0
        %1703 = vmatprep.subr.mxu0 0.0
        %1704 = vmatpush1.msra.mxu0 0.0
        %1705 = vmatprep.subr.mxu0 0.0
        %1706 = vmatpush1.msra.mxu0 0.0
        %1707 = vmatprep.subr.mxu0 0.0
        %1708 = vmatpush1.msra.mxu0 0.0
        %1709 = vmatprep.subr.mxu0 0.0
        %1710 = vmatpush1.msra.mxu0 0.0
        %1711 = vmatprep.subr.mxu0 0.0
        %1712 = vmatpush1.msra.mxu0 0.0
        %1713 = vmatprep.subr.mxu0 0.0
        %1714 = vmatpush1.msra.mxu0 %v1564
        %1715 = vmatprep.subr.mxu0 0.0
        %1716 = vmatpush1.msra.mxu0 %v1563
        %1717 = vmatprep.subr.mxu0 0.0
        %1718 = vmatpush2.msra.mxu0 0.0
        %1719 = vmatprep.subr.mxu0 0.0
        %1720 = vmatpush2.msra.mxu0 0.0
        %1721 = vmatprep.subr.mxu0 0.0
        %1722 = vmatpush2.msra.mxu0 0.0
        %1723 = vmatprep.subr.mxu0 0.0
        %1724 = vmatpush2.msra.mxu0 0.0
        %1725 = vmatprep.subr.mxu0 0.0
        %1726 = vmatpush2.msra.mxu0 0.0
        %1727 = vmatprep.subr.mxu0 0.0
        %1728 = vmatpush2.msra.mxu0 0.0
        %1729 = vmatprep.subr.mxu0 0.0
        %1730 = vmatpush2.msra.mxu0 0.0
        %1731 = vmatprep.subr.mxu0 0.0
        %1732 = vmatpush2.msra.mxu0 0.0
        %1733 = vmatprep.subr.mxu0 0.0
        %1734 = vmatpush2.msra.mxu0 0.0
        %1735 = vmatprep.subr.mxu0 0.0
        %1736 = vmatpush2.msra.mxu0 0.0
        %1737 = vmatprep.subr.mxu0 0.0
        %1738 = vmatpush2.msra.mxu0 0.0
        %1739 = vmatprep.subr.mxu0 0.0
        %1740 = vmatpush2.msra.mxu0 0.0
        %1741 = vmatprep.subr.mxu0 0.0
        %1742 = vmatpush2.msra.mxu0 0.0
        %1743 = vmatprep.subr.mxu0 0.0
        %1744 = vmatpush2.msra.mxu0 0.0
        %1745 = vmatprep.subr.mxu0 0.0
        %1746 = vmatpush2.msra.mxu0 0.0
        %1747 = vmatprep.subr.mxu0 0.0
        %1748 = vmatpush2.msra.mxu0 0.0
        %1749 = vmatprep.mubr.f32.mxu0 0.0
        %1750 = vmatmul.mubr.f32.gmra.mxu0 %v946
        %v1751 = vpop.f32.mrf.mxu0
        %v1752 = vadd.f32 0.0, %v1751
        %v1753 = vpop.f32.mrf.mxu0
        %1754 = vdwg.mxu0
        %v1756 = vcombine.high %v1752, %v1752
        %v1758 = vunpack.c.l.s4 1966171168
        %v1759 = vunpack.c.0.s8 %v1758
        %v1760 = vlaneseq
        %v1761 = vshrl.u32 %v1760, 7
        %v1762 = vsub.s32 %v1759, %v1761
        %v1763 = vrot.slane %v1752, %v1762
        %v1765 = vunpack.c.l.s4 1966171168
        %v1766 = vunpack.c.0.s8 %v1765
        %v1767 = vlaneseq
        %v1768 = vshrl.u32 %v1767, 7
        %v1769 = vsub.s32 %v1766, %v1768
        %v1770 = vrot.slane %v1756, %v1769
        %v1771 = vcombine.high %v1763, %v1763
        %v1772 = vcombine.high %v1770, %v1770
        %v1774 = vunpack.c.l.s4 1966171168
        %v1775 = vunpack.c.0.s8 %v1774
        %v1776 = vlaneseq
        %v1777 = vshrl.u32 %v1776, 7
        %v1778 = vsub.s32 %v1775, %v1777
        %v1779 = vrot.slane %v1763, %v1778
        %v1781 = vunpack.c.l.s4 1966171168
        %v1782 = vunpack.c.0.s8 %v1781
        %v1783 = vlaneseq
        %v1784 = vshrl.u32 %v1783, 7
        %v1785 = vsub.s32 %v1782, %v1784
        %v1786 = vrot.slane %v1770, %v1785
        %v1788 = vunpack.c.l.s4 1966171168
        %v1789 = vunpack.c.0.s8 %v1788
        %v1790 = vlaneseq
        %v1791 = vshrl.u32 %v1790, 7
        %v1792 = vsub.s32 %v1789, %v1791
        %v1793 = vrot.slane %v1771, %v1792
        %v1795 = vunpack.c.l.s4 1966171168
        %v1796 = vunpack.c.0.s8 %v1795
        %v1797 = vlaneseq
        %v1798 = vshrl.u32 %v1797, 7
        %v1799 = vsub.s32 %v1796, %v1798
        %v1800 = vrot.slane %v1772, %v1799
        %v1801 = vcombine.high %v1779, %v1779
        %v1802 = vcombine.high %v1786, %v1786
        %v1803 = vcombine.high %v1793, %v1793
        %v1804 = vcombine.high %v1800, %v1800
        %s1805 = scalar_lea.vmem %s9, 64
        %v1806 = vld [vmem:[%s1805] sm:$0xff]
        %v1807 = vld [vmem:[%s1805 + $0x8] sm:$0xff]
        %1808 = vmatprep.subr.mxu0 0.0
        %1809 = vmatpush1.msra.mxu0 0.0
        %1810 = vmatprep.subr.mxu0 0.0
        %1811 = vmatpush1.msra.mxu0 0.0
        %1812 = vmatprep.subr.mxu0 0.0
        %1813 = vmatpush1.msra.mxu0 0.0
        %1814 = vmatprep.subr.mxu0 0.0
        %1815 = vmatpush1.msra.mxu0 0.0
        %1816 = vmatprep.subr.mxu0 0.0
        %1817 = vmatpush1.msra.mxu0 0.0
        %1818 = vmatprep.subr.mxu0 0.0
        %1819 = vmatpush1.msra.mxu0 0.0
        %1820 = vmatprep.subr.mxu0 0.0
        %1821 = vmatpush1.msra.mxu0 0.0
        %1822 = vmatprep.subr.mxu0 0.0
        %1823 = vmatpush1.msra.mxu0 0.0
        %1824 = vmatprep.subr.mxu0 0.0
        %1825 = vmatpush1.msra.mxu0 0.0
        %1826 = vmatprep.subr.mxu0 0.0
        %1827 = vmatpush1.msra.mxu0 0.0
        %1828 = vmatprep.subr.mxu0 0.0
        %1829 = vmatpush1.msra.mxu0 0.0
        %1830 = vmatprep.subr.mxu0 0.0
        %1831 = vmatpush1.msra.mxu0 0.0
        %1832 = vmatprep.subr.mxu0 0.0
        %1833 = vmatpush1.msra.mxu0 0.0
        %1834 = vmatprep.subr.mxu0 0.0
        %1835 = vmatpush1.msra.mxu0 0.0
        %1836 = vmatprep.subr.mxu0 0.0
        %1837 = vmatpush1.msra.mxu0 %v1807
        %1838 = vmatprep.subr.mxu0 0.0
        %1839 = vmatpush1.msra.mxu0 %v1806
        %1840 = vmatprep.subr.mxu0 0.0
        %1841 = vmatpush2.msra.mxu0 0.0
        %1842 = vmatprep.subr.mxu0 0.0
        %1843 = vmatpush2.msra.mxu0 0.0
        %1844 = vmatprep.subr.mxu0 0.0
        %1845 = vmatpush2.msra.mxu0 0.0
        %1846 = vmatprep.subr.mxu0 0.0
        %1847 = vmatpush2.msra.mxu0 0.0
        %1848 = vmatprep.subr.mxu0 0.0
        %1849 = vmatpush2.msra.mxu0 0.0
        %1850 = vmatprep.subr.mxu0 0.0
        %1851 = vmatpush2.msra.mxu0 0.0
        %1852 = vmatprep.subr.mxu0 0.0
        %1853 = vmatpush2.msra.mxu0 0.0
        %1854 = vmatprep.subr.mxu0 0.0
        %1855 = vmatpush2.msra.mxu0 0.0
        %1856 = vmatprep.subr.mxu0 0.0
        %1857 = vmatpush2.msra.mxu0 0.0
        %1858 = vmatprep.subr.mxu0 0.0
        %1859 = vmatpush2.msra.mxu0 0.0
        %1860 = vmatprep.subr.mxu0 0.0
        %1861 = vmatpush2.msra.mxu0 0.0
        %1862 = vmatprep.subr.mxu0 0.0
        %1863 = vmatpush2.msra.mxu0 0.0
        %1864 = vmatprep.subr.mxu0 0.0
        %1865 = vmatpush2.msra.mxu0 0.0
        %1866 = vmatprep.subr.mxu0 0.0
        %1867 = vmatpush2.msra.mxu0 0.0
        %1868 = vmatprep.subr.mxu0 0.0
        %1869 = vmatpush2.msra.mxu0 0.0
        %1870 = vmatprep.subr.mxu0 0.0
        %1871 = vmatpush2.msra.mxu0 0.0
        %1872 = vmatprep.mubr.f32.mxu0 0.0
        %1873 = vmatmul.mubr.f32.gmra.mxu0 %v814
        %v1874 = vpop.f32.mrf.mxu0
        %v1875 = vadd.f32 0.0, %v1874
        %v1876 = vpop.f32.mrf.mxu0
        %1877 = vdwg.mxu0
        %v1879 = vcombine.high %v1875, %v1875
        %v1881 = vunpack.c.l.s4 1966171168
        %v1882 = vunpack.c.0.s8 %v1881
        %v1883 = vlaneseq
        %v1884 = vshrl.u32 %v1883, 7
        %v1885 = vsub.s32 %v1882, %v1884
        %v1886 = vrot.slane %v1875, %v1885
        %v1888 = vunpack.c.l.s4 1966171168
        %v1889 = vunpack.c.0.s8 %v1888
        %v1890 = vlaneseq
        %v1891 = vshrl.u32 %v1890, 7
        %v1892 = vsub.s32 %v1889, %v1891
        %v1893 = vrot.slane %v1879, %v1892
        %v1894 = vcombine.high %v1886, %v1886
        %v1895 = vcombine.high %v1893, %v1893
        %v1897 = vunpack.c.l.s4 1966171168
        %v1898 = vunpack.c.0.s8 %v1897
        %v1899 = vlaneseq
        %v1900 = vshrl.u32 %v1899, 7
        %v1901 = vsub.s32 %v1898, %v1900
        %v1902 = vrot.slane %v1886, %v1901
        %v1904 = vunpack.c.l.s4 1966171168
        %v1905 = vunpack.c.0.s8 %v1904
        %v1906 = vlaneseq
        %v1907 = vshrl.u32 %v1906, 7
        %v1908 = vsub.s32 %v1905, %v1907
        %v1909 = vrot.slane %v1893, %v1908
        %v1911 = vunpack.c.l.s4 1966171168
        %v1912 = vunpack.c.0.s8 %v1911
        %v1913 = vlaneseq
        %v1914 = vshrl.u32 %v1913, 7
        %v1915 = vsub.s32 %v1912, %v1914
        %v1916 = vrot.slane %v1894, %v1915
        %v1918 = vunpack.c.l.s4 1966171168
        %v1919 = vunpack.c.0.s8 %v1918
        %v1920 = vlaneseq
        %v1921 = vshrl.u32 %v1920, 7
        %v1922 = vsub.s32 %v1919, %v1921
        %v1923 = vrot.slane %v1895, %v1922
        %v1924 = vcombine.high %v1902, %v1902
        %v1925 = vcombine.high %v1909, %v1909
        %v1926 = vcombine.high %v1916, %v1916
        %v1927 = vcombine.high %v1923, %v1923
        %1928 = vmatprep.subr.mxu0 0.0
        %1929 = vmatpush1.msra.mxu0 0.0
        %1930 = vmatprep.subr.mxu0 0.0
        %1931 = vmatpush1.msra.mxu0 0.0
        %1932 = vmatprep.subr.mxu0 0.0
        %1933 = vmatpush1.msra.mxu0 0.0
        %1934 = vmatprep.subr.mxu0 0.0
        %1935 = vmatpush1.msra.mxu0 0.0
        %1936 = vmatprep.subr.mxu0 0.0
        %1937 = vmatpush1.msra.mxu0 0.0
        %1938 = vmatprep.subr.mxu0 0.0
        %1939 = vmatpush1.msra.mxu0 0.0
        %1940 = vmatprep.subr.mxu0 0.0
        %1941 = vmatpush1.msra.mxu0 0.0
        %1942 = vmatprep.subr.mxu0 0.0
        %1943 = vmatpush1.msra.mxu0 0.0
        %1944 = vmatprep.subr.mxu0 0.0
        %1945 = vmatpush1.msra.mxu0 0.0
        %1946 = vmatprep.subr.mxu0 0.0
        %1947 = vmatpush1.msra.mxu0 0.0
        %1948 = vmatprep.subr.mxu0 0.0
        %1949 = vmatpush1.msra.mxu0 0.0
        %1950 = vmatprep.subr.mxu0 0.0
        %1951 = vmatpush1.msra.mxu0 0.0
        %1952 = vmatprep.subr.mxu0 0.0
        %1953 = vmatpush1.msra.mxu0 0.0
        %1954 = vmatprep.subr.mxu0 0.0
        %1955 = vmatpush1.msra.mxu0 0.0
        %1956 = vmatprep.subr.mxu0 0.0
        %1957 = vmatpush1.msra.mxu0 %v1807
        %1958 = vmatprep.subr.mxu0 0.0
        %1959 = vmatpush1.msra.mxu0 %v1806
        %1960 = vmatprep.subr.mxu0 0.0
        %1961 = vmatpush2.msra.mxu0 0.0
        %1962 = vmatprep.subr.mxu0 0.0
        %1963 = vmatpush2.msra.mxu0 0.0
        %1964 = vmatprep.subr.mxu0 0.0
        %1965 = vmatpush2.msra.mxu0 0.0
        %1966 = vmatprep.subr.mxu0 0.0
        %1967 = vmatpush2.msra.mxu0 0.0
        %1968 = vmatprep.subr.mxu0 0.0
        %1969 = vmatpush2.msra.mxu0 0.0
        %1970 = vmatprep.subr.mxu0 0.0
        %1971 = vmatpush2.msra.mxu0 0.0
        %1972 = vmatprep.subr.mxu0 0.0
        %1973 = vmatpush2.msra.mxu0 0.0
        %1974 = vmatprep.subr.mxu0 0.0
        %1975 = vmatpush2.msra.mxu0 0.0
        %1976 = vmatprep.subr.mxu0 0.0
        %1977 = vmatpush2.msra.mxu0 0.0
        %1978 = vmatprep.subr.mxu0 0.0
        %1979 = vmatpush2.msra.mxu0 0.0
        %1980 = vmatprep.subr.mxu0 0.0
        %1981 = vmatpush2.msra.mxu0 0.0
        %1982 = vmatprep.subr.mxu0 0.0
        %1983 = vmatpush2.msra.mxu0 0.0
        %1984 = vmatprep.subr.mxu0 0.0
        %1985 = vmatpush2.msra.mxu0 0.0
        %1986 = vmatprep.subr.mxu0 0.0
        %1987 = vmatpush2.msra.mxu0 0.0
        %1988 = vmatprep.subr.mxu0 0.0
        %1989 = vmatpush2.msra.mxu0 0.0
        %1990 = vmatprep.subr.mxu0 0.0
        %1991 = vmatpush2.msra.mxu0 0.0
        %1992 = vmatprep.mubr.f32.mxu0 0.0
        %1993 = vmatmul.mubr.f32.gmra.mxu0 %v946
        %v1994 = vpop.f32.mrf.mxu0
        %v1995 = vadd.f32 0.0, %v1994
        %v1996 = vpop.f32.mrf.mxu0
        %1997 = vdwg.mxu0
        %v1999 = vcombine.high %v1995, %v1995
        %v2001 = vunpack.c.l.s4 1966171168
        %v2002 = vunpack.c.0.s8 %v2001
        %v2003 = vlaneseq
        %v2004 = vshrl.u32 %v2003, 7
        %v2005 = vsub.s32 %v2002, %v2004
        %v2006 = vrot.slane %v1995, %v2005
        %v2008 = vunpack.c.l.s4 1966171168
        %v2009 = vunpack.c.0.s8 %v2008
        %v2010 = vlaneseq
        %v2011 = vshrl.u32 %v2010, 7
        %v2012 = vsub.s32 %v2009, %v2011
        %v2013 = vrot.slane %v1999, %v2012
        %v2014 = vcombine.high %v2006, %v2006
        %v2015 = vcombine.high %v2013, %v2013
        %v2017 = vunpack.c.l.s4 1966171168
        %v2018 = vunpack.c.0.s8 %v2017
        %v2019 = vlaneseq
        %v2020 = vshrl.u32 %v2019, 7
        %v2021 = vsub.s32 %v2018, %v2020
        %v2022 = vrot.slane %v2006, %v2021
        %v2024 = vunpack.c.l.s4 1966171168
        %v2025 = vunpack.c.0.s8 %v2024
        %v2026 = vlaneseq
        %v2027 = vshrl.u32 %v2026, 7
        %v2028 = vsub.s32 %v2025, %v2027
        %v2029 = vrot.slane %v2013, %v2028
        %v2031 = vunpack.c.l.s4 1966171168
        %v2032 = vunpack.c.0.s8 %v2031
        %v2033 = vlaneseq
        %v2034 = vshrl.u32 %v2033, 7
        %v2035 = vsub.s32 %v2032, %v2034
        %v2036 = vrot.slane %v2014, %v2035
        %v2038 = vunpack.c.l.s4 1966171168
        %v2039 = vunpack.c.0.s8 %v2038
        %v2040 = vlaneseq
        %v2041 = vshrl.u32 %v2040, 7
        %v2042 = vsub.s32 %v2039, %v2041
        %v2043 = vrot.slane %v2015, %v2042
        %v2044 = vcombine.high %v2022, %v2022
        %v2045 = vcombine.high %v2029, %v2029
        %v2046 = vcombine.high %v2036, %v2036
        %v2047 = vcombine.high %v2043, %v2043
        %s2048 = scalar_lea.vmem %s9, 80
        %v2049 = vld [vmem:[%s2048] sm:$0xff]
        %v2050 = vld [vmem:[%s2048 + $0x8] sm:$0xff]
        %2051 = vmatprep.subr.mxu0 0.0
        %2052 = vmatpush1.msra.mxu0 0.0
        %2053 = vmatprep.subr.mxu0 0.0
        %2054 = vmatpush1.msra.mxu0 0.0
        %2055 = vmatprep.subr.mxu0 0.0
        %2056 = vmatpush1.msra.mxu0 0.0
        %2057 = vmatprep.subr.mxu0 0.0
        %2058 = vmatpush1.msra.mxu0 0.0
        %2059 = vmatprep.subr.mxu0 0.0
        %2060 = vmatpush1.msra.mxu0 0.0
        %2061 = vmatprep.subr.mxu0 0.0
        %2062 = vmatpush1.msra.mxu0 0.0
        %2063 = vmatprep.subr.mxu0 0.0
        %2064 = vmatpush1.msra.mxu0 0.0
        %2065 = vmatprep.subr.mxu0 0.0
        %2066 = vmatpush1.msra.mxu0 0.0
        %2067 = vmatprep.subr.mxu0 0.0
        %2068 = vmatpush1.msra.mxu0 0.0
        %2069 = vmatprep.subr.mxu0 0.0
        %2070 = vmatpush1.msra.mxu0 0.0
        %2071 = vmatprep.subr.mxu0 0.0
        %2072 = vmatpush1.msra.mxu0 0.0
        %2073 = vmatprep.subr.mxu0 0.0
        %2074 = vmatpush1.msra.mxu0 0.0
        %2075 = vmatprep.subr.mxu0 0.0
        %2076 = vmatpush1.msra.mxu0 0.0
        %2077 = vmatprep.subr.mxu0 0.0
        %2078 = vmatpush1.msra.mxu0 0.0
        %2079 = vmatprep.subr.mxu0 0.0
        %2080 = vmatpush1.msra.mxu0 %v2050
        %2081 = vmatprep.subr.mxu0 0.0
        %2082 = vmatpush1.msra.mxu0 %v2049
        %2083 = vmatprep.subr.mxu0 0.0
        %2084 = vmatpush2.msra.mxu0 0.0
        %2085 = vmatprep.subr.mxu0 0.0
        %2086 = vmatpush2.msra.mxu0 0.0
        %2087 = vmatprep.subr.mxu0 0.0
        %2088 = vmatpush2.msra.mxu0 0.0
        %2089 = vmatprep.subr.mxu0 0.0
        %2090 = vmatpush2.msra.mxu0 0.0
        %2091 = vmatprep.subr.mxu0 0.0
        %2092 = vmatpush2.msra.mxu0 0.0
        %2093 = vmatprep.subr.mxu0 0.0
        %2094 = vmatpush2.msra.mxu0 0.0
        %2095 = vmatprep.subr.mxu0 0.0
        %2096 = vmatpush2.msra.mxu0 0.0
        %2097 = vmatprep.subr.mxu0 0.0
        %2098 = vmatpush2.msra.mxu0 0.0
        %2099 = vmatprep.subr.mxu0 0.0
        %2100 = vmatpush2.msra.mxu0 0.0
        %2101 = vmatprep.subr.mxu0 0.0
        %2102 = vmatpush2.msra.mxu0 0.0
        %2103 = vmatprep.subr.mxu0 0.0
        %2104 = vmatpush2.msra.mxu0 0.0
        %2105 = vmatprep.subr.mxu0 0.0
        %2106 = vmatpush2.msra.mxu0 0.0
        %2107 = vmatprep.subr.mxu0 0.0
        %2108 = vmatpush2.msra.mxu0 0.0
        %2109 = vmatprep.subr.mxu0 0.0
        %2110 = vmatpush2.msra.mxu0 0.0
        %2111 = vmatprep.subr.mxu0 0.0
        %2112 = vmatpush2.msra.mxu0 0.0
        %2113 = vmatprep.subr.mxu0 0.0
        %2114 = vmatpush2.msra.mxu0 0.0
        %2115 = vmatprep.mubr.f32.mxu0 0.0
        %2116 = vmatmul.mubr.f32.gmra.mxu0 %v814
        %v2117 = vpop.f32.mrf.mxu0
        %v2118 = vadd.f32 0.0, %v2117
        %v2119 = vpop.f32.mrf.mxu0
        %2120 = vdwg.mxu0
        %v2122 = vcombine.high %v2118, %v2118
        %v2124 = vunpack.c.l.s4 1966171168
        %v2125 = vunpack.c.0.s8 %v2124
        %v2126 = vlaneseq
        %v2127 = vshrl.u32 %v2126, 7
        %v2128 = vsub.s32 %v2125, %v2127
        %v2129 = vrot.slane %v2118, %v2128
        %v2131 = vunpack.c.l.s4 1966171168
        %v2132 = vunpack.c.0.s8 %v2131
        %v2133 = vlaneseq
        %v2134 = vshrl.u32 %v2133, 7
        %v2135 = vsub.s32 %v2132, %v2134
        %v2136 = vrot.slane %v2122, %v2135
        %v2137 = vcombine.high %v2129, %v2129
        %v2138 = vcombine.high %v2136, %v2136
        %v2140 = vunpack.c.l.s4 1966171168
        %v2141 = vunpack.c.0.s8 %v2140
        %v2142 = vlaneseq
        %v2143 = vshrl.u32 %v2142, 7
        %v2144 = vsub.s32 %v2141, %v2143
        %v2145 = vrot.slane %v2129, %v2144
        %v2147 = vunpack.c.l.s4 1966171168
        %v2148 = vunpack.c.0.s8 %v2147
        %v2149 = vlaneseq
        %v2150 = vshrl.u32 %v2149, 7
        %v2151 = vsub.s32 %v2148, %v2150
        %v2152 = vrot.slane %v2136, %v2151
        %v2154 = vunpack.c.l.s4 1966171168
        %v2155 = vunpack.c.0.s8 %v2154
        %v2156 = vlaneseq
        %v2157 = vshrl.u32 %v2156, 7
        %v2158 = vsub.s32 %v2155, %v2157
        %v2159 = vrot.slane %v2137, %v2158
        %v2161 = vunpack.c.l.s4 1966171168
        %v2162 = vunpack.c.0.s8 %v2161
        %v2163 = vlaneseq
        %v2164 = vshrl.u32 %v2163, 7
        %v2165 = vsub.s32 %v2162, %v2164
        %v2166 = vrot.slane %v2138, %v2165
        %v2167 = vcombine.high %v2145, %v2145
        %v2168 = vcombine.high %v2152, %v2152
        %v2169 = vcombine.high %v2159, %v2159
        %v2170 = vcombine.high %v2166, %v2166
        %2171 = vmatprep.subr.mxu0 0.0
        %2172 = vmatpush1.msra.mxu0 0.0
        %2173 = vmatprep.subr.mxu0 0.0
        %2174 = vmatpush1.msra.mxu0 0.0
        %2175 = vmatprep.subr.mxu0 0.0
        %2176 = vmatpush1.msra.mxu0 0.0
        %2177 = vmatprep.subr.mxu0 0.0
        %2178 = vmatpush1.msra.mxu0 0.0
        %2179 = vmatprep.subr.mxu0 0.0
        %2180 = vmatpush1.msra.mxu0 0.0
        %2181 = vmatprep.subr.mxu0 0.0
        %2182 = vmatpush1.msra.mxu0 0.0
        %2183 = vmatprep.subr.mxu0 0.0
        %2184 = vmatpush1.msra.mxu0 0.0
        %2185 = vmatprep.subr.mxu0 0.0
        %2186 = vmatpush1.msra.mxu0 0.0
        %2187 = vmatprep.subr.mxu0 0.0
        %2188 = vmatpush1.msra.mxu0 0.0
        %2189 = vmatprep.subr.mxu0 0.0
        %2190 = vmatpush1.msra.mxu0 0.0
        %2191 = vmatprep.subr.mxu0 0.0
        %2192 = vmatpush1.msra.mxu0 0.0
        %2193 = vmatprep.subr.mxu0 0.0
        %2194 = vmatpush1.msra.mxu0 0.0
        %2195 = vmatprep.subr.mxu0 0.0
        %2196 = vmatpush1.msra.mxu0 0.0
        %2197 = vmatprep.subr.mxu0 0.0
        %2198 = vmatpush1.msra.mxu0 0.0
        %2199 = vmatprep.subr.mxu0 0.0
        %2200 = vmatpush1.msra.mxu0 %v2050
        %2201 = vmatprep.subr.mxu0 0.0
        %2202 = vmatpush1.msra.mxu0 %v2049
        %2203 = vmatprep.subr.mxu0 0.0
        %2204 = vmatpush2.msra.mxu0 0.0
        %2205 = vmatprep.subr.mxu0 0.0
        %2206 = vmatpush2.msra.mxu0 0.0
        %2207 = vmatprep.subr.mxu0 0.0
        %2208 = vmatpush2.msra.mxu0 0.0
        %2209 = vmatprep.subr.mxu0 0.0
        %2210 = vmatpush2.msra.mxu0 0.0
        %2211 = vmatprep.subr.mxu0 0.0
        %2212 = vmatpush2.msra.mxu0 0.0
        %2213 = vmatprep.subr.mxu0 0.0
        %2214 = vmatpush2.msra.mxu0 0.0
        %2215 = vmatprep.subr.mxu0 0.0
        %2216 = vmatpush2.msra.mxu0 0.0
        %2217 = vmatprep.subr.mxu0 0.0
        %2218 = vmatpush2.msra.mxu0 0.0
        %2219 = vmatprep.subr.mxu0 0.0
        %2220 = vmatpush2.msra.mxu0 0.0
        %2221 = vmatprep.subr.mxu0 0.0
        %2222 = vmatpush2.msra.mxu0 0.0
        %2223 = vmatprep.subr.mxu0 0.0
        %2224 = vmatpush2.msra.mxu0 0.0
        %2225 = vmatprep.subr.mxu0 0.0
        %2226 = vmatpush2.msra.mxu0 0.0
        %2227 = vmatprep.subr.mxu0 0.0
        %2228 = vmatpush2.msra.mxu0 0.0
        %2229 = vmatprep.subr.mxu0 0.0
        %2230 = vmatpush2.msra.mxu0 0.0
        %2231 = vmatprep.subr.mxu0 0.0
        %2232 = vmatpush2.msra.mxu0 0.0
        %2233 = vmatprep.subr.mxu0 0.0
        %2234 = vmatpush2.msra.mxu0 0.0
        %2235 = vmatprep.mubr.f32.mxu0 0.0
        %2236 = vmatmul.mubr.f32.gmra.mxu0 %v946
        %v2237 = vpop.f32.mrf.mxu0
        %v2238 = vadd.f32 0.0, %v2237
        %v2239 = vpop.f32.mrf.mxu0
        %2240 = vdwg.mxu0
        %v2242 = vcombine.high %v2238, %v2238
        %v2244 = vunpack.c.l.s4 1966171168
        %v2245 = vunpack.c.0.s8 %v2244
        %v2246 = vlaneseq
        %v2247 = vshrl.u32 %v2246, 7
        %v2248 = vsub.s32 %v2245, %v2247
        %v2249 = vrot.slane %v2238, %v2248
        %v2251 = vunpack.c.l.s4 1966171168
        %v2252 = vunpack.c.0.s8 %v2251
        %v2253 = vlaneseq
        %v2254 = vshrl.u32 %v2253, 7
        %v2255 = vsub.s32 %v2252, %v2254
        %v2256 = vrot.slane %v2242, %v2255
        %v2257 = vcombine.high %v2249, %v2249
        %v2258 = vcombine.high %v2256, %v2256
        %v2260 = vunpack.c.l.s4 1966171168
        %v2261 = vunpack.c.0.s8 %v2260
        %v2262 = vlaneseq
        %v2263 = vshrl.u32 %v2262, 7
        %v2264 = vsub.s32 %v2261, %v2263
        %v2265 = vrot.slane %v2249, %v2264
        %v2267 = vunpack.c.l.s4 1966171168
        %v2268 = vunpack.c.0.s8 %v2267
        %v2269 = vlaneseq
        %v2270 = vshrl.u32 %v2269, 7
        %v2271 = vsub.s32 %v2268, %v2270
        %v2272 = vrot.slane %v2256, %v2271
        %v2274 = vunpack.c.l.s4 1966171168
        %v2275 = vunpack.c.0.s8 %v2274
        %v2276 = vlaneseq
        %v2277 = vshrl.u32 %v2276, 7
        %v2278 = vsub.s32 %v2275, %v2277
        %v2279 = vrot.slane %v2257, %v2278
        %v2281 = vunpack.c.l.s4 1966171168
        %v2282 = vunpack.c.0.s8 %v2281
        %v2283 = vlaneseq
        %v2284 = vshrl.u32 %v2283, 7
        %v2285 = vsub.s32 %v2282, %v2284
        %v2286 = vrot.slane %v2258, %v2285
        %v2287 = vcombine.high %v2265, %v2265
        %v2288 = vcombine.high %v2272, %v2272
        %v2289 = vcombine.high %v2279, %v2279
        %v2290 = vcombine.high %v2286, %v2286
        %s2291 = scalar_lea.vmem %s9, 96
        %v2292 = vld [vmem:[%s2291] sm:$0xff]
        %v2293 = vld [vmem:[%s2291 + $0x8] sm:$0xff]
        %2294 = vmatprep.subr.mxu0 0.0
        %2295 = vmatpush1.msra.mxu0 0.0
        %2296 = vmatprep.subr.mxu0 0.0
        %2297 = vmatpush1.msra.mxu0 0.0
        %2298 = vmatprep.subr.mxu0 0.0
        %2299 = vmatpush1.msra.mxu0 0.0
        %2300 = vmatprep.subr.mxu0 0.0
        %2301 = vmatpush1.msra.mxu0 0.0
        %2302 = vmatprep.subr.mxu0 0.0
        %2303 = vmatpush1.msra.mxu0 0.0
        %2304 = vmatprep.subr.mxu0 0.0
        %2305 = vmatpush1.msra.mxu0 0.0
        %2306 = vmatprep.subr.mxu0 0.0
        %2307 = vmatpush1.msra.mxu0 0.0
        %2308 = vmatprep.subr.mxu0 0.0
        %2309 = vmatpush1.msra.mxu0 0.0
        %2310 = vmatprep.subr.mxu0 0.0
        %2311 = vmatpush1.msra.mxu0 0.0
        %2312 = vmatprep.subr.mxu0 0.0
        %2313 = vmatpush1.msra.mxu0 0.0
        %2314 = vmatprep.subr.mxu0 0.0
        %2315 = vmatpush1.msra.mxu0 0.0
        %2316 = vmatprep.subr.mxu0 0.0
        %2317 = vmatpush1.msra.mxu0 0.0
        %2318 = vmatprep.subr.mxu0 0.0
        %2319 = vmatpush1.msra.mxu0 0.0
        %2320 = vmatprep.subr.mxu0 0.0
        %2321 = vmatpush1.msra.mxu0 0.0
        %2322 = vmatprep.subr.mxu0 0.0
        %2323 = vmatpush1.msra.mxu0 %v2293
        %2324 = vmatprep.subr.mxu0 0.0
        %2325 = vmatpush1.msra.mxu0 %v2292
        %2326 = vmatprep.subr.mxu0 0.0
        %2327 = vmatpush2.msra.mxu0 0.0
        %2328 = vmatprep.subr.mxu0 0.0
        %2329 = vmatpush2.msra.mxu0 0.0
        %2330 = vmatprep.subr.mxu0 0.0
        %2331 = vmatpush2.msra.mxu0 0.0
        %2332 = vmatprep.subr.mxu0 0.0
        %2333 = vmatpush2.msra.mxu0 0.0
        %2334 = vmatprep.subr.mxu0 0.0
        %2335 = vmatpush2.msra.mxu0 0.0
        %2336 = vmatprep.subr.mxu0 0.0
        %2337 = vmatpush2.msra.mxu0 0.0
        %2338 = vmatprep.subr.mxu0 0.0
        %2339 = vmatpush2.msra.mxu0 0.0
        %2340 = vmatprep.subr.mxu0 0.0
        %2341 = vmatpush2.msra.mxu0 0.0
        %2342 = vmatprep.subr.mxu0 0.0
        %2343 = vmatpush2.msra.mxu0 0.0
        %2344 = vmatprep.subr.mxu0 0.0
        %2345 = vmatpush2.msra.mxu0 0.0
        %2346 = vmatprep.subr.mxu0 0.0
        %2347 = vmatpush2.msra.mxu0 0.0
        %2348 = vmatprep.subr.mxu0 0.0
        %2349 = vmatpush2.msra.mxu0 0.0
        %2350 = vmatprep.subr.mxu0 0.0
        %2351 = vmatpush2.msra.mxu0 0.0
        %2352 = vmatprep.subr.mxu0 0.0
        %2353 = vmatpush2.msra.mxu0 0.0
        %2354 = vmatprep.subr.mxu0 0.0
        %2355 = vmatpush2.msra.mxu0 0.0
        %2356 = vmatprep.subr.mxu0 0.0
        %2357 = vmatpush2.msra.mxu0 0.0
        %2358 = vmatprep.mubr.f32.mxu0 0.0
        %2359 = vmatmul.mubr.f32.gmra.mxu0 %v814
        %v2360 = vpop.f32.mrf.mxu0
        %v2361 = vadd.f32 0.0, %v2360
        %v2362 = vpop.f32.mrf.mxu0
        %2363 = vdwg.mxu0
        %v2365 = vcombine.high %v2361, %v2361
        %v2367 = vunpack.c.l.s4 1966171168
        %v2368 = vunpack.c.0.s8 %v2367
        %v2369 = vlaneseq
        %v2370 = vshrl.u32 %v2369, 7
        %v2371 = vsub.s32 %v2368, %v2370
        %v2372 = vrot.slane %v2361, %v2371
        %v2374 = vunpack.c.l.s4 1966171168
        %v2375 = vunpack.c.0.s8 %v2374
        %v2376 = vlaneseq
        %v2377 = vshrl.u32 %v2376, 7
        %v2378 = vsub.s32 %v2375, %v2377
        %v2379 = vrot.slane %v2365, %v2378
        %v2380 = vcombine.high %v2372, %v2372
        %v2381 = vcombine.high %v2379, %v2379
        %v2383 = vunpack.c.l.s4 1966171168
        %v2384 = vunpack.c.0.s8 %v2383
        %v2385 = vlaneseq
        %v2386 = vshrl.u32 %v2385, 7
        %v2387 = vsub.s32 %v2384, %v2386
        %v2388 = vrot.slane %v2372, %v2387
        %v2390 = vunpack.c.l.s4 1966171168
        %v2391 = vunpack.c.0.s8 %v2390
        %v2392 = vlaneseq
        %v2393 = vshrl.u32 %v2392, 7
        %v2394 = vsub.s32 %v2391, %v2393
        %v2395 = vrot.slane %v2379, %v2394
        %v2397 = vunpack.c.l.s4 1966171168
        %v2398 = vunpack.c.0.s8 %v2397
        %v2399 = vlaneseq
        %v2400 = vshrl.u32 %v2399, 7
        %v2401 = vsub.s32 %v2398, %v2400
        %v2402 = vrot.slane %v2380, %v2401
        %v2404 = vunpack.c.l.s4 1966171168
        %v2405 = vunpack.c.0.s8 %v2404
        %v2406 = vlaneseq
        %v2407 = vshrl.u32 %v2406, 7
        %v2408 = vsub.s32 %v2405, %v2407
        %v2409 = vrot.slane %v2381, %v2408
        %v2410 = vcombine.high %v2388, %v2388
        %v2411 = vcombine.high %v2395, %v2395
        %v2412 = vcombine.high %v2402, %v2402
        %v2413 = vcombine.high %v2409, %v2409
        %2414 = vmatprep.subr.mxu0 0.0
        %2415 = vmatpush1.msra.mxu0 0.0
        %2416 = vmatprep.subr.mxu0 0.0
        %2417 = vmatpush1.msra.mxu0 0.0
        %2418 = vmatprep.subr.mxu0 0.0
        %2419 = vmatpush1.msra.mxu0 0.0
        %2420 = vmatprep.subr.mxu0 0.0
        %2421 = vmatpush1.msra.mxu0 0.0
        %2422 = vmatprep.subr.mxu0 0.0
        %2423 = vmatpush1.msra.mxu0 0.0
        %2424 = vmatprep.subr.mxu0 0.0
        %2425 = vmatpush1.msra.mxu0 0.0
        %2426 = vmatprep.subr.mxu0 0.0
        %2427 = vmatpush1.msra.mxu0 0.0
        %2428 = vmatprep.subr.mxu0 0.0
        %2429 = vmatpush1.msra.mxu0 0.0
        %2430 = vmatprep.subr.mxu0 0.0
        %2431 = vmatpush1.msra.mxu0 0.0
        %2432 = vmatprep.subr.mxu0 0.0
        %2433 = vmatpush1.msra.mxu0 0.0
        %2434 = vmatprep.subr.mxu0 0.0
        %2435 = vmatpush1.msra.mxu0 0.0
        %2436 = vmatprep.subr.mxu0 0.0
        %2437 = vmatpush1.msra.mxu0 0.0
        %2438 = vmatprep.subr.mxu0 0.0
        %2439 = vmatpush1.msra.mxu0 0.0
        %2440 = vmatprep.subr.mxu0 0.0
        %2441 = vmatpush1.msra.mxu0 0.0
        %2442 = vmatprep.subr.mxu0 0.0
        %2443 = vmatpush1.msra.mxu0 %v2293
        %2444 = vmatprep.subr.mxu0 0.0
        %2445 = vmatpush1.msra.mxu0 %v2292
        %2446 = vmatprep.subr.mxu0 0.0
        %2447 = vmatpush2.msra.mxu0 0.0
        %2448 = vmatprep.subr.mxu0 0.0
        %2449 = vmatpush2.msra.mxu0 0.0
        %2450 = vmatprep.subr.mxu0 0.0
        %2451 = vmatpush2.msra.mxu0 0.0
        %2452 = vmatprep.subr.mxu0 0.0
        %2453 = vmatpush2.msra.mxu0 0.0
        %2454 = vmatprep.subr.mxu0 0.0
        %2455 = vmatpush2.msra.mxu0 0.0
        %2456 = vmatprep.subr.mxu0 0.0
        %2457 = vmatpush2.msra.mxu0 0.0
        %2458 = vmatprep.subr.mxu0 0.0
        %2459 = vmatpush2.msra.mxu0 0.0
        %2460 = vmatprep.subr.mxu0 0.0
        %2461 = vmatpush2.msra.mxu0 0.0
        %2462 = vmatprep.subr.mxu0 0.0
        %2463 = vmatpush2.msra.mxu0 0.0
        %2464 = vmatprep.subr.mxu0 0.0
        %2465 = vmatpush2.msra.mxu0 0.0
        %2466 = vmatprep.subr.mxu0 0.0
        %2467 = vmatpush2.msra.mxu0 0.0
        %2468 = vmatprep.subr.mxu0 0.0
        %2469 = vmatpush2.msra.mxu0 0.0
        %2470 = vmatprep.subr.mxu0 0.0
        %2471 = vmatpush2.msra.mxu0 0.0
        %2472 = vmatprep.subr.mxu0 0.0
        %2473 = vmatpush2.msra.mxu0 0.0
        %2474 = vmatprep.subr.mxu0 0.0
        %2475 = vmatpush2.msra.mxu0 0.0
        %2476 = vmatprep.subr.mxu0 0.0
        %2477 = vmatpush2.msra.mxu0 0.0
        %2478 = vmatprep.mubr.f32.mxu0 0.0
        %2479 = vmatmul.mubr.f32.gmra.mxu0 %v946
        %v2480 = vpop.f32.mrf.mxu0
        %v2481 = vadd.f32 0.0, %v2480
        %v2482 = vpop.f32.mrf.mxu0
        %2483 = vdwg.mxu0
        %v2485 = vcombine.high %v2481, %v2481
        %v2487 = vunpack.c.l.s4 1966171168
        %v2488 = vunpack.c.0.s8 %v2487
        %v2489 = vlaneseq
        %v2490 = vshrl.u32 %v2489, 7
        %v2491 = vsub.s32 %v2488, %v2490
        %v2492 = vrot.slane %v2481, %v2491
        %v2494 = vunpack.c.l.s4 1966171168
        %v2495 = vunpack.c.0.s8 %v2494
        %v2496 = vlaneseq
        %v2497 = vshrl.u32 %v2496, 7
        %v2498 = vsub.s32 %v2495, %v2497
        %v2499 = vrot.slane %v2485, %v2498
        %v2500 = vcombine.high %v2492, %v2492
        %v2501 = vcombine.high %v2499, %v2499
        %v2503 = vunpack.c.l.s4 1966171168
        %v2504 = vunpack.c.0.s8 %v2503
        %v2505 = vlaneseq
        %v2506 = vshrl.u32 %v2505, 7
        %v2507 = vsub.s32 %v2504, %v2506
        %v2508 = vrot.slane %v2492, %v2507
        %v2510 = vunpack.c.l.s4 1966171168
        %v2511 = vunpack.c.0.s8 %v2510
        %v2512 = vlaneseq
        %v2513 = vshrl.u32 %v2512, 7
        %v2514 = vsub.s32 %v2511, %v2513
        %v2515 = vrot.slane %v2499, %v2514
        %v2517 = vunpack.c.l.s4 1966171168
        %v2518 = vunpack.c.0.s8 %v2517
        %v2519 = vlaneseq
        %v2520 = vshrl.u32 %v2519, 7
        %v2521 = vsub.s32 %v2518, %v2520
        %v2522 = vrot.slane %v2500, %v2521
        %v2524 = vunpack.c.l.s4 1966171168
        %v2525 = vunpack.c.0.s8 %v2524
        %v2526 = vlaneseq
        %v2527 = vshrl.u32 %v2526, 7
        %v2528 = vsub.s32 %v2525, %v2527
        %v2529 = vrot.slane %v2501, %v2528
        %v2530 = vcombine.high %v2508, %v2508
        %v2531 = vcombine.high %v2515, %v2515
        %v2532 = vcombine.high %v2522, %v2522
        %v2533 = vcombine.high %v2529, %v2529
        %s2534 = scalar_lea.vmem %s9, 112
        %v2535 = vld [vmem:[%s2534] sm:$0xff]
        %v2536 = vld [vmem:[%s2534 + $0x8] sm:$0xff]
        %2537 = vmatprep.subr.mxu0 0.0
        %2538 = vmatpush1.msra.mxu0 0.0
        %2539 = vmatprep.subr.mxu0 0.0
        %2540 = vmatpush1.msra.mxu0 0.0
        %2541 = vmatprep.subr.mxu0 0.0
        %2542 = vmatpush1.msra.mxu0 0.0
        %2543 = vmatprep.subr.mxu0 0.0
        %2544 = vmatpush1.msra.mxu0 0.0
        %2545 = vmatprep.subr.mxu0 0.0
        %2546 = vmatpush1.msra.mxu0 0.0
        %2547 = vmatprep.subr.mxu0 0.0
        %2548 = vmatpush1.msra.mxu0 0.0
        %2549 = vmatprep.subr.mxu0 0.0
        %2550 = vmatpush1.msra.mxu0 0.0
        %2551 = vmatprep.subr.mxu0 0.0
        %2552 = vmatpush1.msra.mxu0 0.0
        %2553 = vmatprep.subr.mxu0 0.0
        %2554 = vmatpush1.msra.mxu0 0.0
        %2555 = vmatprep.subr.mxu0 0.0
        %2556 = vmatpush1.msra.mxu0 0.0
        %2557 = vmatprep.subr.mxu0 0.0
        %2558 = vmatpush1.msra.mxu0 0.0
        %2559 = vmatprep.subr.mxu0 0.0
        %2560 = vmatpush1.msra.mxu0 0.0
        %2561 = vmatprep.subr.mxu0 0.0
        %2562 = vmatpush1.msra.mxu0 0.0
        %2563 = vmatprep.subr.mxu0 0.0
        %2564 = vmatpush1.msra.mxu0 0.0
        %2565 = vmatprep.subr.mxu0 0.0
        %2566 = vmatpush1.msra.mxu0 %v2536
        %2567 = vmatprep.subr.mxu0 0.0
        %2568 = vmatpush1.msra.mxu0 %v2535
        %2569 = vmatprep.subr.mxu0 0.0
        %2570 = vmatpush2.msra.mxu0 0.0
        %2571 = vmatprep.subr.mxu0 0.0
        %2572 = vmatpush2.msra.mxu0 0.0
        %2573 = vmatprep.subr.mxu0 0.0
        %2574 = vmatpush2.msra.mxu0 0.0
        %2575 = vmatprep.subr.mxu0 0.0
        %2576 = vmatpush2.msra.mxu0 0.0
        %2577 = vmatprep.subr.mxu0 0.0
        %2578 = vmatpush2.msra.mxu0 0.0
        %2579 = vmatprep.subr.mxu0 0.0
        %2580 = vmatpush2.msra.mxu0 0.0
        %2581 = vmatprep.subr.mxu0 0.0
        %2582 = vmatpush2.msra.mxu0 0.0
        %2583 = vmatprep.subr.mxu0 0.0
        %2584 = vmatpush2.msra.mxu0 0.0
        %2585 = vmatprep.subr.mxu0 0.0
        %2586 = vmatpush2.msra.mxu0 0.0
        %2587 = vmatprep.subr.mxu0 0.0
        %2588 = vmatpush2.msra.mxu0 0.0
        %2589 = vmatprep.subr.mxu0 0.0
        %2590 = vmatpush2.msra.mxu0 0.0
        %2591 = vmatprep.subr.mxu0 0.0
        %2592 = vmatpush2.msra.mxu0 0.0
        %2593 = vmatprep.subr.mxu0 0.0
        %2594 = vmatpush2.msra.mxu0 0.0
        %2595 = vmatprep.subr.mxu0 0.0
        %2596 = vmatpush2.msra.mxu0 0.0
        %2597 = vmatprep.subr.mxu0 0.0
        %2598 = vmatpush2.msra.mxu0 0.0
        %2599 = vmatprep.subr.mxu0 0.0
        %2600 = vmatpush2.msra.mxu0 0.0
        %2601 = vmatprep.mubr.f32.mxu0 0.0
        %2602 = vmatmul.mubr.f32.gmra.mxu0 %v814
        %v2603 = vpop.f32.mrf.mxu0
        %v2604 = vadd.f32 0.0, %v2603
        %v2605 = vpop.f32.mrf.mxu0
        %2606 = vdwg.mxu0
        %v2608 = vcombine.high %v2604, %v2604
        %v2610 = vunpack.c.l.s4 1966171168
        %v2611 = vunpack.c.0.s8 %v2610
        %v2612 = vlaneseq
        %v2613 = vshrl.u32 %v2612, 7
        %v2614 = vsub.s32 %v2611, %v2613
        %v2615 = vrot.slane %v2604, %v2614
        %v2617 = vunpack.c.l.s4 1966171168
        %v2618 = vunpack.c.0.s8 %v2617
        %v2619 = vlaneseq
        %v2620 = vshrl.u32 %v2619, 7
        %v2621 = vsub.s32 %v2618, %v2620
        %v2622 = vrot.slane %v2608, %v2621
        %v2623 = vcombine.high %v2615, %v2615
        %v2624 = vcombine.high %v2622, %v2622
        %v2626 = vunpack.c.l.s4 1966171168
        %v2627 = vunpack.c.0.s8 %v2626
        %v2628 = vlaneseq
        %v2629 = vshrl.u32 %v2628, 7
        %v2630 = vsub.s32 %v2627, %v2629
        %v2631 = vrot.slane %v2615, %v2630
        %v2633 = vunpack.c.l.s4 1966171168
        %v2634 = vunpack.c.0.s8 %v2633
        %v2635 = vlaneseq
        %v2636 = vshrl.u32 %v2635, 7
        %v2637 = vsub.s32 %v2634, %v2636
        %v2638 = vrot.slane %v2622, %v2637
        %v2640 = vunpack.c.l.s4 1966171168
        %v2641 = vunpack.c.0.s8 %v2640
        %v2642 = vlaneseq
        %v2643 = vshrl.u32 %v2642, 7
        %v2644 = vsub.s32 %v2641, %v2643
        %v2645 = vrot.slane %v2623, %v2644
        %v2647 = vunpack.c.l.s4 1966171168
        %v2648 = vunpack.c.0.s8 %v2647
        %v2649 = vlaneseq
        %v2650 = vshrl.u32 %v2649, 7
        %v2651 = vsub.s32 %v2648, %v2650
        %v2652 = vrot.slane %v2624, %v2651
        %v2653 = vcombine.high %v2631, %v2631
        %v2654 = vcombine.high %v2638, %v2638
        %v2655 = vcombine.high %v2645, %v2645
        %v2656 = vcombine.high %v2652, %v2652
        %2657 = vmatprep.subr.mxu0 0.0
        %2658 = vmatpush1.msra.mxu0 0.0
        %2659 = vmatprep.subr.mxu0 0.0
        %2660 = vmatpush1.msra.mxu0 0.0
        %2661 = vmatprep.subr.mxu0 0.0
        %2662 = vmatpush1.msra.mxu0 0.0
        %2663 = vmatprep.subr.mxu0 0.0
        %2664 = vmatpush1.msra.mxu0 0.0
        %2665 = vmatprep.subr.mxu0 0.0
        %2666 = vmatpush1.msra.mxu0 0.0
        %2667 = vmatprep.subr.mxu0 0.0
        %2668 = vmatpush1.msra.mxu0 0.0
        %2669 = vmatprep.subr.mxu0 0.0
        %2670 = vmatpush1.msra.mxu0 0.0
        %2671 = vmatprep.subr.mxu0 0.0
        %2672 = vmatpush1.msra.mxu0 0.0
        %2673 = vmatprep.subr.mxu0 0.0
        %2674 = vmatpush1.msra.mxu0 0.0
        %2675 = vmatprep.subr.mxu0 0.0
        %2676 = vmatpush1.msra.mxu0 0.0
        %2677 = vmatprep.subr.mxu0 0.0
        %2678 = vmatpush1.msra.mxu0 0.0
        %2679 = vmatprep.subr.mxu0 0.0
        %2680 = vmatpush1.msra.mxu0 0.0
        %2681 = vmatprep.subr.mxu0 0.0
        %2682 = vmatpush1.msra.mxu0 0.0
        %2683 = vmatprep.subr.mxu0 0.0
        %2684 = vmatpush1.msra.mxu0 0.0
        %2685 = vmatprep.subr.mxu0 0.0
        %2686 = vmatpush1.msra.mxu0 %v2536
        %2687 = vmatprep.subr.mxu0 0.0
        %2688 = vmatpush1.msra.mxu0 %v2535
        %2689 = vmatprep.subr.mxu0 0.0
        %2690 = vmatpush2.msra.mxu0 0.0
        %2691 = vmatprep.subr.mxu0 0.0
        %2692 = vmatpush2.msra.mxu0 0.0
        %2693 = vmatprep.subr.mxu0 0.0
        %2694 = vmatpush2.msra.mxu0 0.0
        %2695 = vmatprep.subr.mxu0 0.0
        %2696 = vmatpush2.msra.mxu0 0.0
        %2697 = vmatprep.subr.mxu0 0.0
        %2698 = vmatpush2.msra.mxu0 0.0
        %2699 = vmatprep.subr.mxu0 0.0
        %2700 = vmatpush2.msra.mxu0 0.0
        %2701 = vmatprep.subr.mxu0 0.0
        %2702 = vmatpush2.msra.mxu0 0.0
        %2703 = vmatprep.subr.mxu0 0.0
        %2704 = vmatpush2.msra.mxu0 0.0
        %2705 = vmatprep.subr.mxu0 0.0
        %2706 = vmatpush2.msra.mxu0 0.0
        %2707 = vmatprep.subr.mxu0 0.0
        %2708 = vmatpush2.msra.mxu0 0.0
        %2709 = vmatprep.subr.mxu0 0.0
        %2710 = vmatpush2.msra.mxu0 0.0
        %2711 = vmatprep.subr.mxu0 0.0
        %2712 = vmatpush2.msra.mxu0 0.0
        %2713 = vmatprep.subr.mxu0 0.0
        %2714 = vmatpush2.msra.mxu0 0.0
        %2715 = vmatprep.subr.mxu0 0.0
        %2716 = vmatpush2.msra.mxu0 0.0
        %2717 = vmatprep.subr.mxu0 0.0
        %2718 = vmatpush2.msra.mxu0 0.0
        %2719 = vmatprep.subr.mxu0 0.0
        %2720 = vmatpush2.msra.mxu0 0.0
        %2721 = vmatprep.mubr.f32.mxu0 0.0
        %2722 = vmatmul.mubr.f32.gmra.mxu0 %v946
        %v2723 = vpop.f32.mrf.mxu0
        %v2724 = vadd.f32 0.0, %v2723
        %v2725 = vpop.f32.mrf.mxu0
        %2726 = vdwg.mxu0
        %v2728 = vcombine.high %v2724, %v2724
        %v2730 = vunpack.c.l.s4 1966171168
        %v2731 = vunpack.c.0.s8 %v2730
        %v2732 = vlaneseq
        %v2733 = vshrl.u32 %v2732, 7
        %v2734 = vsub.s32 %v2731, %v2733
        %v2735 = vrot.slane %v2724, %v2734
        %v2737 = vunpack.c.l.s4 1966171168
        %v2738 = vunpack.c.0.s8 %v2737
        %v2739 = vlaneseq
        %v2740 = vshrl.u32 %v2739, 7
        %v2741 = vsub.s32 %v2738, %v2740
        %v2742 = vrot.slane %v2728, %v2741
        %v2743 = vcombine.high %v2735, %v2735
        %v2744 = vcombine.high %v2742, %v2742
        %v2746 = vunpack.c.l.s4 1966171168
        %v2747 = vunpack.c.0.s8 %v2746
        %v2748 = vlaneseq
        %v2749 = vshrl.u32 %v2748, 7
        %v2750 = vsub.s32 %v2747, %v2749
        %v2751 = vrot.slane %v2735, %v2750
        %v2753 = vunpack.c.l.s4 1966171168
        %v2754 = vunpack.c.0.s8 %v2753
        %v2755 = vlaneseq
        %v2756 = vshrl.u32 %v2755, 7
        %v2757 = vsub.s32 %v2754, %v2756
        %v2758 = vrot.slane %v2742, %v2757
        %v2760 = vunpack.c.l.s4 1966171168
        %v2761 = vunpack.c.0.s8 %v2760
        %v2762 = vlaneseq
        %v2763 = vshrl.u32 %v2762, 7
        %v2764 = vsub.s32 %v2761, %v2763
        %v2765 = vrot.slane %v2743, %v2764
        %v2767 = vunpack.c.l.s4 1966171168
        %v2768 = vunpack.c.0.s8 %v2767
        %v2769 = vlaneseq
        %v2770 = vshrl.u32 %v2769, 7
        %v2771 = vsub.s32 %v2768, %v2770
        %v2772 = vrot.slane %v2744, %v2771
        %v2773 = vcombine.high %v2751, %v2751
        %v2774 = vcombine.high %v2758, %v2758
        %v2775 = vcombine.high %v2765, %v2765
        %v2776 = vcombine.high %v2772, %v2772
        %v2777 = vlaneseq
        %v2778 = vshrl.u32 %v2777, 7
        %v2779 = vsub.s32 0, %v2778
        %v2780 = vrot.slane %v1173, %v2779
        %v2781 = vlaneseq
        %v2782 = vshrl.u32 %v2781, 7
        %v2783 = vsub.s32 0, %v2782
        %v2784 = vrot.slane %v1187, %v2783
        %v2785 = vlaneseq
        %v2786 = vshrl.u32 %v2785, 7
        %v2787 = vsub.s32 0, %v2786
        %v2788 = vrot.slane %v1195, %v2787
        %v2789 = vlaneseq
        %v2790 = vshrl.u32 %v2789, 7
        %v2791 = vsub.s32 0, %v2790
        %v2792 = vrot.slane %v1197, %v2791
        %v2793 = vlaneseq
        %v2794 = vshrl.u32 %v2793, 7
        %v2795 = vsub.s32 0, %v2794
        %v2796 = vrot.slane %v1180, %v2795
        %v2797 = vlaneseq
        %v2798 = vshrl.u32 %v2797, 7
        %v2799 = vsub.s32 0, %v2798
        %v2800 = vrot.slane %v1194, %v2799
        %v2801 = vlaneseq
        %v2802 = vshrl.u32 %v2801, 7
        %v2803 = vsub.s32 0, %v2802
        %v2804 = vrot.slane %v1196, %v2803
        %v2805 = vlaneseq
        %v2806 = vshrl.u32 %v2805, 7
        %v2807 = vsub.s32 0, %v2806
        %v2808 = vrot.slane %v1198, %v2807
        %v2817 = vlaneseq
        %v2818 = vshrl.u32 %v2817, 7
        %v2819 = vsub.s32 0, %v2818
        %v2820 = vrot.slane %v1416, %v2819
        %v2821 = vlaneseq
        %v2822 = vshrl.u32 %v2821, 7
        %v2823 = vsub.s32 0, %v2822
        %v2824 = vrot.slane %v1430, %v2823
        %v2825 = vlaneseq
        %v2826 = vshrl.u32 %v2825, 7
        %v2827 = vsub.s32 0, %v2826
        %v2828 = vrot.slane %v1438, %v2827
        %v2829 = vlaneseq
        %v2830 = vshrl.u32 %v2829, 7
        %v2831 = vsub.s32 0, %v2830
        %v2832 = vrot.slane %v1440, %v2831
        %v2833 = vlaneseq
        %v2834 = vshrl.u32 %v2833, 7
        %v2835 = vsub.s32 0, %v2834
        %v2836 = vrot.slane %v1423, %v2835
        %v2837 = vlaneseq
        %v2838 = vshrl.u32 %v2837, 7
        %v2839 = vsub.s32 0, %v2838
        %v2840 = vrot.slane %v1437, %v2839
        %v2841 = vlaneseq
        %v2842 = vshrl.u32 %v2841, 7
        %v2843 = vsub.s32 0, %v2842
        %v2844 = vrot.slane %v1439, %v2843
        %v2845 = vlaneseq
        %v2846 = vshrl.u32 %v2845, 7
        %v2847 = vsub.s32 0, %v2846
        %v2848 = vrot.slane %v1441, %v2847
        %v2857 = vlaneseq
        %v2858 = vshrl.u32 %v2857, 7
        %v2859 = vsub.s32 0, %v2858
        %v2860 = vrot.slane %v1659, %v2859
        %v2861 = vlaneseq
        %v2862 = vshrl.u32 %v2861, 7
        %v2863 = vsub.s32 0, %v2862
        %v2864 = vrot.slane %v1673, %v2863
        %v2865 = vlaneseq
        %v2866 = vshrl.u32 %v2865, 7
        %v2867 = vsub.s32 0, %v2866
        %v2868 = vrot.slane %v1681, %v2867
        %v2869 = vlaneseq
        %v2870 = vshrl.u32 %v2869, 7
        %v2871 = vsub.s32 0, %v2870
        %v2872 = vrot.slane %v1683, %v2871
        %v2873 = vlaneseq
        %v2874 = vshrl.u32 %v2873, 7
        %v2875 = vsub.s32 0, %v2874
        %v2876 = vrot.slane %v1666, %v2875
        %v2877 = vlaneseq
        %v2878 = vshrl.u32 %v2877, 7
        %v2879 = vsub.s32 0, %v2878
        %v2880 = vrot.slane %v1680, %v2879
        %v2881 = vlaneseq
        %v2882 = vshrl.u32 %v2881, 7
        %v2883 = vsub.s32 0, %v2882
        %v2884 = vrot.slane %v1682, %v2883
        %v2885 = vlaneseq
        %v2886 = vshrl.u32 %v2885, 7
        %v2887 = vsub.s32 0, %v2886
        %v2888 = vrot.slane %v1684, %v2887
        %v2897 = vlaneseq
        %v2898 = vshrl.u32 %v2897, 7
        %v2899 = vsub.s32 0, %v2898
        %v2900 = vrot.slane %v1902, %v2899
        %v2901 = vlaneseq
        %v2902 = vshrl.u32 %v2901, 7
        %v2903 = vsub.s32 0, %v2902
        %v2904 = vrot.slane %v1916, %v2903
        %v2905 = vlaneseq
        %v2906 = vshrl.u32 %v2905, 7
        %v2907 = vsub.s32 0, %v2906
        %v2908 = vrot.slane %v1924, %v2907
        %v2909 = vlaneseq
        %v2910 = vshrl.u32 %v2909, 7
        %v2911 = vsub.s32 0, %v2910
        %v2912 = vrot.slane %v1926, %v2911
        %v2913 = vlaneseq
        %v2914 = vshrl.u32 %v2913, 7
        %v2915 = vsub.s32 0, %v2914
        %v2916 = vrot.slane %v1909, %v2915
        %v2917 = vlaneseq
        %v2918 = vshrl.u32 %v2917, 7
        %v2919 = vsub.s32 0, %v2918
        %v2920 = vrot.slane %v1923, %v2919
        %v2921 = vlaneseq
        %v2922 = vshrl.u32 %v2921, 7
        %v2923 = vsub.s32 0, %v2922
        %v2924 = vrot.slane %v1925, %v2923
        %v2925 = vlaneseq
        %v2926 = vshrl.u32 %v2925, 7
        %v2927 = vsub.s32 0, %v2926
        %v2928 = vrot.slane %v1927, %v2927
        %v2937 = vlaneseq
        %v2938 = vshrl.u32 %v2937, 7
        %v2939 = vsub.s32 0, %v2938
        %v2940 = vrot.slane %v2145, %v2939
        %v2941 = vlaneseq
        %v2942 = vshrl.u32 %v2941, 7
        %v2943 = vsub.s32 0, %v2942
        %v2944 = vrot.slane %v2159, %v2943
        %v2945 = vlaneseq
        %v2946 = vshrl.u32 %v2945, 7
        %v2947 = vsub.s32 0, %v2946
        %v2948 = vrot.slane %v2167, %v2947
        %v2949 = vlaneseq
        %v2950 = vshrl.u32 %v2949, 7
        %v2951 = vsub.s32 0, %v2950
        %v2952 = vrot.slane %v2169, %v2951
        %v2953 = vlaneseq
        %v2954 = vshrl.u32 %v2953, 7
        %v2955 = vsub.s32 0, %v2954
        %v2956 = vrot.slane %v2152, %v2955
        %v2957 = vlaneseq
        %v2958 = vshrl.u32 %v2957, 7
        %v2959 = vsub.s32 0, %v2958
        %v2960 = vrot.slane %v2166, %v2959
        %v2961 = vlaneseq
        %v2962 = vshrl.u32 %v2961, 7
        %v2963 = vsub.s32 0, %v2962
        %v2964 = vrot.slane %v2168, %v2963
        %v2965 = vlaneseq
        %v2966 = vshrl.u32 %v2965, 7
        %v2967 = vsub.s32 0, %v2966
        %v2968 = vrot.slane %v2170, %v2967
        %v2977 = vlaneseq
        %v2978 = vshrl.u32 %v2977, 7
        %v2979 = vsub.s32 0, %v2978
        %v2980 = vrot.slane %v2388, %v2979
        %v2981 = vlaneseq
        %v2982 = vshrl.u32 %v2981, 7
        %v2983 = vsub.s32 0, %v2982
        %v2984 = vrot.slane %v2402, %v2983
        %v2985 = vlaneseq
        %v2986 = vshrl.u32 %v2985, 7
        %v2987 = vsub.s32 0, %v2986
        %v2988 = vrot.slane %v2410, %v2987
        %v2989 = vlaneseq
        %v2990 = vshrl.u32 %v2989, 7
        %v2991 = vsub.s32 0, %v2990
        %v2992 = vrot.slane %v2412, %v2991
        %v2993 = vlaneseq
        %v2994 = vshrl.u32 %v2993, 7
        %v2995 = vsub.s32 0, %v2994
        %v2996 = vrot.slane %v2395, %v2995
        %v2997 = vlaneseq
        %v2998 = vshrl.u32 %v2997, 7
        %v2999 = vsub.s32 0, %v2998
        %v3000 = vrot.slane %v2409, %v2999
        %v3001 = vlaneseq
        %v3002 = vshrl.u32 %v3001, 7
        %v3003 = vsub.s32 0, %v3002
        %v3004 = vrot.slane %v2411, %v3003
        %v3005 = vlaneseq
        %v3006 = vshrl.u32 %v3005, 7
        %v3007 = vsub.s32 0, %v3006
        %v3008 = vrot.slane %v2413, %v3007
        %v3017 = vlaneseq
        %v3018 = vshrl.u32 %v3017, 7
        %v3019 = vsub.s32 0, %v3018
        %v3020 = vrot.slane %v2631, %v3019
        %v3021 = vlaneseq
        %v3022 = vshrl.u32 %v3021, 7
        %v3023 = vsub.s32 0, %v3022
        %v3024 = vrot.slane %v2645, %v3023
        %v3025 = vlaneseq
        %v3026 = vshrl.u32 %v3025, 7
        %v3027 = vsub.s32 0, %v3026
        %v3028 = vrot.slane %v2653, %v3027
        %v3029 = vlaneseq
        %v3030 = vshrl.u32 %v3029, 7
        %v3031 = vsub.s32 0, %v3030
        %v3032 = vrot.slane %v2655, %v3031
        %v3033 = vlaneseq
        %v3034 = vshrl.u32 %v3033, 7
        %v3035 = vsub.s32 0, %v3034
        %v3036 = vrot.slane %v2638, %v3035
        %v3037 = vlaneseq
        %v3038 = vshrl.u32 %v3037, 7
        %v3039 = vsub.s32 0, %v3038
        %v3040 = vrot.slane %v2652, %v3039
        %v3041 = vlaneseq
        %v3042 = vshrl.u32 %v3041, 7
        %v3043 = vsub.s32 0, %v3042
        %v3044 = vrot.slane %v2654, %v3043
        %v3045 = vlaneseq
        %v3046 = vshrl.u32 %v3045, 7
        %v3047 = vsub.s32 0, %v3046
        %v3048 = vrot.slane %v2656, %v3047
        %vm3057 = vcmask 1040384
        %v3058 = vsel %vm3057, %v910, %v2780
        %v3059 = vsel %vm3057, %v924, %v2784
        %v3060 = vsel %vm3057, %v932, %v2788
        %v3061 = vsel %vm3057, %v934, %v2792
        %v3062 = vsel %vm3057, %v917, %v2796
        %v3063 = vsel %vm3057, %v931, %v2800
        %v3064 = vsel %vm3057, %v933, %v2804
        %v3065 = vsel %vm3057, %v935, %v2808
        %vm3066 = vcmask 1041408
        %v3067 = vsel %vm3066, %v3058, %v2820
        %v3068 = vsel %vm3066, %v3059, %v2824
        %v3069 = vsel %vm3066, %v3060, %v2828
        %v3070 = vsel %vm3066, %v3061, %v2832
        %v3071 = vsel %vm3066, %v3062, %v2836
        %v3072 = vsel %vm3066, %v3063, %v2840
        %v3073 = vsel %vm3066, %v3064, %v2844
        %v3074 = vsel %vm3066, %v3065, %v2848
        %vm3075 = vcmask 1042432
        %v3076 = vsel %vm3075, %v3067, %v2860
        %v3077 = vsel %vm3075, %v3068, %v2864
        %v3078 = vsel %vm3075, %v3069, %v2868
        %v3079 = vsel %vm3075, %v3070, %v2872
        %v3080 = vsel %vm3075, %v3071, %v2876
        %v3081 = vsel %vm3075, %v3072, %v2880
        %v3082 = vsel %vm3075, %v3073, %v2884
        %v3083 = vsel %vm3075, %v3074, %v2888
        %vm3084 = vcmask 1043456
        %v3085 = vsel %vm3084, %v3076, %v2900
        %v3086 = vsel %vm3084, %v3077, %v2904
        %v3087 = vsel %vm3084, %v3078, %v2908
        %v3088 = vsel %vm3084, %v3079, %v2912
        %v3089 = vsel %vm3084, %v3080, %v2916
        %v3090 = vsel %vm3084, %v3081, %v2920
        %v3091 = vsel %vm3084, %v3082, %v2924
        %v3092 = vsel %vm3084, %v3083, %v2928
        %vm3093 = vcmask 1044480
        %v3094 = vsel %vm3093, %v3085, %v2940
        %v3095 = vsel %vm3093, %v3086, %v2944
        %v3096 = vsel %vm3093, %v3087, %v2948
        %v3097 = vsel %vm3093, %v3088, %v2952
        %v3098 = vsel %vm3093, %v3089, %v2956
        %v3099 = vsel %vm3093, %v3090, %v2960
        %v3100 = vsel %vm3093, %v3091, %v2964
        %v3101 = vsel %vm3093, %v3092, %v2968
        %vm3102 = vcmask 1045504
        %v3103 = vsel %vm3102, %v3094, %v2980
        %v3104 = vsel %vm3102, %v3095, %v2984
        %v3105 = vsel %vm3102, %v3096, %v2988
        %v3106 = vsel %vm3102, %v3097, %v2992
        %v3107 = vsel %vm3102, %v3098, %v2996
        %v3108 = vsel %vm3102, %v3099, %v3000
        %v3109 = vsel %vm3102, %v3100, %v3004
        %v3110 = vsel %vm3102, %v3101, %v3008
        %vm3111 = vcmask 1046528
        %v3112 = vsel %vm3111, %v3103, %v3020
        %v3113 = vsel %vm3111, %v3104, %v3024
        %v3114 = vsel %vm3111, %v3105, %v3028
        %v3115 = vsel %vm3111, %v3106, %v3032
        %v3116 = vsel %vm3111, %v3107, %v3036
        %v3117 = vsel %vm3111, %v3108, %v3040
        %v3118 = vsel %vm3111, %v3109, %v3044
        %v3119 = vsel %vm3111, %v3110, %v3048
        %v3120 = vlaneseq
        %v3121 = vshrl.u32 %v3120, 7
        %v3122 = vsub.s32 0, %v3121
        %v3123 = vrot.slane %v1293, %v3122
        %v3124 = vlaneseq
        %v3125 = vshrl.u32 %v3124, 7
        %v3126 = vsub.s32 0, %v3125
        %v3127 = vrot.slane %v1307, %v3126
        %v3128 = vlaneseq
        %v3129 = vshrl.u32 %v3128, 7
        %v3130 = vsub.s32 0, %v3129
        %v3131 = vrot.slane %v1315, %v3130
        %v3132 = vlaneseq
        %v3133 = vshrl.u32 %v3132, 7
        %v3134 = vsub.s32 0, %v3133
        %v3135 = vrot.slane %v1317, %v3134
        %v3136 = vlaneseq
        %v3137 = vshrl.u32 %v3136, 7
        %v3138 = vsub.s32 0, %v3137
        %v3139 = vrot.slane %v1300, %v3138
        %v3140 = vlaneseq
        %v3141 = vshrl.u32 %v3140, 7
        %v3142 = vsub.s32 0, %v3141
        %v3143 = vrot.slane %v1314, %v3142
        %v3144 = vlaneseq
        %v3145 = vshrl.u32 %v3144, 7
        %v3146 = vsub.s32 0, %v3145
        %v3147 = vrot.slane %v1316, %v3146
        %v3148 = vlaneseq
        %v3149 = vshrl.u32 %v3148, 7
        %v3150 = vsub.s32 0, %v3149
        %v3151 = vrot.slane %v1318, %v3150
        %v3160 = vlaneseq
        %v3161 = vshrl.u32 %v3160, 7
        %v3162 = vsub.s32 0, %v3161
        %v3163 = vrot.slane %v1536, %v3162
        %v3164 = vlaneseq
        %v3165 = vshrl.u32 %v3164, 7
        %v3166 = vsub.s32 0, %v3165
        %v3167 = vrot.slane %v1550, %v3166
        %v3168 = vlaneseq
        %v3169 = vshrl.u32 %v3168, 7
        %v3170 = vsub.s32 0, %v3169
        %v3171 = vrot.slane %v1558, %v3170
        %v3172 = vlaneseq
        %v3173 = vshrl.u32 %v3172, 7
        %v3174 = vsub.s32 0, %v3173
        %v3175 = vrot.slane %v1560, %v3174
        %v3176 = vlaneseq
        %v3177 = vshrl.u32 %v3176, 7
        %v3178 = vsub.s32 0, %v3177
        %v3179 = vrot.slane %v1543, %v3178
        %v3180 = vlaneseq
        %v3181 = vshrl.u32 %v3180, 7
        %v3182 = vsub.s32 0, %v3181
        %v3183 = vrot.slane %v1557, %v3182
        %v3184 = vlaneseq
        %v3185 = vshrl.u32 %v3184, 7
        %v3186 = vsub.s32 0, %v3185
        %v3187 = vrot.slane %v1559, %v3186
        %v3188 = vlaneseq
        %v3189 = vshrl.u32 %v3188, 7
        %v3190 = vsub.s32 0, %v3189
        %v3191 = vrot.slane %v1561, %v3190
        %v3200 = vlaneseq
        %v3201 = vshrl.u32 %v3200, 7
        %v3202 = vsub.s32 0, %v3201
        %v3203 = vrot.slane %v1779, %v3202
        %v3204 = vlaneseq
        %v3205 = vshrl.u32 %v3204, 7
        %v3206 = vsub.s32 0, %v3205
        %v3207 = vrot.slane %v1793, %v3206
        %v3208 = vlaneseq
        %v3209 = vshrl.u32 %v3208, 7
        %v3210 = vsub.s32 0, %v3209
        %v3211 = vrot.slane %v1801, %v3210
        %v3212 = vlaneseq
        %v3213 = vshrl.u32 %v3212, 7
        %v3214 = vsub.s32 0, %v3213
        %v3215 = vrot.slane %v1803, %v3214
        %v3216 = vlaneseq
        %v3217 = vshrl.u32 %v3216, 7
        %v3218 = vsub.s32 0, %v3217
        %v3219 = vrot.slane %v1786, %v3218
        %v3220 = vlaneseq
        %v3221 = vshrl.u32 %v3220, 7
        %v3222 = vsub.s32 0, %v3221
        %v3223 = vrot.slane %v1800, %v3222
        %v3224 = vlaneseq
        %v3225 = vshrl.u32 %v3224, 7
        %v3226 = vsub.s32 0, %v3225
        %v3227 = vrot.slane %v1802, %v3226
        %v3228 = vlaneseq
        %v3229 = vshrl.u32 %v3228, 7
        %v3230 = vsub.s32 0, %v3229
        %v3231 = vrot.slane %v1804, %v3230
        %v3240 = vlaneseq
        %v3241 = vshrl.u32 %v3240, 7
        %v3242 = vsub.s32 0, %v3241
        %v3243 = vrot.slane %v2022, %v3242
        %v3244 = vlaneseq
        %v3245 = vshrl.u32 %v3244, 7
        %v3246 = vsub.s32 0, %v3245
        %v3247 = vrot.slane %v2036, %v3246
        %v3248 = vlaneseq
        %v3249 = vshrl.u32 %v3248, 7
        %v3250 = vsub.s32 0, %v3249
        %v3251 = vrot.slane %v2044, %v3250
        %v3252 = vlaneseq
        %v3253 = vshrl.u32 %v3252, 7
        %v3254 = vsub.s32 0, %v3253
        %v3255 = vrot.slane %v2046, %v3254
        %v3256 = vlaneseq
        %v3257 = vshrl.u32 %v3256, 7
        %v3258 = vsub.s32 0, %v3257
        %v3259 = vrot.slane %v2029, %v3258
        %v3260 = vlaneseq
        %v3261 = vshrl.u32 %v3260, 7
        %v3262 = vsub.s32 0, %v3261
        %v3263 = vrot.slane %v2043, %v3262
        %v3264 = vlaneseq
        %v3265 = vshrl.u32 %v3264, 7
        %v3266 = vsub.s32 0, %v3265
        %v3267 = vrot.slane %v2045, %v3266
        %v3268 = vlaneseq
        %v3269 = vshrl.u32 %v3268, 7
        %v3270 = vsub.s32 0, %v3269
        %v3271 = vrot.slane %v2047, %v3270
        %v3280 = vlaneseq
        %v3281 = vshrl.u32 %v3280, 7
        %v3282 = vsub.s32 0, %v3281
        %v3283 = vrot.slane %v2265, %v3282
        %v3284 = vlaneseq
        %v3285 = vshrl.u32 %v3284, 7
        %v3286 = vsub.s32 0, %v3285
        %v3287 = vrot.slane %v2279, %v3286
        %v3288 = vlaneseq
        %v3289 = vshrl.u32 %v3288, 7
        %v3290 = vsub.s32 0, %v3289
        %v3291 = vrot.slane %v2287, %v3290
        %v3292 = vlaneseq
        %v3293 = vshrl.u32 %v3292, 7
        %v3294 = vsub.s32 0, %v3293
        %v3295 = vrot.slane %v2289, %v3294
        %v3296 = vlaneseq
        %v3297 = vshrl.u32 %v3296, 7
        %v3298 = vsub.s32 0, %v3297
        %v3299 = vrot.slane %v2272, %v3298
        %v3300 = vlaneseq
        %v3301 = vshrl.u32 %v3300, 7
        %v3302 = vsub.s32 0, %v3301
        %v3303 = vrot.slane %v2286, %v3302
        %v3304 = vlaneseq
        %v3305 = vshrl.u32 %v3304, 7
        %v3306 = vsub.s32 0, %v3305
        %v3307 = vrot.slane %v2288, %v3306
        %v3308 = vlaneseq
        %v3309 = vshrl.u32 %v3308, 7
        %v3310 = vsub.s32 0, %v3309
        %v3311 = vrot.slane %v2290, %v3310
        %v3320 = vlaneseq
        %v3321 = vshrl.u32 %v3320, 7
        %v3322 = vsub.s32 0, %v3321
        %v3323 = vrot.slane %v2508, %v3322
        %v3324 = vlaneseq
        %v3325 = vshrl.u32 %v3324, 7
        %v3326 = vsub.s32 0, %v3325
        %v3327 = vrot.slane %v2522, %v3326
        %v3328 = vlaneseq
        %v3329 = vshrl.u32 %v3328, 7
        %v3330 = vsub.s32 0, %v3329
        %v3331 = vrot.slane %v2530, %v3330
        %v3332 = vlaneseq
        %v3333 = vshrl.u32 %v3332, 7
        %v3334 = vsub.s32 0, %v3333
        %v3335 = vrot.slane %v2532, %v3334
        %v3336 = vlaneseq
        %v3337 = vshrl.u32 %v3336, 7
        %v3338 = vsub.s32 0, %v3337
        %v3339 = vrot.slane %v2515, %v3338
        %v3340 = vlaneseq
        %v3341 = vshrl.u32 %v3340, 7
        %v3342 = vsub.s32 0, %v3341
        %v3343 = vrot.slane %v2529, %v3342
        %v3344 = vlaneseq
        %v3345 = vshrl.u32 %v3344, 7
        %v3346 = vsub.s32 0, %v3345
        %v3347 = vrot.slane %v2531, %v3346
        %v3348 = vlaneseq
        %v3349 = vshrl.u32 %v3348, 7
        %v3350 = vsub.s32 0, %v3349
        %v3351 = vrot.slane %v2533, %v3350
        %v3360 = vlaneseq
        %v3361 = vshrl.u32 %v3360, 7
        %v3362 = vsub.s32 0, %v3361
        %v3363 = vrot.slane %v2751, %v3362
        %v3364 = vlaneseq
        %v3365 = vshrl.u32 %v3364, 7
        %v3366 = vsub.s32 0, %v3365
        %v3367 = vrot.slane %v2765, %v3366
        %v3368 = vlaneseq
        %v3369 = vshrl.u32 %v3368, 7
        %v3370 = vsub.s32 0, %v3369
        %v3371 = vrot.slane %v2773, %v3370
        %v3372 = vlaneseq
        %v3373 = vshrl.u32 %v3372, 7
        %v3374 = vsub.s32 0, %v3373
        %v3375 = vrot.slane %v2775, %v3374
        %v3376 = vlaneseq
        %v3377 = vshrl.u32 %v3376, 7
        %v3378 = vsub.s32 0, %v3377
        %v3379 = vrot.slane %v2758, %v3378
        %v3380 = vlaneseq
        %v3381 = vshrl.u32 %v3380, 7
        %v3382 = vsub.s32 0, %v3381
        %v3383 = vrot.slane %v2772, %v3382
        %v3384 = vlaneseq
        %v3385 = vshrl.u32 %v3384, 7
        %v3386 = vsub.s32 0, %v3385
        %v3387 = vrot.slane %v2774, %v3386
        %v3388 = vlaneseq
        %v3389 = vshrl.u32 %v3388, 7
        %v3390 = vsub.s32 0, %v3389
        %v3391 = vrot.slane %v2776, %v3390
        %v3400 = vsel %vm3057, %v1042, %v3123
        %v3401 = vsel %vm3057, %v1056, %v3127
        %v3402 = vsel %vm3057, %v1064, %v3131
        %v3403 = vsel %vm3057, %v1066, %v3135
        %v3404 = vsel %vm3057, %v1049, %v3139
        %v3405 = vsel %vm3057, %v1063, %v3143
        %v3406 = vsel %vm3057, %v1065, %v3147
        %v3407 = vsel %vm3057, %v1067, %v3151
        %v3408 = vsel %vm3066, %v3400, %v3163
        %v3409 = vsel %vm3066, %v3401, %v3167
        %v3410 = vsel %vm3066, %v3402, %v3171
        %v3411 = vsel %vm3066, %v3403, %v3175
        %v3412 = vsel %vm3066, %v3404, %v3179
        %v3413 = vsel %vm3066, %v3405, %v3183
        %v3414 = vsel %vm3066, %v3406, %v3187
        %v3415 = vsel %vm3066, %v3407, %v3191
        %v3416 = vsel %vm3075, %v3408, %v3203
        %v3417 = vsel %vm3075, %v3409, %v3207
        %v3418 = vsel %vm3075, %v3410, %v3211
        %v3419 = vsel %vm3075, %v3411, %v3215
        %v3420 = vsel %vm3075, %v3412, %v3219
        %v3421 = vsel %vm3075, %v3413, %v3223
        %v3422 = vsel %vm3075, %v3414, %v3227
        %v3423 = vsel %vm3075, %v3415, %v3231
        %v3424 = vsel %vm3084, %v3416, %v3243
        %v3425 = vsel %vm3084, %v3417, %v3247
        %v3426 = vsel %vm3084, %v3418, %v3251
        %v3427 = vsel %vm3084, %v3419, %v3255
        %v3428 = vsel %vm3084, %v3420, %v3259
        %v3429 = vsel %vm3084, %v3421, %v3263
        %v3430 = vsel %vm3084, %v3422, %v3267
        %v3431 = vsel %vm3084, %v3423, %v3271
        %v3432 = vsel %vm3093, %v3424, %v3283
        %v3433 = vsel %vm3093, %v3425, %v3287
        %v3434 = vsel %vm3093, %v3426, %v3291
        %v3435 = vsel %vm3093, %v3427, %v3295
        %v3436 = vsel %vm3093, %v3428, %v3299
        %v3437 = vsel %vm3093, %v3429, %v3303
        %v3438 = vsel %vm3093, %v3430, %v3307
        %v3439 = vsel %vm3093, %v3431, %v3311
        %v3440 = vsel %vm3102, %v3432, %v3323
        %v3441 = vsel %vm3102, %v3433, %v3327
        %v3442 = vsel %vm3102, %v3434, %v3331
        %v3443 = vsel %vm3102, %v3435, %v3335
        %v3444 = vsel %vm3102, %v3436, %v3339
        %v3445 = vsel %vm3102, %v3437, %v3343
        %v3446 = vsel %vm3102, %v3438, %v3347
        %v3447 = vsel %vm3102, %v3439, %v3351
        %v3448 = vsel %vm3111, %v3440, %v3363
        %v3449 = vsel %vm3111, %v3441, %v3367
        %v3450 = vsel %vm3111, %v3442, %v3371
        %v3451 = vsel %vm3111, %v3443, %v3375
        %v3452 = vsel %vm3111, %v3444, %v3379
        %v3453 = vsel %vm3111, %v3445, %v3383
        %v3454 = vsel %vm3111, %v3446, %v3387
        %v3455 = vsel %vm3111, %v3447, %v3391
        %v3457 = vcombine.high %v808, %v808
        %v3459 = vunpack.c.l.s4 1966171168
        %v3460 = vunpack.c.0.s8 %v3459
        %v3461 = vlaneseq
        %v3462 = vshrl.u32 %v3461, 7
        %v3463 = vsub.s32 %v3460, %v3462
        %v3464 = vrot.slane %v808, %v3463
        %v3466 = vunpack.c.l.s4 1966171168
        %v3467 = vunpack.c.0.s8 %v3466
        %v3468 = vlaneseq
        %v3469 = vshrl.u32 %v3468, 7
        %v3470 = vsub.s32 %v3467, %v3469
        %v3471 = vrot.slane %v3457, %v3470
        %v3472 = vcombine.high %v3464, %v3464
        %v3473 = vcombine.high %v3471, %v3471
        %v3475 = vunpack.c.l.s4 1966171168
        %v3476 = vunpack.c.0.s8 %v3475
        %v3477 = vlaneseq
        %v3478 = vshrl.u32 %v3477, 7
        %v3479 = vsub.s32 %v3476, %v3478
        %v3480 = vrot.slane %v3464, %v3479
        %v3482 = vunpack.c.l.s4 1966171168
        %v3483 = vunpack.c.0.s8 %v3482
        %v3484 = vlaneseq
        %v3485 = vshrl.u32 %v3484, 7
        %v3486 = vsub.s32 %v3483, %v3485
        %v3487 = vrot.slane %v3471, %v3486
        %v3489 = vunpack.c.l.s4 1966171168
        %v3490 = vunpack.c.0.s8 %v3489
        %v3491 = vlaneseq
        %v3492 = vshrl.u32 %v3491, 7
        %v3493 = vsub.s32 %v3490, %v3492
        %v3494 = vrot.slane %v3472, %v3493
        %v3496 = vunpack.c.l.s4 1966171168
        %v3497 = vunpack.c.0.s8 %v3496
        %v3498 = vlaneseq
        %v3499 = vshrl.u32 %v3498, 7
        %v3500 = vsub.s32 %v3497, %v3499
        %v3501 = vrot.slane %v3473, %v3500
        %v3502 = vcombine.high %v3480, %v3480
        %v3503 = vcombine.high %v3487, %v3487
        %v3504 = vcombine.high %v3494, %v3494
        %v3505 = vcombine.high %v3501, %v3501
        %v3506 = vld [vmem:[%s534] sm:$0xff]
        %v3507 = vlaneseq
        %v3508 = vshrl.u32 %v3507, 7
        %v3509 = vsub.s32 0, %v3508
        %v3510 = vrot.slane %v3480, %v3509
        %v3511 = vlaneseq
        %v3512 = vshrl.u32 %v3511, 7
        %v3513 = vsub.s32 0, %v3512
        %v3514 = vrot.slane %v3494, %v3513
        %v3515 = vlaneseq
        %v3516 = vshrl.u32 %v3515, 7
        %v3517 = vsub.s32 0, %v3516
        %v3518 = vrot.slane %v3502, %v3517
        %v3519 = vlaneseq
        %v3520 = vshrl.u32 %v3519, 7
        %v3521 = vsub.s32 0, %v3520
        %v3522 = vrot.slane %v3504, %v3521
        %v3523 = vlaneseq
        %v3524 = vshrl.u32 %v3523, 7
        %v3525 = vsub.s32 0, %v3524
        %v3526 = vrot.slane %v3487, %v3525
        %v3527 = vlaneseq
        %v3528 = vshrl.u32 %v3527, 7
        %v3529 = vsub.s32 0, %v3528
        %v3530 = vrot.slane %v3501, %v3529
        %v3531 = vlaneseq
        %v3532 = vshrl.u32 %v3531, 7
        %v3533 = vsub.s32 0, %v3532
        %v3534 = vrot.slane %v3503, %v3533
        %v3535 = vlaneseq
        %v3536 = vshrl.u32 %v3535, 7
        %v3537 = vsub.s32 0, %v3536
        %v3538 = vrot.slane %v3505, %v3537
        %v3547 = vmul.f32 %v3510, %v3506
        %v3548 = vmul.f32 %v3514, %v3506
        %v3549 = vmul.f32 %v3518, %v3506
        %v3550 = vmul.f32 %v3522, %v3506
        %v3551 = vmul.f32 %v3526, %v3506
        %v3552 = vmul.f32 %v3530, %v3506
        %v3553 = vmul.f32 %v3534, %v3506
        %v3554 = vmul.f32 %v3538, %v3506
        %v3555 = vmul.f32 %v3547, 1.442695
        %v3556 = vpow.pop %v3555
        %v3557 = vmul.f32 %v3548, 1.442695
        %v3558 = vpow.pop %v3557
        %v3559 = vmul.f32 %v3549, 1.442695
        %v3560 = vpow.pop %v3559
        %v3561 = vmul.f32 %v3550, 1.442695
        %v3562 = vpow.pop %v3561
        %v3563 = vmul.f32 %v3551, 1.442695
        %v3564 = vpow.pop %v3563
        %v3565 = vmul.f32 %v3552, 1.442695
        %v3566 = vpow.pop %v3565
        %v3567 = vmul.f32 %v3553, 1.442695
        %v3568 = vpow.pop %v3567
        %v3569 = vmul.f32 %v3554, 1.442695
        %v3570 = vpow.pop %v3569
        %3571 = vst [vmem:[#allocation4] sm:$0xff] %v3556
        %3572 = vst [vmem:[#allocation4 + $0x8] sm:$0xff] %v3558
        %3573 = vst [vmem:[#allocation4 + $0x10] sm:$0xff] %v3560
        %3574 = vst [vmem:[#allocation4 + $0x18] sm:$0xff] %v3562
        %3575 = vst [vmem:[#allocation4 + $0x20] sm:$0xff] %v3564
        %3576 = vst [vmem:[#allocation4 + $0x28] sm:$0xff] %v3566
        %3577 = vst [vmem:[#allocation4 + $0x30] sm:$0xff] %v3568
        %3578 = vst [vmem:[#allocation4 + $0x38] sm:$0xff] %v3570
        %v3580 = vcombine.high %v809, %v809
        %v3582 = vunpack.c.l.s4 1966171168
        %v3583 = vunpack.c.0.s8 %v3582
        %v3584 = vlaneseq
        %v3585 = vshrl.u32 %v3584, 7
        %v3586 = vsub.s32 %v3583, %v3585
        %v3587 = vrot.slane %v809, %v3586
        %v3589 = vunpack.c.l.s4 1966171168
        %v3590 = vunpack.c.0.s8 %v3589
        %v3591 = vlaneseq
        %v3592 = vshrl.u32 %v3591, 7
        %v3593 = vsub.s32 %v3590, %v3592
        %v3594 = vrot.slane %v3580, %v3593
        %v3595 = vcombine.high %v3587, %v3587
        %v3596 = vcombine.high %v3594, %v3594
        %v3598 = vunpack.c.l.s4 1966171168
        %v3599 = vunpack.c.0.s8 %v3598
        %v3600 = vlaneseq
        %v3601 = vshrl.u32 %v3600, 7
        %v3602 = vsub.s32 %v3599, %v3601
        %v3603 = vrot.slane %v3587, %v3602
        %v3605 = vunpack.c.l.s4 1966171168
        %v3606 = vunpack.c.0.s8 %v3605
        %v3607 = vlaneseq
        %v3608 = vshrl.u32 %v3607, 7
        %v3609 = vsub.s32 %v3606, %v3608
        %v3610 = vrot.slane %v3594, %v3609
        %v3612 = vunpack.c.l.s4 1966171168
        %v3613 = vunpack.c.0.s8 %v3612
        %v3614 = vlaneseq
        %v3615 = vshrl.u32 %v3614, 7
        %v3616 = vsub.s32 %v3613, %v3615
        %v3617 = vrot.slane %v3595, %v3616
        %v3619 = vunpack.c.l.s4 1966171168
        %v3620 = vunpack.c.0.s8 %v3619
        %v3621 = vlaneseq
        %v3622 = vshrl.u32 %v3621, 7
        %v3623 = vsub.s32 %v3620, %v3622
        %v3624 = vrot.slane %v3596, %v3623
        %v3625 = vcombine.high %v3603, %v3603
        %v3626 = vcombine.high %v3610, %v3610
        %v3627 = vcombine.high %v3617, %v3617
        %v3628 = vcombine.high %v3624, %v3624
        %v3629 = vlaneseq
        %v3630 = vshrl.u32 %v3629, 7
        %v3631 = vsub.s32 0, %v3630
        %v3632 = vrot.slane %v3603, %v3631
        %v3633 = vlaneseq
        %v3634 = vshrl.u32 %v3633, 7
        %v3635 = vsub.s32 0, %v3634
        %v3636 = vrot.slane %v3617, %v3635
        %v3637 = vlaneseq
        %v3638 = vshrl.u32 %v3637, 7
        %v3639 = vsub.s32 0, %v3638
        %v3640 = vrot.slane %v3625, %v3639
        %v3641 = vlaneseq
        %v3642 = vshrl.u32 %v3641, 7
        %v3643 = vsub.s32 0, %v3642
        %v3644 = vrot.slane %v3627, %v3643
        %v3645 = vlaneseq
        %v3646 = vshrl.u32 %v3645, 7
        %v3647 = vsub.s32 0, %v3646
        %v3648 = vrot.slane %v3610, %v3647
        %v3649 = vlaneseq
        %v3650 = vshrl.u32 %v3649, 7
        %v3651 = vsub.s32 0, %v3650
        %v3652 = vrot.slane %v3624, %v3651
        %v3653 = vlaneseq
        %v3654 = vshrl.u32 %v3653, 7
        %v3655 = vsub.s32 0, %v3654
        %v3656 = vrot.slane %v3626, %v3655
        %v3657 = vlaneseq
        %v3658 = vshrl.u32 %v3657, 7
        %v3659 = vsub.s32 0, %v3658
        %v3660 = vrot.slane %v3628, %v3659
        %v3669 = vmul.f32 %v3632, %v3112
        %v3670 = vmul.f32 %v3636, %v3113
        %v3671 = vmul.f32 %v3640, %v3114
        %v3672 = vmul.f32 %v3644, %v3115
        %v3673 = vmul.f32 %v3648, %v3116
        %v3674 = vmul.f32 %v3652, %v3117
        %v3675 = vmul.f32 %v3656, %v3118
        %v3676 = vmul.f32 %v3660, %v3119
        %3677 = vst [vmem:[#allocation5] sm:$0xff] %v3669
        %3678 = vst [vmem:[#allocation5 + $0x8] sm:$0xff] %v3670
        %3679 = vst [vmem:[#allocation5 + $0x10] sm:$0xff] %v3671
        %3680 = vst [vmem:[#allocation5 + $0x18] sm:$0xff] %v3672
        %3681 = vst [vmem:[#allocation5 + $0x20] sm:$0xff] %v3673
        %3682 = vst [vmem:[#allocation5 + $0x28] sm:$0xff] %v3674
        %3683 = vst [vmem:[#allocation5 + $0x30] sm:$0xff] %v3675
        %3684 = vst [vmem:[#allocation5 + $0x38] sm:$0xff] %v3676
        %3685 = vst [vmem:[#allocation6] sm:$0xff] %v3448
        %3686 = vst [vmem:[#allocation6 + $0x8] sm:$0xff] %v3449
        %3687 = vst [vmem:[#allocation6 + $0x10] sm:$0xff] %v3450
        %3688 = vst [vmem:[#allocation6 + $0x18] sm:$0xff] %v3451
        %3689 = vst [vmem:[#allocation6 + $0x20] sm:$0xff] %v3452
        %3690 = vst [vmem:[#allocation6 + $0x28] sm:$0xff] %v3453
        %3691 = vst [vmem:[#allocation6 + $0x30] sm:$0xff] %v3454
        %3692 = vst [vmem:[#allocation6 + $0x38] sm:$0xff] %v3455
        %v3693 = vld [vmem:[#allocation4] sm:$0xff]
        %v3694 = vmul.f32 %v3693, 0.0
        %v3695 = vld [vmem:[#allocation5] sm:$0xff]
        %v3696 = vadd.f32 %v3694, %v3695
        %v3697 = vld [vmem:[#allocation6] sm:$0xff]
        %v3698 = vmul.f32 %v3696, %v3697
        %v3699 = vrot.slane %v3698, 4
        %v3700 = vadd.f32 %v3698, %v3699
        %v3701 = vrot.slane %v3700, 2
        %v3702 = vadd.f32 %v3700, %v3701
        %v3703 = vrot.slane %v3702, 1
        %v3704 = vadd.f32 %v3702, %v3703
        %3705 = vst [vmem:[#allocation7] sm:$0x1] %v3704
        %s3706 = scalar_lea.vmem [#allocation4], 8
        %v3707 = vld [vmem:[%s3706] sm:$0xff]
        %v3708 = vmul.f32 %v3707, %v3696
        %s3709 = scalar_lea.vmem [#allocation5], 8
        %v3710 = vld [vmem:[%s3709] sm:$0xff]
        %v3711 = vadd.f32 %v3708, %v3710
        %s3712 = scalar_lea.vmem [#allocation6], 8
        %v3713 = vld [vmem:[%s3712] sm:$0xff]
        %v3714 = vmul.f32 %v3711, %v3713
        %v3715 = vrot.slane %v3714, 4
        %v3716 = vadd.f32 %v3714, %v3715
        %v3717 = vrot.slane %v3716, 2
        %v3718 = vadd.f32 %v3716, %v3717
        %v3719 = vrot.slane %v3718, 1
        %v3720 = vadd.f32 %v3718, %v3719
        %3721 = vst [vmem:[#allocation7 + $0x1] sm:$0x1] %v3720
        %s3722 = scalar_lea.vmem [#allocation4], 16
        %v3723 = vld [vmem:[%s3722] sm:$0xff]
        %v3724 = vmul.f32 %v3723, %v3711
        %s3725 = scalar_lea.vmem [#allocation5], 16
        %v3726 = vld [vmem:[%s3725] sm:$0xff]
        %v3727 = vadd.f32 %v3724, %v3726
        %s3728 = scalar_lea.vmem [#allocation6], 16
        %v3729 = vld [vmem:[%s3728] sm:$0xff]
        %v3730 = vmul.f32 %v3727, %v3729
        %v3731 = vrot.slane %v3730, 4
        %v3732 = vadd.f32 %v3730, %v3731
        %v3733 = vrot.slane %v3732, 2
        %v3734 = vadd.f32 %v3732, %v3733
        %v3735 = vrot.slane %v3734, 1
        %v3736 = vadd.f32 %v3734, %v3735
        %3737 = vst [vmem:[#allocation7 + $0x2] sm:$0x1] %v3736
        %s3738 = scalar_lea.vmem [#allocation4], 24
        %v3739 = vld [vmem:[%s3738] sm:$0xff]
        %v3740 = vmul.f32 %v3739, %v3727
        %s3741 = scalar_lea.vmem [#allocation5], 24
        %v3742 = vld [vmem:[%s3741] sm:$0xff]
        %v3743 = vadd.f32 %v3740, %v3742
        %s3744 = scalar_lea.vmem [#allocation6], 24
        %v3745 = vld [vmem:[%s3744] sm:$0xff]
        %v3746 = vmul.f32 %v3743, %v3745
        %v3747 = vrot.slane %v3746, 4
        %v3748 = vadd.f32 %v3746, %v3747
        %v3749 = vrot.slane %v3748, 2
        %v3750 = vadd.f32 %v3748, %v3749
        %v3751 = vrot.slane %v3750, 1
        %v3752 = vadd.f32 %v3750, %v3751
        %3753 = vst [vmem:[#allocation7 + $0x3] sm:$0x1] %v3752
        %s3754 = scalar_lea.vmem [#allocation4], 32
        %v3755 = vld [vmem:[%s3754] sm:$0xff]
        %v3756 = vmul.f32 %v3755, %v3743
        %s3757 = scalar_lea.vmem [#allocation5], 32
        %v3758 = vld [vmem:[%s3757] sm:$0xff]
        %v3759 = vadd.f32 %v3756, %v3758
        %s3760 = scalar_lea.vmem [#allocation6], 32
        %v3761 = vld [vmem:[%s3760] sm:$0xff]
        %v3762 = vmul.f32 %v3759, %v3761
        %v3763 = vrot.slane %v3762, 4
        %v3764 = vadd.f32 %v3762, %v3763
        %v3765 = vrot.slane %v3764, 2
        %v3766 = vadd.f32 %v3764, %v3765
        %v3767 = vrot.slane %v3766, 1
        %v3768 = vadd.f32 %v3766, %v3767
        %3769 = vst [vmem:[#allocation7 + $0x4] sm:$0x1] %v3768
        %s3770 = scalar_lea.vmem [#allocation4], 40
        %v3771 = vld [vmem:[%s3770] sm:$0xff]
        %v3772 = vmul.f32 %v3771, %v3759
        %s3773 = scalar_lea.vmem [#allocation5], 40
        %v3774 = vld [vmem:[%s3773] sm:$0xff]
        %v3775 = vadd.f32 %v3772, %v3774
        %s3776 = scalar_lea.vmem [#allocation6], 40
        %v3777 = vld [vmem:[%s3776] sm:$0xff]
        %v3778 = vmul.f32 %v3775, %v3777
        %v3779 = vrot.slane %v3778, 4
        %v3780 = vadd.f32 %v3778, %v3779
        %v3781 = vrot.slane %v3780, 2
        %v3782 = vadd.f32 %v3780, %v3781
        %v3783 = vrot.slane %v3782, 1
        %v3784 = vadd.f32 %v3782, %v3783
        %3785 = vst [vmem:[#allocation7 + $0x5] sm:$0x1] %v3784
        %s3786 = scalar_lea.vmem [#allocation4], 48
        %v3787 = vld [vmem:[%s3786] sm:$0xff]
        %v3788 = vmul.f32 %v3787, %v3775
        %s3789 = scalar_lea.vmem [#allocation5], 48
        %v3790 = vld [vmem:[%s3789] sm:$0xff]
        %v3791 = vadd.f32 %v3788, %v3790
        %s3792 = scalar_lea.vmem [#allocation6], 48
        %v3793 = vld [vmem:[%s3792] sm:$0xff]
        %v3794 = vmul.f32 %v3791, %v3793
        %v3795 = vrot.slane %v3794, 4
        %v3796 = vadd.f32 %v3794, %v3795
        %v3797 = vrot.slane %v3796, 2
        %v3798 = vadd.f32 %v3796, %v3797
        %v3799 = vrot.slane %v3798, 1
        %v3800 = vadd.f32 %v3798, %v3799
        %3801 = vst [vmem:[#allocation7 + $0x6] sm:$0x1] %v3800
        %s3802 = scalar_lea.vmem [#allocation4], 56
        %v3803 = vld [vmem:[%s3802] sm:$0xff]
        %v3804 = vmul.f32 %v3803, %v3791
        %s3805 = scalar_lea.vmem [#allocation5], 56
        %v3806 = vld [vmem:[%s3805] sm:$0xff]
        %v3807 = vadd.f32 %v3804, %v3806
        %s3808 = scalar_lea.vmem [#allocation6], 56
        %v3809 = vld [vmem:[%s3808] sm:$0xff]
        %v3810 = vmul.f32 %v3807, %v3809
        %v3811 = vrot.slane %v3810, 4
        %v3812 = vadd.f32 %v3810, %v3811
        %v3813 = vrot.slane %v3812, 2
        %v3814 = vadd.f32 %v3812, %v3813
        %v3815 = vrot.slane %v3814, 1
        %v3816 = vadd.f32 %v3814, %v3815
        %3817 = vst [vmem:[#allocation7 + $0x7] sm:$0x1] %v3816
        %v3818 = vld [vmem:[#allocation7] sm:$0xff]
        %v3819 = vld [vmem:[%s537] sm:$0x1]
        %v3821 = vlaneseq
        %v3822 = vshrl.u32 %v3821, 7
        %v3823 = vsub.s32 0, %v3822
        %v3824 = vrot.slane %v3819, %v3823
        %v3826 = vmul.f32 %v688, %v3824
        %v3827 = vadd.f32 %v3818, %v3826
        %v3828 = vsub.f32 0.0, %v640
        %v3829 = vmul.f32 %v3828, 1.442695
        %v3830 = vpow.pop %v3829
        %v3831 = vadd.f32 %v3830, 1.0
        %v3832 = vrcp.pop %v3831
        %v3833 = vmul.f32 1.0, %v3832
        %v3834 = vmul.f32 %v640, %v3833
        %v3835 = vmul.f32 %v3827, %v3834
        %v3836 = vld [vmem:[%s542] sm:$0xff]
        %v3837 = vld [vmem:[%s542 + $0x8] sm:$0xff]
        %v3838 = vld [vmem:[%s542 + $0x10] sm:$0xff]
        %v3839 = vld [vmem:[%s542 + $0x18] sm:$0xff]
        %v3840 = vld [vmem:[%s542 + $0x20] sm:$0xff]
        %v3841 = vld [vmem:[%s542 + $0x28] sm:$0xff]
        %v3842 = vld [vmem:[%s542 + $0x30] sm:$0xff]
        %v3843 = vld [vmem:[%s542 + $0x38] sm:$0xff]
        %v3844 = vld [vmem:[%s542 + $0x40] sm:$0xff]
        %v3845 = vld [vmem:[%s542 + $0x48] sm:$0xff]
        %v3846 = vld [vmem:[%s542 + $0x50] sm:$0xff]
        %v3847 = vld [vmem:[%s542 + $0x58] sm:$0xff]
        %v3848 = vld [vmem:[%s542 + $0x60] sm:$0xff]
        %v3849 = vld [vmem:[%s542 + $0x68] sm:$0xff]
        %v3850 = vld [vmem:[%s542 + $0x70] sm:$0xff]
        %v3851 = vld [vmem:[%s542 + $0x78] sm:$0xff]
        %3852 = vmatprep.subr.mxu0 0.0
        %3853 = vmatpush1.msra.mxu0 %v3851
        %3854 = vmatprep.subr.mxu0 0.0
        %3855 = vmatpush1.msra.mxu0 %v3850
        %3856 = vmatprep.subr.mxu0 0.0
        %3857 = vmatpush1.msra.mxu0 %v3849
        %3858 = vmatprep.subr.mxu0 0.0
        %3859 = vmatpush1.msra.mxu0 %v3848
        %3860 = vmatprep.subr.mxu0 0.0
        %3861 = vmatpush1.msra.mxu0 %v3847
        %3862 = vmatprep.subr.mxu0 0.0
        %3863 = vmatpush1.msra.mxu0 %v3846
        %3864 = vmatprep.subr.mxu0 0.0
        %3865 = vmatpush1.msra.mxu0 %v3845
        %3866 = vmatprep.subr.mxu0 0.0
        %3867 = vmatpush1.msra.mxu0 %v3844
        %3868 = vmatprep.subr.mxu0 0.0
        %3869 = vmatpush1.msra.mxu0 %v3843
        %3870 = vmatprep.subr.mxu0 0.0
        %3871 = vmatpush1.msra.mxu0 %v3842
        %3872 = vmatprep.subr.mxu0 0.0
        %3873 = vmatpush1.msra.mxu0 %v3841
        %3874 = vmatprep.subr.mxu0 0.0
        %3875 = vmatpush1.msra.mxu0 %v3840
        %3876 = vmatprep.subr.mxu0 0.0
        %3877 = vmatpush1.msra.mxu0 %v3839
        %3878 = vmatprep.subr.mxu0 0.0
        %3879 = vmatpush1.msra.mxu0 %v3838
        %3880 = vmatprep.subr.mxu0 0.0
        %3881 = vmatpush1.msra.mxu0 %v3837
        %3882 = vmatprep.subr.mxu0 0.0
        %3883 = vmatpush1.msra.mxu0 %v3836
        %3884 = vmatprep.subr.mxu0 0.0
        %3885 = vmatpush2.msra.mxu0 0.0
        %3886 = vmatprep.subr.mxu0 0.0
        %3887 = vmatpush2.msra.mxu0 0.0
        %3888 = vmatprep.subr.mxu0 0.0
        %3889 = vmatpush2.msra.mxu0 0.0
        %3890 = vmatprep.subr.mxu0 0.0
        %3891 = vmatpush2.msra.mxu0 0.0
        %3892 = vmatprep.subr.mxu0 0.0
        %3893 = vmatpush2.msra.mxu0 0.0
        %3894 = vmatprep.subr.mxu0 0.0
        %3895 = vmatpush2.msra.mxu0 0.0
        %3896 = vmatprep.subr.mxu0 0.0
        %3897 = vmatpush2.msra.mxu0 0.0
        %3898 = vmatprep.subr.mxu0 0.0
        %3899 = vmatpush2.msra.mxu0 0.0
        %3900 = vmatprep.subr.mxu0 0.0
        %3901 = vmatpush2.msra.mxu0 0.0
        %3902 = vmatprep.subr.mxu0 0.0
        %3903 = vmatpush2.msra.mxu0 0.0
        %3904 = vmatprep.subr.mxu0 0.0
        %3905 = vmatpush2.msra.mxu0 0.0
        %3906 = vmatprep.subr.mxu0 0.0
        %3907 = vmatpush2.msra.mxu0 0.0
        %3908 = vmatprep.subr.mxu0 0.0
        %3909 = vmatpush2.msra.mxu0 0.0
        %3910 = vmatprep.subr.mxu0 0.0
        %3911 = vmatpush2.msra.mxu0 0.0
        %3912 = vmatprep.subr.mxu0 0.0
        %3913 = vmatpush2.msra.mxu0 0.0
        %3914 = vmatprep.subr.mxu0 0.0
        %3915 = vmatpush2.msra.mxu0 0.0
        %3916 = vmatprep.mubr.f32.mxu0 0.0
        %3917 = vmatmul.mubr.f32.gmra.mxu0 %v3835
        %v3918 = vpop.f32.mrf.mxu0
        %v3919 = vadd.f32 0.0, %v3918
        %v3920 = vpop.f32.mrf.mxu0
        %3921 = vdwg.mxu0
        %3922 = vst.msk [vmem:[#allocation2] sm:$0xff] %vm567, %v3919
        %p3923 = scmp.eq.s32.totalorder %s25, 1
        // Predicated region
        $region77: #{model_forward.1} parent=71 // pred_check
          %p3924 = pneg %p3923
        $region78: #{model_forward.1} parent=71 // pred_check_branch
          %3926 = sbr.rel (%p3924) target = $region80
        $region79: #{model_forward.1} parent=71 // pred_region
          %3928 = vrot.lane.b32.xlu0 %v3919, 96
          %v3929 = vpop.permute.xlu0 %3928
          %vm3931 = vcmask 261120
          %v3932 = vsel %vm3931, %v3919, 0.0
          %3933 = vadd.xlane.f32.xlu0 %v3932
          %v3934 = vpop.xlane.xlu0 %3933
          %v3935 = vsel %vm3931, %v3929, 0.0
          %3936 = vadd.xlane.f32.xlu0 %v3935
          %v3937 = vpop.xlane.xlu0 %3936
          %v3938 = vrcp.pop 32.0
          %v3939 = vmul.f32 %v3934, %v3938
          %v3940 = vmul.f32 %v3937, %v3938
          %v3941 = vsub.f32 %v3919, %v3939
          %v3942 = vsub.f32 %v3929, %v3940
          %v3943 = vmul.f32 %v3941, %v3941
          %v3944 = vmul.f32 %v3942, %v3942
          %v3945 = vsel %vm3931, %v3943, 0.0
          %3946 = vadd.xlane.f32.xlu0 %v3945
          %v3947 = vpop.xlane.xlu0 %3946
          %v3948 = vsel %vm3931, %v3944, 0.0
          %3949 = vadd.xlane.f32.xlu0 %v3948
          %v3950 = vpop.xlane.xlu0 %3949
          %v3951 = vmul.f32 %v3947, %v3938
          %v3952 = vmul.f32 %v3950, %v3938
          %v3953 = vadd.f32 %v3951, 1e-05
          %v3954 = vadd.f32 %v3952, 1e-05
          %v3955 = vrsqrt.pop %v3953
          %v3956 = vrsqrt.pop %v3954
          %v3957 = vmul.f32 %v3941, %v3955
          %v3958 = vmul.f32 %v3942, %v3956
          %v3959 = vld [vmem:[%s10] sm:$0x1]
          %v3961 = vlaneseq
          %v3962 = vshrl.u32 %v3961, 7
          %v3963 = vsub.s32 0, %v3962
          %v3964 = vrot.slane %v3959, %v3963
          %v3966 = vmul.f32 %v3957, %v3964
          %v3967 = vmul.f32 %v3958, %v3964
          %v3968 = vld [vmem:[%s11] sm:$0x1]
          %v3970 = vlaneseq
          %v3971 = vshrl.u32 %v3970, 7
          %v3972 = vsub.s32 0, %v3971
          %v3973 = vrot.slane %v3968, %v3972
          %v3975 = vadd.f32 %v3966, %v3973
          %v3976 = vadd.f32 %v3967, %v3973
          %v3977 = vld [vmem:[%s12] sm:$0xff]
          %v3978 = vld [vmem:[%s12 + $0x8] sm:$0xff]
          %v3979 = vld [vmem:[%s12 + $0x10] sm:$0xff]
          %v3980 = vld [vmem:[%s12 + $0x18] sm:$0xff]
          %v3981 = vld [vmem:[%s12 + $0x20] sm:$0xff]
          %v3982 = vld [vmem:[%s12 + $0x28] sm:$0xff]
          %v3983 = vld [vmem:[%s12 + $0x30] sm:$0xff]
          %v3984 = vld [vmem:[%s12 + $0x38] sm:$0xff]
          %v3986 = vsel %vm3931, %v3975, 0
          %v3989 = vsel %vm3931, %v3976, 0
          %3991 = vmatprep.subr.mxu0 0.0
          %3992 = vmatpush1.msra.mxu0 0.0
          %3993 = vmatprep.subr.mxu0 0.0
          %3994 = vmatpush1.msra.mxu0 0.0
          %3995 = vmatprep.subr.mxu0 0.0
          %3996 = vmatpush1.msra.mxu0 0.0
          %3997 = vmatprep.subr.mxu0 0.0
          %3998 = vmatpush1.msra.mxu0 0.0
          %3999 = vmatprep.subr.mxu0 0.0
          %4000 = vmatpush1.msra.mxu0 0.0
          %4001 = vmatprep.subr.mxu0 0.0
          %4002 = vmatpush1.msra.mxu0 0.0
          %4003 = vmatprep.subr.mxu0 0.0
          %4004 = vmatpush1.msra.mxu0 0.0
          %4005 = vmatprep.subr.mxu0 0.0
          %4006 = vmatpush1.msra.mxu0 0.0
          %4007 = vmatprep.subr.mxu0 0.0
          %4008 = vmatpush1.msra.mxu0 0.0
          %4009 = vmatprep.subr.mxu0 0.0
          %4010 = vmatpush1.msra.mxu0 0.0
          %4011 = vmatprep.subr.mxu0 0.0
          %4012 = vmatpush1.msra.mxu0 0.0
          %4013 = vmatprep.subr.mxu0 0.0
          %4014 = vmatpush1.msra.mxu0 0.0
          %4015 = vmatprep.subr.mxu0 %v3984
          %4016 = vmatpush1.msra.mxu0 %v3983
          %4017 = vmatprep.subr.mxu0 %v3982
          %4018 = vmatpush1.msra.mxu0 %v3981
          %4019 = vmatprep.subr.mxu0 %v3980
          %4020 = vmatpush1.msra.mxu0 %v3979
          %4021 = vmatprep.subr.mxu0 %v3978
          %4022 = vmatpush1.msra.mxu0 %v3977
          %4023 = vmatprep.subr.mxu0 0.0
          %4024 = vmatpush2.msra.mxu0 0.0
          %4025 = vmatprep.subr.mxu0 0.0
          %4026 = vmatpush2.msra.mxu0 0.0
          %4027 = vmatprep.subr.mxu0 0.0
          %4028 = vmatpush2.msra.mxu0 0.0
          %4029 = vmatprep.subr.mxu0 0.0
          %4030 = vmatpush2.msra.mxu0 0.0
          %4031 = vmatprep.subr.mxu0 0.0
          %4032 = vmatpush2.msra.mxu0 0.0
          %4033 = vmatprep.subr.mxu0 0.0
          %4034 = vmatpush2.msra.mxu0 0.0
          %4035 = vmatprep.subr.mxu0 0.0
          %4036 = vmatpush2.msra.mxu0 0.0
          %4037 = vmatprep.subr.mxu0 0.0
          %4038 = vmatpush2.msra.mxu0 0.0
          %4039 = vmatprep.subr.mxu0 0.0
          %4040 = vmatpush2.msra.mxu0 0.0
          %4041 = vmatprep.subr.mxu0 0.0
          %4042 = vmatpush2.msra.mxu0 0.0
          %4043 = vmatprep.subr.mxu0 0.0
          %4044 = vmatpush2.msra.mxu0 0.0
          %4045 = vmatprep.subr.mxu0 0.0
          %4046 = vmatpush2.msra.mxu0 0.0
          %4047 = vmatprep.subr.mxu0 0.0
          %4048 = vmatpush2.msra.mxu0 0.0
          %4049 = vmatprep.subr.mxu0 0.0
          %4050 = vmatpush2.msra.mxu0 0.0
          %4051 = vmatprep.subr.mxu0 0.0
          %4052 = vmatpush2.msra.mxu0 0.0
          %4053 = vmatprep.subr.mxu0 0.0
          %4054 = vmatpush2.msra.mxu0 0.0
          %4055 = vmatprep.mubr.f32.mxu0 0.0
          %4056 = vmatmul.mubr.f32.gmra.mxu0 %v3986
          %v4057 = vpop.f32.mrf.mxu0
          %v4058 = vadd.f32 0.0, %v4057
          %v4059 = vpop.f32.mrf.mxu0
          %v4060 = vadd.f32 0.0, %v4059
          %4061 = vmatprep.mubr.f32.mxu0 0.0
          %4062 = vmatmul.mubr.f32.gmra.mxu0 %v3989
          %v4063 = vpop.f32.mrf.mxu0
          %v4064 = vadd.f32 0.0, %v4063
          %v4065 = vpop.f32.mrf.mxu0
          %v4066 = vadd.f32 0.0, %v4065
          %4067 = vdwg.mxu0
          %4068 = vst [vmem:[#allocation8] sm:$0xff] %v4058
          %4069 = vst [vmem:[#allocation8 + $0x8] sm:$0xff] %v4060
          %4070 = vst [vmem:[#allocation8 + $0x10] sm:$0xff] %v4064
          %4071 = vst [vmem:[#allocation8 + $0x18] sm:$0xff] %v4066
        $region80: #{model_forward.1} parent=71 // pred_fallthru
          _
        // Predicated region
        $region81: #{model_forward.1} parent=71 // pred_check
          %p4072 = pneg %p351
        $region82: #{model_forward.1} parent=71 // pred_check_branch
          %4074 = sbr.rel (%p4072) target = $region84
        $region83: #{model_forward.1} parent=71 // pred_region
          %s4076 = ssub.s32 512, 512
          %4077 = vsyncadd [#allocation9], %s4076
          %s4078 = sshll.u32 [#allocation8], 4
          %s4079 = int_to_ptr.vmem [resolvable:$true] %s4078
          %4084 = dma.vmem_to_hbm [thread:$0]  %s4079, 512, %s13, [#allocation9], 256, 256, 16
        $region84: #{model_forward.1} parent=71 // pred_fallthru
          _
        // Predicated region
        $region85: #{model_forward.1} parent=71 // pred_check
          %p4085 = pneg %p351
        $region86: #{model_forward.1} parent=71 // pred_check_branch
          %4087 = sbr.rel (%p4085) target = $region88
        $region87: #{model_forward.1} parent=71 // pred_region
          %4088 = dma.done [#allocation9], 512
        $region88: #{model_forward.1} parent=71 // pred_fallthru
          _
      $region72: #{model_forward.1} parent=5 // pred_fallthru
        _
      %p4089 = scmp.le.s32.totalorder 2, %s20
      // Predicated region
      $region89: #{model_forward.1} parent=5 // pred_check
        %p4090 = pneg %p4089
      $region90: #{model_forward.1} parent=5 // pred_check_branch
        %4092 = sbr.rel (%p4090) target = $region92
      $region91: #{model_forward.1} parent=5 // pred_region
        %s4093 = ssub.s32 %s20, 2
      $region92: #{model_forward.1} parent=5 // pred_fallthru
        _
    $region6: #{model_forward.1} parent=1 // loop_footer
      %s24 = sadd.s32 1, %s20
    $region7: #{model_forward.1} parent=1 // loop_footer_branch
      %19 = sbr.rel target = $region3
    $region8: #{model_forward.1} parent=1 // loop_exit
      _
    %4094 = vsyncpa [#allocation9], 1
    %s4095 = scalar_lea.sflag [#allocation9], 1
    %4096 = vsyncpa %s4095, 1

</llo_original>
